<compile_context>
chip_gen: v7x
topology: tpu7x:2x2x1
jax: 0.10.0
libtpu: 0.0.40
codegen_flags: <defaults>
</compile_context>

<pallas_src>
import functools
import math

import jax
import jax.numpy as jnp
from jax.experimental import pallas as pl
from jax.experimental.pallas import tpu as pltpu


# ------------------------------ Pallas kernel --------------------------------
def _mha_kernel(x_ref, w_ref, o_ref, *, head_num, use_residual, mxu_dtype,
                head_batched):
    # x_ref: (TB, F, E) activations for this batch tile
    # w_ref: (E, nP*E)  fused [Wq/sqrt(d) | Wk | Wv | (Wr)]  (already mxu_dtype)
    # o_ref: (TB, F, E)
    tb, f, e = x_ref.shape
    h = head_num
    d = e // h

    x = x_ref[...].astype(mxu_dtype)
    w = w_ref[...]

    # Fused projection: one wide MXU pass instead of 3-4 skinny ones.
    z = jnp.dot(x.reshape(tb * f, e), w, preferred_element_type=jnp.float32)
    z = z.reshape(tb, f, -1)

    q = z[:, :, 0 * e:1 * e].astype(mxu_dtype)   # scale already folded into Wq
    k = z[:, :, 1 * e:2 * e].astype(mxu_dtype)
    v = z[:, :, 2 * e:3 * e].astype(mxu_dtype)

    if head_batched:
        # Head-batched attention: no per-head lane slicing, no H-way concat.
        q4 = q.reshape(tb, f, h, d)
        k4 = k.reshape(tb, f, h, d)
        v4 = v.reshape(tb, f, h, d)
        s = jnp.einsum("bqhd,bkhd->bhqk", q4, k4,
                       preferred_element_type=jnp.float32)          # (TB,H,F,F)
        s = s - jnp.max(s, axis=-1, keepdims=True)
        p = jnp.exp(s)
        # EUP approximate reciprocal instead of a VALU divide.
        p = p * pl.reciprocal(jnp.sum(p, axis=-1, keepdims=True), approx=True)
        attn = jnp.einsum("bhqk,bkhd->bqhd", p.astype(mxu_dtype), v4,
                          preferred_element_type=jnp.float32)       # (TB,F,H,d)
        attn = attn.reshape(tb, f, e)
    else:
        # Fallback: static per-head unroll (kept for jax versions whose Mosaic
        # lowering rejects the multi-batch-dim einsum / minor-dim reshape).
        outs = []
        for i in range(h):
            qh = q[:, :, i * d:(i + 1) * d]
            kh = k[:, :, i * d:(i + 1) * d]
            vh = v[:, :, i * d:(i + 1) * d]
            s = jnp.einsum("bqd,bkd->bqk", qh, kh,
                           preferred_element_type=jnp.float32)      # (TB,F,F)
            s = s - jnp.max(s, axis=-1, keepdims=True)
            p = jnp.exp(s)
            inv = pl.reciprocal(jnp.sum(p, axis=-1, keepdims=True), approx=True)
            oh = jnp.einsum("bqk,bkd->bqd", p.astype(mxu_dtype), vh,
                            preferred_element_type=jnp.float32)
            outs.append(oh * inv)        # fold normalization into the (F,d) out
        attn = jnp.concatenate(outs, axis=-1)

    if use_residual:
        attn = attn + z[:, :, 3 * e:4 * e]
    o_ref[...] = jnp.tanh(attn).astype(o_ref.dtype)


# --------------------------- VMEM-aware tile sizing ---------------------------
def _vmem_budget_bytes():
    try:
        info = pltpu.get_tpu_info()
        cap = int(getattr(info, "vmem_capacity_bytes", 0)) or (64 << 20)
    except Exception:
        cap = 64 << 20                       # conservative (v7x physical VMEM)
    # ~75% of physical: ~48 MiB on v7x, ~96 MiB on v5e/v6e (capped at 100 MiB).
    return max(32 << 20, min(cap * 3 // 4, 100 << 20))


def _pick_tile_b(B, F, E, H, n_proj, io_item, mxu_item, vmem_budget, slab_bytes):
    """Largest batch tile whose in-kernel footprint fits the VMEM budget."""
    per_b = (
        2 * F * E * io_item            # streamed input tile (double-buffered)
        + 2 * F * E * io_item          # streamed output tile (double-buffered)
        + F * E * mxu_item             # x cast for the MXU
        + F * n_proj * E * 4           # fused projection z (f32 accumulation)
        + 3 * F * E * mxu_item         # q/k/v casts fed to the MXU
        + 2 * H * F * F * 4            # scores + exp(probs), f32
        + H * F * F * mxu_item         # probs cast for the PV matmul
        + 2 * F * E * 4                # attention output + pre-tanh temp (f32)
    )
    avail = vmem_budget - 2 * slab_bytes - (4 << 20)   # weight slab + headroom
    cap = max(1, avail // per_b)
    if B >= 2:
        cap = min(cap, -(-B // 2))     # >=2 grid blocks -> both v7x TensorCores
    cap = int(min(cap, B))
    best_div, t = 1, cap
    while t >= 1:                      # prefer a divisor of B (no host-side pad)
        if B % t == 0:
            best_div = t
            break
        t -= 1
    return best_div if best_div * 4 >= cap else cap


# --------------------------------- wrapper ------------------------------------
# Config ladder: best -> safest. Index of the last config known to work.
_CONFIGS = (
    dict(head_batched=True, single_buffer_weight=True),
    dict(head_batched=True, single_buffer_weight=False),
    dict(head_batched=False, single_buffer_weight=True),
    dict(head_batched=False, single_buffer_weight=False),   # proven structure
)
_ladder_start = [0]


def multihead_attention_pallas(x, w_q, w_k, w_v, w_r=None, *, head_num,
                               scaling=True, use_residual=True,
                               mxu_dtype=None, tile_b=None):
    """x: (B, F, E); weights: (E, E). Returns tanh(MHA(x) [+ x @ W_r]), (B,F,E)."""
    B, F, E = x.shape
    assert E % head_num == 0, "emb_dim must be divisible by head_num"
    d = E // head_num

    in_dtype = jnp.dtype(x.dtype)
    if mxu_dtype is None:
        # Feed the MXU bf16 when activations are already low precision.
        mxu_dtype = jnp.bfloat16 if in_dtype.itemsize <= 2 else in_dtype
    mxu_dtype = jnp.dtype(mxu_dtype)

    # Fold 1/sqrt(d) into W_Q: removes B*H*F*F per-score multiplies in-kernel.
    wq = w_q * (1.0 / math.sqrt(d)) if scaling else w_q
    use_res = use_residual and (w_r is not None)
    mats = [wq, w_k, w_v] + ([w_r] if use_res else [])
    n_proj = len(mats)                                   # 4 or 3
    w = jnp.concatenate(mats, axis=1).astype(mxu_dtype)  # (E, n_proj*E)

    vmem_budget = _vmem_budget_bytes()
    slab_bytes = E * n_proj * E * mxu_dtype.itemsize
    if tile_b is None:
        tile_b = _pick_tile_b(B, F, E, head_num, n_proj, in_dtype.itemsize,
                              mxu_dtype.itemsize, vmem_budget, slab_bytes)
    tile_b = max(1, min(int(tile_b), B))
    n_blocks = pl.cdiv(B, tile_b)
    b_pad = n_blocks * tile_b
    x_in = x
    if b_pad != B:   # rare: tile picker prefers divisors of B
        x_in = jnp.pad(x, ((0, b_pad - B), (0, 0), (0, 0)))

    flops = 2 * b_pad * F * E * (n_proj * E) + 4 * b_pad * F * F * E
    transcendentals = (b_pad * head_num * F * F      # exp
                       + b_pad * F * E               # tanh
                       + b_pad * head_num * F)       # reciprocal
    bytes_accessed = 2 * b_pad * F * E * in_dtype.itemsize + slab_bytes

    def run(cfg):
        kernel = functools.partial(
            _mha_kernel, head_num=head_num, use_residual=use_res,
            mxu_dtype=mxu_dtype, head_batched=cfg["head_batched"])
        if cfg["single_buffer_weight"]:
            # Grid-invariant slab -> single-buffer it, freeing VMEM for tiles.
            w_spec = pl.BlockSpec((E, n_proj * E), lambda i: (0, 0),
                                  pipeline_mode=pl.Buffered(1))
        else:
            w_spec = pl.BlockSpec((E, n_proj * E), lambda i: (0, 0))
        out = pl.pallas_call(
            kernel,
            out_shape=jax.ShapeDtypeStruct((b_pad, F, E), in_dtype),
            grid=(n_blocks,),
            in_specs=[
                pl.BlockSpec((tile_b, F, E), lambda i: (i, 0, 0)),  # batch tiles
                w_spec,                                             # resident slab
            ],
            out_specs=pl.BlockSpec((tile_b, F, E), lambda i: (i, 0, 0)),
            compiler_params=pltpu.CompilerParams(
                dimension_semantics=("parallel",),     # megacore-shard batch
                vmem_limit_bytes=int(vmem_budget)),
            cost_estimate=pl.CostEstimate(
                flops=int(flops), transcendentals=int(transcendentals),
                bytes_accessed=int(bytes_accessed)),
        )(x_in, w)
        return jax.block_until_ready(out)

    last_err = None
    for idx in range(_ladder_start[0], len(_CONFIGS)):
        try:
            out = run(_CONFIGS[idx])
            _ladder_start[0] = idx
            return out[:B]
        except Exception as e:    # lowering/compile rejection -> next config
            last_err = e
    raise last_err


# ------------------------------ pure-JAX reference -----------------------------
def reference_forward(x, w_q, w_k, w_v, w_r, *, head_num, scaling=True,
                      use_residual=True):
    B, F, E = x.shape
    d = E // head_num
    q = (x @ w_q).reshape(B, F, head_num, d).transpose(2, 0, 1, 3)   # (H,B,F,d)
    k = (x @ w_k).reshape(B, F, head_num, d).transpose(2, 0, 1, 3)
    v = (x @ w_v).reshape(B, F, head_num, d).transpose(2, 0, 1, 3)
    s = q @ jnp.swapaxes(k, -1, -2)                                  # (H,B,F,F)
    if scaling:
        s = s * (1.0 / math.sqrt(d))
    p = jax.nn.softmax(s, axis=-1)
    o = p @ v                                                        # (H,B,F,d)
    o = jnp.concatenate(jnp.split(o, head_num, axis=0), axis=-1)[0]  # (B,F,E)
    if use_residual:
        o = o + x @ w_r
    return jnp.tanh(o)


# ----------------------------------- main --------------------------------------
if __name__ == "__main__":
    key = jax.random.PRNGKey(0)
    kx, kq, kk, kv, kr = jax.random.split(key, 5)

    B, F, E, H = 8, 8, 32, 4          # batch, fields/seq, emb_dim, head_num

    # The PyTorch module's xavier loop never touches raw nn.Parameters, so init
    # is plain randn; a moderate scale keeps the checks well-conditioned.
    w_scale = 1.0 / math.sqrt(E)
    x = jax.random.normal(kx, (B, F, E), jnp.float32)
    w_q = jax.random.normal(kq, (E, E), jnp.float32) * w_scale
    w_k = jax.random.normal(kk, (E, E), jnp.float32) * w_scale
    w_v = jax.random.normal(kv, (E, E), jnp.float32) * w_scale
    w_r = jax.random.normal(kr, (E, E), jnp.float32) * w_scale

    ref = reference_forward(x, w_q, w_k, w_v, w_r, head_num=H,
                            scaling=True, use_residual=True)

    # 1) f32 MXU operands. Tolerance covers the EUP approx-reciprocal softmax
    #    normalization (~1e-3-level on tanh-bounded outputs).
    out = jax.block_until_ready(
        multihead_attention_pallas(x, w_q, w_k, w_v, w_r, head_num=H,
                                   scaling=True, use_residual=True))
    assert out.shape == (B, F, E)
    err = float(jnp.max(jnp.abs(out - ref)))
    assert err < 1e-2, err

    # 2) bf16 MXU operands with f32 accumulation (the configuration used at
    #    scale); looser tolerance for bf16 operand rounding.
    out_bf = jax.block_until_ready(
        multihead_attention_pallas(x, w_q, w_k, w_v, w_r, head_num=H,
                                   scaling=True, use_residual=True,
                                   mxu_dtype=jnp.bfloat16))
    err_bf = float(jnp.max(jnp.abs(out_bf - ref)))
    assert err_bf < 1e-1, err_bf

    # 3) no-residual path exercises the (E, 3E) weight slab.
    ref_nr = reference_forward(x, w_q, w_k, w_v, None, head_num=H,
                               scaling=True, use_residual=False)
    out_nr = jax.block_until_ready(
        multihead_attention_pallas(x, w_q, w_k, w_v, head_num=H,
                                   scaling=True, use_residual=False))
    err_nr = float(jnp.max(jnp.abs(out_nr - ref_nr)))
    assert err_nr < 1e-2, err_nr

    print("KERNEL_OK")
</pallas_src>

<mosaic_0001>
module attributes {stable_mosaic.version = 11 : i64} {
  func.func @_mha_kernel(%arg0: i32, %arg1: memref<4x8x32xf32, #tpu.memory_space<vmem>>, %arg2: memref<32x128xf32, #tpu.memory_space<vmem>>, %arg3: memref<4x8x32xf32, #tpu.memory_space<vmem>>) attributes {dimension_semantics = [#tpu.dimension_semantics<parallel>], iteration_bounds = array<i64: 2>, scalar_prefetch = 0 : i64, scratch_operands = 0 : i64, tpu.core_type = #tpu.core_type<tc>, window_params = [{transform_indices = @transform_0, window_bounds = array<i64: 4, 8, 32>}, {pipeline_mode = #tpu.pipeline_mode<synchronous>, transform_indices = @transform_1, window_bounds = array<i64: 32, 128>}, {transform_indices = @transform_2, window_bounds = array<i64: 4, 8, 32>}]} {
    %c0 = arith.constant 0 : index
    %c0_0 = arith.constant 0 : index
    %c0_1 = arith.constant 0 : index
    %0 = vector.load %arg1[%c0, %c0_0, %c0_1] : memref<4x8x32xf32, #tpu.memory_space<vmem>>, vector<4x8x32xf32>
    %c0_2 = arith.constant 0 : index
    %c0_3 = arith.constant 0 : index
    %1 = vector.load %arg2[%c0_2, %c0_3] : memref<32x128xf32, #tpu.memory_space<vmem>>, vector<32x128xf32>
    %2 = vector.shape_cast %0 : vector<4x8x32xf32> to vector<32x32xf32>
    %cst = arith.constant dense<0.000000e+00> : vector<32x128xf32>
    %3 = tpu.matmul %2, %1, %cst {dimension_numbers = #tpu.dot_dimension_numbers<[1], [0], [0], [1], [0, 0, 1, 1], [], []>} : vector<32x32xf32>, vector<32x128xf32>, vector<32x128xf32> -> vector<32x128xf32>
    %4 = vector.shape_cast %3 : vector<32x128xf32> to vector<4x8x128xf32>
    %5 = vector.extract_strided_slice %4 {offsets = [0, 0, 0], sizes = [4, 8, 32], strides = [1, 1, 1]} : vector<4x8x128xf32> to vector<4x8x32xf32>
    %6 = vector.extract_strided_slice %4 {offsets = [0, 0, 32], sizes = [4, 8, 32], strides = [1, 1, 1]} : vector<4x8x128xf32> to vector<4x8x32xf32>
    %7 = vector.extract_strided_slice %4 {offsets = [0, 0, 64], sizes = [4, 8, 32], strides = [1, 1, 1]} : vector<4x8x128xf32> to vector<4x8x32xf32>
    %8 = vector.extract_strided_slice %5 {offsets = [0, 0, 0], sizes = [4, 8, 8], strides = [1, 1, 1]} : vector<4x8x32xf32> to vector<4x8x8xf32>
    %9 = vector.extract_strided_slice %6 {offsets = [0, 0, 0], sizes = [4, 8, 8], strides = [1, 1, 1]} : vector<4x8x32xf32> to vector<4x8x8xf32>
    %10 = vector.extract_strided_slice %7 {offsets = [0, 0, 0], sizes = [4, 8, 8], strides = [1, 1, 1]} : vector<4x8x32xf32> to vector<4x8x8xf32>
    "tpu.trace_start"() <{level = 10 : i32, message = "bqd,bkd->bqk"}> : () -> ()
    %cst_4 = arith.constant dense<0.000000e+00> : vector<4x8x8xf32>
    %11 = tpu.matmul %8, %9, %cst_4 {dimension_numbers = #tpu.dot_dimension_numbers<[2], [2], [1], [1], [0, 0, 0, 1, 1, 1], [0], [0]>} : vector<4x8x8xf32>, vector<4x8x8xf32>, vector<4x8x8xf32> -> vector<4x8x8xf32>
    "tpu.trace_stop"() : () -> ()
    %cst_5 = arith.constant dense<0xFF800000> : vector<4x8xf32>
    %12 = vector.multi_reduction <maximumf>, %11, %cst_5 [2] : vector<4x8x8xf32> to vector<4x8xf32>
    %13 = vector.shape_cast %12 : vector<4x8xf32> to vector<4x8x1xf32>
    %14 = vector.broadcast %13 : vector<4x8x1xf32> to vector<4x8x8xf32>
    %15 = arith.subf %11, %14 : vector<4x8x8xf32>
    %16 = math.exp %15 : vector<4x8x8xf32>
    %cst_6 = arith.constant dense<0.000000e+00> : vector<4x8xf32>
    %17 = vector.multi_reduction <add>, %16, %cst_6 [2] : vector<4x8x8xf32> to vector<4x8xf32>
    %18 = vector.shape_cast %17 : vector<4x8xf32> to vector<4x8x1xf32>
    %19 = tpu.reciprocal %18 {approx = true} : vector<4x8x1xf32> -> vector<4x8x1xf32>
    "tpu.trace_start"() <{level = 10 : i32, message = "bqk,bkd->bqd"}> : () -> ()
    %cst_7 = arith.constant dense<0.000000e+00> : vector<4x8x8xf32>
    %20 = tpu.matmul %16, %10, %cst_7 {dimension_numbers = #tpu.dot_dimension_numbers<[2], [1], [1], [2], [0, 0, 0, 1, 1, 2], [0], [0]>} : vector<4x8x8xf32>, vector<4x8x8xf32>, vector<4x8x8xf32> -> vector<4x8x8xf32>
    "tpu.trace_stop"() : () -> ()
    %21 = vector.broadcast %19 : vector<4x8x1xf32> to vector<4x8x8xf32>
    %22 = arith.mulf %20, %21 : vector<4x8x8xf32>
    %23 = vector.extract_strided_slice %5 {offsets = [0, 0, 8], sizes = [4, 8, 8], strides = [1, 1, 1]} : vector<4x8x32xf32> to vector<4x8x8xf32>
    %24 = vector.extract_strided_slice %6 {offsets = [0, 0, 8], sizes = [4, 8, 8], strides = [1, 1, 1]} : vector<4x8x32xf32> to vector<4x8x8xf32>
    %25 = vector.extract_strided_slice %7 {offsets = [0, 0, 8], sizes = [4, 8, 8], strides = [1, 1, 1]} : vector<4x8x32xf32> to vector<4x8x8xf32>
    "tpu.trace_start"() <{level = 10 : i32, message = "bqd,bkd->bqk"}> : () -> ()
    %cst_8 = arith.constant dense<0.000000e+00> : vector<4x8x8xf32>
    %26 = tpu.matmul %23, %24, %cst_8 {dimension_numbers = #tpu.dot_dimension_numbers<[2], [2], [1], [1], [0, 0, 0, 1, 1, 1], [0], [0]>} : vector<4x8x8xf32>, vector<4x8x8xf32>, vector<4x8x8xf32> -> vector<4x8x8xf32>
    "tpu.trace_stop"() : () -> ()
    %cst_9 = arith.constant dense<0xFF800000> : vector<4x8xf32>
    %27 = vector.multi_reduction <maximumf>, %26, %cst_9 [2] : vector<4x8x8xf32> to vector<4x8xf32>
    %28 = vector.shape_cast %27 : vector<4x8xf32> to vector<4x8x1xf32>
    %29 = vector.broadcast %28 : vector<4x8x1xf32> to vector<4x8x8xf32>
    %30 = arith.subf %26, %29 : vector<4x8x8xf32>
    %31 = math.exp %30 : vector<4x8x8xf32>
    %cst_10 = arith.constant dense<0.000000e+00> : vector<4x8xf32>
    %32 = vector.multi_reduction <add>, %31, %cst_10 [2] : vector<4x8x8xf32> to vector<4x8xf32>
    %33 = vector.shape_cast %32 : vector<4x8xf32> to vector<4x8x1xf32>
    %34 = tpu.reciprocal %33 {approx = true} : vector<4x8x1xf32> -> vector<4x8x1xf32>
    "tpu.trace_start"() <{level = 10 : i32, message = "bqk,bkd->bqd"}> : () -> ()
    %cst_11 = arith.constant dense<0.000000e+00> : vector<4x8x8xf32>
    %35 = tpu.matmul %31, %25, %cst_11 {dimension_numbers = #tpu.dot_dimension_numbers<[2], [1], [1], [2], [0, 0, 0, 1, 1, 2], [0], [0]>} : vector<4x8x8xf32>, vector<4x8x8xf32>, vector<4x8x8xf32> -> vector<4x8x8xf32>
    "tpu.trace_stop"() : () -> ()
    %36 = vector.broadcast %34 : vector<4x8x1xf32> to vector<4x8x8xf32>
    %37 = arith.mulf %35, %36 : vector<4x8x8xf32>
    %38 = vector.extract_strided_slice %5 {offsets = [0, 0, 16], sizes = [4, 8, 8], strides = [1, 1, 1]} : vector<4x8x32xf32> to vector<4x8x8xf32>
    %39 = vector.extract_strided_slice %6 {offsets = [0, 0, 16], sizes = [4, 8, 8], strides = [1, 1, 1]} : vector<4x8x32xf32> to vector<4x8x8xf32>
    %40 = vector.extract_strided_slice %7 {offsets = [0, 0, 16], sizes = [4, 8, 8], strides = [1, 1, 1]} : vector<4x8x32xf32> to vector<4x8x8xf32>
    "tpu.trace_start"() <{level = 10 : i32, message = "bqd,bkd->bqk"}> : () -> ()
    %cst_12 = arith.constant dense<0.000000e+00> : vector<4x8x8xf32>
    %41 = tpu.matmul %38, %39, %cst_12 {dimension_numbers = #tpu.dot_dimension_numbers<[2], [2], [1], [1], [0, 0, 0, 1, 1, 1], [0], [0]>} : vector<4x8x8xf32>, vector<4x8x8xf32>, vector<4x8x8xf32> -> vector<4x8x8xf32>
    "tpu.trace_stop"() : () -> ()
    %cst_13 = arith.constant dense<0xFF800000> : vector<4x8xf32>
    %42 = vector.multi_reduction <maximumf>, %41, %cst_13 [2] : vector<4x8x8xf32> to vector<4x8xf32>
    %43 = vector.shape_cast %42 : vector<4x8xf32> to vector<4x8x1xf32>
    %44 = vector.broadcast %43 : vector<4x8x1xf32> to vector<4x8x8xf32>
    %45 = arith.subf %41, %44 : vector<4x8x8xf32>
    %46 = math.exp %45 : vector<4x8x8xf32>
    %cst_14 = arith.constant dense<0.000000e+00> : vector<4x8xf32>
    %47 = vector.multi_reduction <add>, %46, %cst_14 [2] : vector<4x8x8xf32> to vector<4x8xf32>
    %48 = vector.shape_cast %47 : vector<4x8xf32> to vector<4x8x1xf32>
    %49 = tpu.reciprocal %48 {approx = true} : vector<4x8x1xf32> -> vector<4x8x1xf32>
    "tpu.trace_start"() <{level = 10 : i32, message = "bqk,bkd->bqd"}> : () -> ()
    %cst_15 = arith.constant dense<0.000000e+00> : vector<4x8x8xf32>
    %50 = tpu.matmul %46, %40, %cst_15 {dimension_numbers = #tpu.dot_dimension_numbers<[2], [1], [1], [2], [0, 0, 0, 1, 1, 2], [0], [0]>} : vector<4x8x8xf32>, vector<4x8x8xf32>, vector<4x8x8xf32> -> vector<4x8x8xf32>
    "tpu.trace_stop"() : () -> ()
    %51 = vector.broadcast %49 : vector<4x8x1xf32> to vector<4x8x8xf32>
    %52 = arith.mulf %50, %51 : vector<4x8x8xf32>
    %53 = vector.extract_strided_slice %5 {offsets = [0, 0, 24], sizes = [4, 8, 8], strides = [1, 1, 1]} : vector<4x8x32xf32> to vector<4x8x8xf32>
    %54 = vector.extract_strided_slice %6 {offsets = [0, 0, 24], sizes = [4, 8, 8], strides = [1, 1, 1]} : vector<4x8x32xf32> to vector<4x8x8xf32>
    %55 = vector.extract_strided_slice %7 {offsets = [0, 0, 24], sizes = [4, 8, 8], strides = [1, 1, 1]} : vector<4x8x32xf32> to vector<4x8x8xf32>
    "tpu.trace_start"() <{level = 10 : i32, message = "bqd,bkd->bqk"}> : () -> ()
    %cst_16 = arith.constant dense<0.000000e+00> : vector<4x8x8xf32>
    %56 = tpu.matmul %53, %54, %cst_16 {dimension_numbers = #tpu.dot_dimension_numbers<[2], [2], [1], [1], [0, 0, 0, 1, 1, 1], [0], [0]>} : vector<4x8x8xf32>, vector<4x8x8xf32>, vector<4x8x8xf32> -> vector<4x8x8xf32>
    "tpu.trace_stop"() : () -> ()
    %cst_17 = arith.constant dense<0xFF800000> : vector<4x8xf32>
    %57 = vector.multi_reduction <maximumf>, %56, %cst_17 [2] : vector<4x8x8xf32> to vector<4x8xf32>
    %58 = vector.shape_cast %57 : vector<4x8xf32> to vector<4x8x1xf32>
    %59 = vector.broadcast %58 : vector<4x8x1xf32> to vector<4x8x8xf32>
    %60 = arith.subf %56, %59 : vector<4x8x8xf32>
    %61 = math.exp %60 : vector<4x8x8xf32>
    %cst_18 = arith.constant dense<0.000000e+00> : vector<4x8xf32>
    %62 = vector.multi_reduction <add>, %61, %cst_18 [2] : vector<4x8x8xf32> to vector<4x8xf32>
    %63 = vector.shape_cast %62 : vector<4x8xf32> to vector<4x8x1xf32>
    %64 = tpu.reciprocal %63 {approx = true} : vector<4x8x1xf32> -> vector<4x8x1xf32>
    "tpu.trace_start"() <{level = 10 : i32, message = "bqk,bkd->bqd"}> : () -> ()
    %cst_19 = arith.constant dense<0.000000e+00> : vector<4x8x8xf32>
    %65 = tpu.matmul %61, %55, %cst_19 {dimension_numbers = #tpu.dot_dimension_numbers<[2], [1], [1], [2], [0, 0, 0, 1, 1, 2], [0], [0]>} : vector<4x8x8xf32>, vector<4x8x8xf32>, vector<4x8x8xf32> -> vector<4x8x8xf32>
    "tpu.trace_stop"() : () -> ()
    %66 = vector.broadcast %64 : vector<4x8x1xf32> to vector<4x8x8xf32>
    %67 = arith.mulf %65, %66 : vector<4x8x8xf32>
    %68 = tpu.concatenate %22, %37, %52, %67 in 2 : vector<4x8x8xf32>, vector<4x8x8xf32>, vector<4x8x8xf32>, vector<4x8x8xf32> -> vector<4x8x32xf32>
    %69 = vector.extract_strided_slice %4 {offsets = [0, 0, 96], sizes = [4, 8, 32], strides = [1, 1, 1]} : vector<4x8x128xf32> to vector<4x8x32xf32>
    %70 = arith.addf %68, %69 : vector<4x8x32xf32>
    %71 = math.tanh %70 : vector<4x8x32xf32>
    %c0_20 = arith.constant 0 : index
    %c0_21 = arith.constant 0 : index
    %c0_22 = arith.constant 0 : index
    %72 = vector.load %arg3[%c0_20, %c0_21, %c0_22] : memref<4x8x32xf32, #tpu.memory_space<vmem>>, vector<4x8x32xf32>
    tpu.vector_store %arg3[%c0_20, %c0_21, %c0_22], %71 {strides = array<i32>} : memref<4x8x32xf32, #tpu.memory_space<vmem>>, vector<4x8x32xf32>,
    return
  }
  func.func @transform_0(%arg0: i32) -> (i32, i32, i32) {
    %c0_i32 = arith.constant 0 : i32
    %c0_i32_0 = arith.constant 0 : i32
    %c0_i32_1 = arith.constant 0 : i32
    return %arg0, %c0_i32, %c0_i32_0 : i32, i32, i32
  }
  func.func @transform_1(%arg0: i32) -> (i32, i32) {
    %c0_i32 = arith.constant 0 : i32
    %c0_i32_0 = arith.constant 0 : i32
    %c0_i32_1 = arith.constant 0 : i32
    return %c0_i32, %c0_i32_0 : i32, i32
  }
  func.func @transform_2(%arg0: i32) -> (i32, i32, i32) {
    %c0_i32 = arith.constant 0 : i32
    %c0_i32_0 = arith.constant 0 : i32
    %c0_i32_1 = arith.constant 0 : i32
    return %arg0, %c0_i32, %c0_i32_0 : i32, i32, i32
  }
}

module attributes {stable_mosaic.version = 11 : i64} {
  func.func @_mha_kernel(%arg0: i32, %arg1: memref<4x8x32xf32, #tpu.memory_space<vmem>>, %arg2: memref<32x128xf32, #tpu.memory_space<vmem>>, %arg3: memref<4x8x32xf32, #tpu.memory_space<vmem>>) attributes {dimension_semantics = [#tpu.dimension_semantics<parallel>], iteration_bounds = array<i64: 2>, scalar_prefetch = 0 : i64, scratch_operands = 0 : i64, tpu.core_type = #tpu.core_type<tc>, window_params = [{transform_indices = @transform_0, window_bounds = array<i64: 4, 8, 32>}, {pipeline_mode = #tpu.pipeline_mode<synchronous>, transform_indices = @transform_1, window_bounds = array<i64: 32, 128>}, {transform_indices = @transform_2, window_bounds = array<i64: 4, 8, 32>}]} {
    %c0 = arith.constant 0 : index
    %c0_0 = arith.constant 0 : index
    %c0_1 = arith.constant 0 : index
    %0 = vector.load %arg1[%c0, %c0_0, %c0_1] : memref<4x8x32xf32, #tpu.memory_space<vmem>>, vector<4x8x32xf32>
    %c0_2 = arith.constant 0 : index
    %c0_3 = arith.constant 0 : index
    %1 = vector.load %arg2[%c0_2, %c0_3] : memref<32x128xf32, #tpu.memory_space<vmem>>, vector<32x128xf32>
    %2 = vector.shape_cast %0 : vector<4x8x32xf32> to vector<32x32xf32>
    %cst = arith.constant dense<0.000000e+00> : vector<32x128xf32>
    %3 = tpu.matmul %2, %1, %cst {dimension_numbers = #tpu.dot_dimension_numbers<[1], [0], [0], [1], [0, 0, 1, 1], [], []>} : vector<32x32xf32>, vector<32x128xf32>, vector<32x128xf32> -> vector<32x128xf32>
    %4 = vector.shape_cast %3 : vector<32x128xf32> to vector<4x8x128xf32>
    %5 = vector.extract_strided_slice %4 {offsets = [0, 0, 0], sizes = [4, 8, 32], strides = [1, 1, 1]} : vector<4x8x128xf32> to vector<4x8x32xf32>
    %6 = vector.extract_strided_slice %4 {offsets = [0, 0, 32], sizes = [4, 8, 32], strides = [1, 1, 1]} : vector<4x8x128xf32> to vector<4x8x32xf32>
    %7 = vector.extract_strided_slice %4 {offsets = [0, 0, 64], sizes = [4, 8, 32], strides = [1, 1, 1]} : vector<4x8x128xf32> to vector<4x8x32xf32>
    %8 = vector.extract_strided_slice %5 {offsets = [0, 0, 0], sizes = [4, 8, 8], strides = [1, 1, 1]} : vector<4x8x32xf32> to vector<4x8x8xf32>
    %9 = vector.extract_strided_slice %6 {offsets = [0, 0, 0], sizes = [4, 8, 8], strides = [1, 1, 1]} : vector<4x8x32xf32> to vector<4x8x8xf32>
    %10 = vector.extract_strided_slice %7 {offsets = [0, 0, 0], sizes = [4, 8, 8], strides = [1, 1, 1]} : vector<4x8x32xf32> to vector<4x8x8xf32>
    "tpu.trace_start"() <{level = 10 : i32, message = "bqd,bkd->bqk"}> : () -> ()
    %cst_4 = arith.constant dense<0.000000e+00> : vector<4x8x8xf32>
    %11 = tpu.matmul %8, %9, %cst_4 {dimension_numbers = #tpu.dot_dimension_numbers<[2], [2], [1], [1], [0, 0, 0, 1, 1, 1], [0], [0]>} : vector<4x8x8xf32>, vector<4x8x8xf32>, vector<4x8x8xf32> -> vector<4x8x8xf32>
    "tpu.trace_stop"() : () -> ()
    %cst_5 = arith.constant dense<0xFF800000> : vector<4x8xf32>
    %12 = vector.multi_reduction <maximumf>, %11, %cst_5 [2] : vector<4x8x8xf32> to vector<4x8xf32>
    %13 = vector.shape_cast %12 : vector<4x8xf32> to vector<4x8x1xf32>
    %14 = vector.broadcast %13 : vector<4x8x1xf32> to vector<4x8x8xf32>
    %15 = arith.subf %11, %14 : vector<4x8x8xf32>
    %16 = math.exp %15 : vector<4x8x8xf32>
    %cst_6 = arith.constant dense<0.000000e+00> : vector<4x8xf32>
    %17 = vector.multi_reduction <add>, %16, %cst_6 [2] : vector<4x8x8xf32> to vector<4x8xf32>
    %18 = vector.shape_cast %17 : vector<4x8xf32> to vector<4x8x1xf32>
    %19 = tpu.reciprocal %18 {approx = true} : vector<4x8x1xf32> -> vector<4x8x1xf32>
    "tpu.trace_start"() <{level = 10 : i32, message = "bqk,bkd->bqd"}> : () -> ()
    %cst_7 = arith.constant dense<0.000000e+00> : vector<4x8x8xf32>
    %20 = tpu.matmul %16, %10, %cst_7 {dimension_numbers = #tpu.dot_dimension_numbers<[2], [1], [1], [2], [0, 0, 0, 1, 1, 2], [0], [0]>} : vector<4x8x8xf32>, vector<4x8x8xf32>, vector<4x8x8xf32> -> vector<4x8x8xf32>
    "tpu.trace_stop"() : () -> ()
    %21 = vector.broadcast %19 : vector<4x8x1xf32> to vector<4x8x8xf32>
    %22 = arith.mulf %20, %21 : vector<4x8x8xf32>
    %23 = vector.extract_strided_slice %5 {offsets = [0, 0, 8], sizes = [4, 8, 8], strides = [1, 1, 1]} : vector<4x8x32xf32> to vector<4x8x8xf32>
    %24 = vector.extract_strided_slice %6 {offsets = [0, 0, 8], sizes = [4, 8, 8], strides = [1, 1, 1]} : vector<4x8x32xf32> to vector<4x8x8xf32>
    %25 = vector.extract_strided_slice %7 {offsets = [0, 0, 8], sizes = [4, 8, 8], strides = [1, 1, 1]} : vector<4x8x32xf32> to vector<4x8x8xf32>
    "tpu.trace_start"() <{level = 10 : i32, message = "bqd,bkd->bqk"}> : () -> ()
    %cst_8 = arith.constant dense<0.000000e+00> : vector<4x8x8xf32>
    %26 = tpu.matmul %23, %24, %cst_8 {dimension_numbers = #tpu.dot_dimension_numbers<[2], [2], [1], [1], [0, 0, 0, 1, 1, 1], [0], [0]>} : vector<4x8x8xf32>, vector<4x8x8xf32>, vector<4x8x8xf32> -> vector<4x8x8xf32>
    "tpu.trace_stop"() : () -> ()
    %cst_9 = arith.constant dense<0xFF800000> : vector<4x8xf32>
    %27 = vector.multi_reduction <maximumf>, %26, %cst_9 [2] : vector<4x8x8xf32> to vector<4x8xf32>
    %28 = vector.shape_cast %27 : vector<4x8xf32> to vector<4x8x1xf32>
    %29 = vector.broadcast %28 : vector<4x8x1xf32> to vector<4x8x8xf32>
    %30 = arith.subf %26, %29 : vector<4x8x8xf32>
    %31 = math.exp %30 : vector<4x8x8xf32>
    %cst_10 = arith.constant dense<0.000000e+00> : vector<4x8xf32>
    %32 = vector.multi_reduction <add>, %31, %cst_10 [2] : vector<4x8x8xf32> to vector<4x8xf32>
    %33 = vector.shape_cast %32 : vector<4x8xf32> to vector<4x8x1xf32>
    %34 = tpu.reciprocal %33 {approx = true} : vector<4x8x1xf32> -> vector<4x8x1xf32>
    "tpu.trace_start"() <{level = 10 : i32, message = "bqk,bkd->bqd"}> : () -> ()
    %cst_11 = arith.constant dense<0.000000e+00> : vector<4x8x8xf32>
    %35 = tpu.matmul %31, %25, %cst_11 {dimension_numbers = #tpu.dot_dimension_numbers<[2], [1], [1], [2], [0, 0, 0, 1, 1, 2], [0], [0]>} : vector<4x8x8xf32>, vector<4x8x8xf32>, vector<4x8x8xf32> -> vector<4x8x8xf32>
    "tpu.trace_stop"() : () -> ()
    %36 = vector.broadcast %34 : vector<4x8x1xf32> to vector<4x8x8xf32>
    %37 = arith.mulf %35, %36 : vector<4x8x8xf32>
    %38 = vector.extract_strided_slice %5 {offsets = [0, 0, 16], sizes = [4, 8, 8], strides = [1, 1, 1]} : vector<4x8x32xf32> to vector<4x8x8xf32>
    %39 = vector.extract_strided_slice %6 {offsets = [0, 0, 16], sizes = [4, 8, 8], strides = [1, 1, 1]} : vector<4x8x32xf32> to vector<4x8x8xf32>
    %40 = vector.extract_strided_slice %7 {offsets = [0, 0, 16], sizes = [4, 8, 8], strides = [1, 1, 1]} : vector<4x8x32xf32> to vector<4x8x8xf32>
    "tpu.trace_start"() <{level = 10 : i32, message = "bqd,bkd->bqk"}> : () -> ()
    %cst_12 = arith.constant dense<0.000000e+00> : vector<4x8x8xf32>
    %41 = tpu.matmul %38, %39, %cst_12 {dimension_numbers = #tpu.dot_dimension_numbers<[2], [2], [1], [1], [0, 0, 0, 1, 1, 1], [0], [0]>} : vector<4x8x8xf32>, vector<4x8x8xf32>, vector<4x8x8xf32> -> vector<4x8x8xf32>
    "tpu.trace_stop"() : () -> ()
    %cst_13 = arith.constant dense<0xFF800000> : vector<4x8xf32>
    %42 = vector.multi_reduction <maximumf>, %41, %cst_13 [2] : vector<4x8x8xf32> to vector<4x8xf32>
    %43 = vector.shape_cast %42 : vector<4x8xf32> to vector<4x8x1xf32>
    %44 = vector.broadcast %43 : vector<4x8x1xf32> to vector<4x8x8xf32>
    %45 = arith.subf %41, %44 : vector<4x8x8xf32>
    %46 = math.exp %45 : vector<4x8x8xf32>
    %cst_14 = arith.constant dense<0.000000e+00> : vector<4x8xf32>
    %47 = vector.multi_reduction <add>, %46, %cst_14 [2] : vector<4x8x8xf32> to vector<4x8xf32>
    %48 = vector.shape_cast %47 : vector<4x8xf32> to vector<4x8x1xf32>
    %49 = tpu.reciprocal %48 {approx = true} : vector<4x8x1xf32> -> vector<4x8x1xf32>
    "tpu.trace_start"() <{level = 10 : i32, message = "bqk,bkd->bqd"}> : () -> ()
    %cst_15 = arith.constant dense<0.000000e+00> : vector<4x8x8xf32>
    %50 = tpu.matmul %46, %40, %cst_15 {dimension_numbers = #tpu.dot_dimension_numbers<[2], [1], [1], [2], [0, 0, 0, 1, 1, 2], [0], [0]>} : vector<4x8x8xf32>, vector<4x8x8xf32>, vector<4x8x8xf32> -> vector<4x8x8xf32>
    "tpu.trace_stop"() : () -> ()
    %51 = vector.broadcast %49 : vector<4x8x1xf32> to vector<4x8x8xf32>
    %52 = arith.mulf %50, %51 : vector<4x8x8xf32>
    %53 = vector.extract_strided_slice %5 {offsets = [0, 0, 24], sizes = [4, 8, 8], strides = [1, 1, 1]} : vector<4x8x32xf32> to vector<4x8x8xf32>
    %54 = vector.extract_strided_slice %6 {offsets = [0, 0, 24], sizes = [4, 8, 8], strides = [1, 1, 1]} : vector<4x8x32xf32> to vector<4x8x8xf32>
    %55 = vector.extract_strided_slice %7 {offsets = [0, 0, 24], sizes = [4, 8, 8], strides = [1, 1, 1]} : vector<4x8x32xf32> to vector<4x8x8xf32>
    "tpu.trace_start"() <{level = 10 : i32, message = "bqd,bkd->bqk"}> : () -> ()
    %cst_16 = arith.constant dense<0.000000e+00> : vector<4x8x8xf32>
    %56 = tpu.matmul %53, %54, %cst_16 {dimension_numbers = #tpu.dot_dimension_numbers<[2], [2], [1], [1], [0, 0, 0, 1, 1, 1], [0], [0]>} : vector<4x8x8xf32>, vector<4x8x8xf32>, vector<4x8x8xf32> -> vector<4x8x8xf32>
    "tpu.trace_stop"() : () -> ()
    %cst_17 = arith.constant dense<0xFF800000> : vector<4x8xf32>
    %57 = vector.multi_reduction <maximumf>, %56, %cst_17 [2] : vector<4x8x8xf32> to vector<4x8xf32>
    %58 = vector.shape_cast %57 : vector<4x8xf32> to vector<4x8x1xf32>
    %59 = vector.broadcast %58 : vector<4x8x1xf32> to vector<4x8x8xf32>
    %60 = arith.subf %56, %59 : vector<4x8x8xf32>
    %61 = math.exp %60 : vector<4x8x8xf32>
    %cst_18 = arith.constant dense<0.000000e+00> : vector<4x8xf32>
    %62 = vector.multi_reduction <add>, %61, %cst_18 [2] : vector<4x8x8xf32> to vector<4x8xf32>
    %63 = vector.shape_cast %62 : vector<4x8xf32> to vector<4x8x1xf32>
    %64 = tpu.reciprocal %63 {approx = true} : vector<4x8x1xf32> -> vector<4x8x1xf32>
    "tpu.trace_start"() <{level = 10 : i32, message = "bqk,bkd->bqd"}> : () -> ()
    %cst_19 = arith.constant dense<0.000000e+00> : vector<4x8x8xf32>
    %65 = tpu.matmul %61, %55, %cst_19 {dimension_numbers = #tpu.dot_dimension_numbers<[2], [1], [1], [2], [0, 0, 0, 1, 1, 2], [0], [0]>} : vector<4x8x8xf32>, vector<4x8x8xf32>, vector<4x8x8xf32> -> vector<4x8x8xf32>
    "tpu.trace_stop"() : () -> ()
    %66 = vector.broadcast %64 : vector<4x8x1xf32> to vector<4x8x8xf32>
    %67 = arith.mulf %65, %66 : vector<4x8x8xf32>
    %68 = tpu.concatenate %22, %37, %52, %67 in 2 : vector<4x8x8xf32>, vector<4x8x8xf32>, vector<4x8x8xf32>, vector<4x8x8xf32> -> vector<4x8x32xf32>
    %69 = vector.extract_strided_slice %4 {offsets = [0, 0, 96], sizes = [4, 8, 32], strides = [1, 1, 1]} : vector<4x8x128xf32> to vector<4x8x32xf32>
    %70 = arith.addf %68, %69 : vector<4x8x32xf32>
    %71 = math.tanh %70 : vector<4x8x32xf32>
    %c0_20 = arith.constant 0 : index
    %c0_21 = arith.constant 0 : index
    %c0_22 = arith.constant 0 : index
    %72 = vector.load %arg3[%c0_20, %c0_21, %c0_22] : memref<4x8x32xf32, #tpu.memory_space<vmem>>, vector<4x8x32xf32>
    tpu.vector_store %arg3[%c0_20, %c0_21, %c0_22], %71 {strides = array<i32>} : memref<4x8x32xf32, #tpu.memory_space<vmem>>, vector<4x8x32xf32>,
    return
  }
  func.func @transform_0(%arg0: i32) -> (i32, i32, i32) {
    %c0_i32 = arith.constant 0 : i32
    %c0_i32_0 = arith.constant 0 : i32
    %c0_i32_1 = arith.constant 0 : i32
    return %arg0, %c0_i32, %c0_i32_0 : i32, i32, i32
  }
  func.func @transform_1(%arg0: i32) -> (i32, i32) {
    %c0_i32 = arith.constant 0 : i32
    %c0_i32_0 = arith.constant 0 : i32
    %c0_i32_1 = arith.constant 0 : i32
    return %c0_i32, %c0_i32_0 : i32, i32
  }
  func.func @transform_2(%arg0: i32) -> (i32, i32, i32) {
    %c0_i32 = arith.constant 0 : i32
    %c0_i32_0 = arith.constant 0 : i32
    %c0_i32_1 = arith.constant 0 : i32
    return %arg0, %c0_i32, %c0_i32_0 : i32, i32, i32
  }
}

</mosaic_0001>

<llo_original>
// kernel: tpu_custom_call.1
$region0: #{tpu_custom_call.1}
  #allocation0 [shape = 'u32[]', space=smem, size = 0x4, offset = 0x4, fixed_abs, tag = 'smem constant byte address 0x4 - core index']
  #allocation1 [shape = 'u32[144,128]{1,0:T(1,128)}', space=vmem, size = 0x12000, scoped, tag = 'internal scratch']
  %s0 = inlined_call_operand.hbm [shape: f32[8,8,32], index: 0, kind: input, shape index: {}]
  %s1 = inlined_call_operand.hbm [shape: f32[32,128], index: 1, kind: input, shape index: {}]
  %s2 = inlined_call_operand.hbm [shape: f32[8,8,32], index: 2, kind: output, shape index: {}]
  %s3 = sld [smem:[#allocation0]]
  $region49: #{tpu_custom_call.1} parent=0
    _
  %s5 = ssub.s32 1, %s3
  %s6 = scalar_select 0, %s5, %s3
  $region1: #{tpu_custom_call.1} parent=0
    #allocation2 [shape = 'u8[32768]{0}', space=vmem, size = 0x8000, scoped, tag = 'input window, operand 0']
    #allocation3 [shape = 's32[2]{0}', space=sflag, size = 0x8, scoped, tag = 'scoped memory for tpu_custom_call.1']
    #allocation4 [shape = 's32[2]{0}', space=sflag, size = 0x8, scoped, tag = 'scoped memory for tpu_custom_call.1']
    #allocation5 [shape = 'u8[16384]{0}', space=vmem, size = 0x4000, scoped, tag = 'input window, operand 1, single buffered']
    #allocation6 [shape = 's32[1]{0}', space=sflag, size = 0x4, scoped, tag = 'scoped memory for tpu_custom_call.1']
    #allocation7 [shape = 'u8[32768]{0}', space=vmem, size = 0x8000, scoped, tag = 'output window, operand 0']
    %7 = vsyncpa [#allocation3], 0
    %s8 = scalar_lea.sflag [#allocation3], 1
    %9 = vsyncpa %s8, 0
    %10 = vsyncpa [#allocation6], 0
    %11 = vsyncpa [#allocation4], 0
    %s12 = scalar_lea.sflag [#allocation4], 1
    %13 = vsyncpa %s12, 0
    loop: start=0, step=1, limit=4
    $region2: #{tpu_custom_call.1} parent=1 // loop_pre_header
      _
    $region3: #{tpu_custom_call.1} parent=1 // loop_header
      %s15 = sphi 0, %s19
      %p16 = scmp.ge.s32.totalorder %s15, 4
      %s25 = sphi 0, %s27
      %s28 = sphi 0, %s25
      %s29 = sphi 0, %s28
      %s45 = sphi 0, %s29
      %s49 = sphi 0, %s49
      %s51 = sphi 0, %s49
      %s52 = sphi 0, %s51
      %s66 = sphi 0, %s52
      %s72 = sphi 0, %s74
      %s75 = sphi 0, %s72
      %s76 = sphi 0, %s75
      %s92 = sphi 0, %s76
    $region4: #{tpu_custom_call.1} parent=1 // loop_header_branch
      %18 = sbr.rel (%p16) target = $region8
    $region5: #{tpu_custom_call.1} parent=1 // loop_body
      %s20 = ssub.s32 %s15, 1
      %s21 = ssub.s32 %s15, 2
      %s22 = sadd.s32 %s15, 1
      %s23 = ssub.s32 %s15, %s22
      %p24 = scmp.eq.s32.totalorder %s23, 0
      %s26 = sadd.s32 %s25, 1
      %s27 = scalar_select %p24, %s25, %s26
      %p30 = pneg %p24
      %p31 = scmp.eq.s32.totalorder %s15, 1
      %p32 = por %p30, %p31
      %p33 = scmp.ne.s32.totalorder %s25, %s28
      %p34 = scmp.eq.s32.totalorder %s15, 0
      %p35 = por %p33, %p34
      %p36 = scmp.ne.s32.totalorder %s25, %s28
      %p37 = scmp.eq.s32.totalorder %s20, 1
      %p38 = por %p36, %p37
      %p39 = scmp.ne.s32.totalorder %s28, %s29
      %p40 = scmp.eq.s32.totalorder %s20, 0
      %p41 = por %p39, %p40
      %p42 = scmp.ne.s32.totalorder %s28, %s29
      %p43 = scmp.eq.s32.totalorder %s21, 1
      %p44 = por %p42, %p43
      %p46 = scmp.ne.s32.totalorder %s29, %s45
      %p47 = scmp.eq.s32.totalorder %s21, 0
      %p48 = por %p46, %p47
      %s50 = sadd.s32 %s49, 1
      %p53 = scmp.eq.s32.totalorder %s15, 1
      %p54 = scmp.ne.s32.totalorder %s49, %s51
      %p55 = scmp.eq.s32.totalorder %s15, 0
      %p56 = por %p54, %p55
      %p57 = scmp.ne.s32.totalorder %s49, %s51
      %p58 = scmp.eq.s32.totalorder %s20, 1
      %p59 = por %p57, %p58
      %p60 = scmp.ne.s32.totalorder %s51, %s52
      %p61 = scmp.eq.s32.totalorder %s20, 0
      %p62 = por %p60, %p61
      %p63 = scmp.ne.s32.totalorder %s51, %s52
      %p64 = scmp.eq.s32.totalorder %s21, 1
      %p65 = por %p63, %p64
      %p67 = scmp.ne.s32.totalorder %s52, %s66
      %p68 = scmp.eq.s32.totalorder %s21, 0
      %p69 = por %p67, %p68
      %s70 = ssub.s32 %s15, %s22
      %p71 = scmp.eq.s32.totalorder %s70, 0
      %s73 = sadd.s32 %s72, 1
      %s74 = scalar_select %p71, %s72, %s73
      %p77 = pneg %p71
      %p78 = scmp.eq.s32.totalorder %s15, 1
      %p79 = por %p77, %p78
      %p80 = scmp.ne.s32.totalorder %s72, %s75
      %p81 = scmp.eq.s32.totalorder %s15, 0
      %p82 = por %p80, %p81
      %p83 = scmp.ne.s32.totalorder %s72, %s75
      %p84 = scmp.eq.s32.totalorder %s20, 1
      %p85 = por %p83, %p84
      %p86 = scmp.ne.s32.totalorder %s75, %s76
      %p87 = scmp.eq.s32.totalorder %s20, 0
      %p88 = por %p86, %p87
      %p89 = scmp.ne.s32.totalorder %s75, %s76
      %p90 = scmp.eq.s32.totalorder %s21, 1
      %p91 = por %p89, %p90
      %p93 = scmp.ne.s32.totalorder %s76, %s92
      %p94 = scmp.eq.s32.totalorder %s21, 0
      %p95 = por %p93, %p94
      %p96 = scmp.le.s32.totalorder 1, %s15
      %p97 = scmp.lt.s32.totalorder %s15, 3
      %p98 = pnand %p96, %p97
      %p99 = pneg %p98
      // Predicated region
      $region9: #{tpu_custom_call.1} parent=5 // pred_check
        _
      $region10: #{tpu_custom_call.1} parent=5 // pred_check_branch
        %101 = sbr.rel (%p98) target = $region12
      $region11: #{tpu_custom_call.1} parent=5 // pred_region
        %s102 = ssub.s32 %s15, 1
        // Predicated region
        $region13: #{tpu_custom_call.1} parent=11 // pred_check
          %p103 = pneg %p62
        $region14: #{tpu_custom_call.1} parent=11 // pred_check_branch
          %105 = sbr.rel (%p103) target = $region16
        $region15: #{tpu_custom_call.1} parent=11 // pred_region
          %s107 = ssub.s32 512, 512
          %108 = vsyncadd [#allocation6], %s107
          %s109 = sshll.u32 [#allocation5], 4
          %s110 = int_to_ptr.vmem [resolvable:$true] %s109
          %115 = dma.hbm_to_vmem [thread:$0]  %s1, 512, %s110, [#allocation6], 128, 128, 8
        $region16: #{tpu_custom_call.1} parent=11 // pred_fallthru
          _
      $region12: #{tpu_custom_call.1} parent=5 // pred_fallthru
        _
      %p116 = scmp.lt.s32.totalorder %s15, 2
      // Predicated region
      $region17: #{tpu_custom_call.1} parent=5 // pred_check
        %p117 = pneg %p116
      $region18: #{tpu_custom_call.1} parent=5 // pred_check_branch
        %119 = sbr.rel (%p117) target = $region20
      $region19: #{tpu_custom_call.1} parent=5 // pred_region
        // Predicated region
        $region21: #{tpu_custom_call.1} parent=19 // pred_check
          %p120 = pneg %p35
        $region22: #{tpu_custom_call.1} parent=19 // pred_check_branch
          %122 = sbr.rel (%p120) target = $region24
        $region23: #{tpu_custom_call.1} parent=19 // pred_region
          %s123 = sand.u32 %s25, 1
          %s124 = scalar_lea.sflag [#allocation3], %s123
          %s125 = sand.u32 %s25, 1
          %s126 = smul.addr %s125, 32
          %s127 = scalar_lea.vmem [#allocation2], %s126
          %s128 = smul.u32 4, %s15
          %s130 = ssub.s32 512, 512
          %131 = vsyncadd %s124, %s130
          %s132 = smul.addr %s128, 128
          %s133 = scalar_lea.hbm %s0, %s132
          %s134 = sshll.u32 %s127, 4
          %s135 = int_to_ptr.vmem [resolvable:$true] %s134
          %140 = dma.hbm_to_vmem [thread:$0]  %s133, 512, %s135, %s124, 128, 128, 8
        $region24: #{tpu_custom_call.1} parent=19 // pred_fallthru
          _
      $region20: #{tpu_custom_call.1} parent=5 // pred_fallthru
        _
      %p141 = scmp.le.s32.totalorder 1, %s15
      %p142 = scmp.lt.s32.totalorder %s15, 3
      %p143 = pnand %p141, %p142
      %p144 = pneg %p143
      // Predicated region
      $region25: #{tpu_custom_call.1} parent=5 // pred_check
        _
      $region26: #{tpu_custom_call.1} parent=5 // pred_check_branch
        %146 = sbr.rel (%p143) target = $region28
      $region27: #{tpu_custom_call.1} parent=5 // pred_region
        %s147 = ssub.s32 %s15, 1
        %s148 = sand.u32 %s28, 1
        %s149 = scalar_lea.sflag [#allocation3], %s148
        %s150 = sand.u32 %s28, 1
        %s151 = smul.addr %s150, 32
        %s152 = scalar_lea.vmem [#allocation2], %s151
        // Predicated region
        $region29: #{tpu_custom_call.1} parent=27 // pred_check
          %p153 = pneg %p41
        $region30: #{tpu_custom_call.1} parent=27 // pred_check_branch
          %155 = sbr.rel (%p153) target = $region32
        $region31: #{tpu_custom_call.1} parent=27 // pred_region
          %156 = dma.done %s149, 512
        $region32: #{tpu_custom_call.1} parent=27 // pred_fallthru
          _
        // Predicated region
        $region33: #{tpu_custom_call.1} parent=27 // pred_check
          %p157 = pneg %p62
        $region34: #{tpu_custom_call.1} parent=27 // pred_check_branch
          %159 = sbr.rel (%p157) target = $region36
        $region35: #{tpu_custom_call.1} parent=27 // pred_region
          %160 = dma.done [#allocation6], 512
        $region36: #{tpu_custom_call.1} parent=27 // pred_fallthru
          _
        %s161 = sand.u32 %s28, 1
        %s162 = scalar_lea.sflag [#allocation3], %s161
        %s163 = sand.u32 %s28, 1
        %s164 = smul.addr %s163, 32
        %s165 = scalar_lea.vmem [#allocation2], %s164
        %p166 = pneg %p41
        %p167 = pneg %p38
        %p168 = pneg %p62
        %p169 = pneg %p59
        %p170 = pneg %p88
        %p171 = pneg %p85
        %s172 = sand.u32 %s75, 1
        %s173 = scalar_lea.sflag [#allocation4], %s172
        %s174 = sand.u32 %s75, 1
        %s175 = smul.addr %s174, 32
        %s176 = scalar_lea.vmem [#allocation7], %s175
        %s177 = smul.u32 4, %s20
        %s178 = smul.u32 4, %s20
        %v179 = vld [vmem:[%s152] sm:$0xff]
        %v180 = vld [vmem:[%s152 + $0x8] sm:$0xff]
        %v181 = vld [vmem:[%s152 + $0x10] sm:$0xff]
        %v182 = vld [vmem:[%s152 + $0x18] sm:$0xff]
        %v183 = vld [vmem:[#allocation5] sm:$0xff]
        %v184 = vld [vmem:[#allocation5 + $0x8] sm:$0xff]
        %v185 = vld [vmem:[#allocation5 + $0x10] sm:$0xff]
        %v186 = vld [vmem:[#allocation5 + $0x18] sm:$0xff]
        %vm187 = vcmask 261120
        %v189 = vsel %vm187, %v179, 0
        %v192 = vsel %vm187, %v180, 0
        %v195 = vsel %vm187, %v181, 0
        %v198 = vsel %vm187, %v182, 0
        %200 = vmatprep.subr.mxu0 0.0
        %201 = vmatpush1.msra.mxu0 %v183
        %202 = vmatprep.subr.mxu0 0.0
        %203 = vmatpush1.msra.mxu0 %v184
        %204 = vmatprep.subr.mxu0 0.0
        %205 = vmatpush1.msra.mxu0 %v185
        %206 = vmatprep.subr.mxu0 0.0
        %207 = vmatpush1.msra.mxu0 %v186
        %208 = vmatprep.subr.mxu0 0.0
        %209 = vmatpush1.msra.mxu0 0.0
        %210 = vmatprep.subr.mxu0 0.0
        %211 = vmatpush1.msra.mxu0 0.0
        %212 = vmatprep.subr.mxu0 0.0
        %213 = vmatpush1.msra.mxu0 0.0
        %214 = vmatprep.subr.mxu0 0.0
        %215 = vmatpush1.msra.mxu0 0.0
        %216 = vmatprep.subr.mxu0 0.0
        %217 = vmatpush1.msra.mxu0 0.0
        %218 = vmatprep.subr.mxu0 0.0
        %219 = vmatpush1.msra.mxu0 0.0
        %220 = vmatprep.subr.mxu0 0.0
        %221 = vmatpush1.msra.mxu0 0.0
        %222 = vmatprep.subr.mxu0 0.0
        %223 = vmatpush1.msra.mxu0 0.0
        %224 = vmatprep.subr.mxu0 0.0
        %225 = vmatpush1.msra.mxu0 0.0
        %226 = vmatprep.subr.mxu0 0.0
        %227 = vmatpush1.msra.mxu0 0.0
        %228 = vmatprep.subr.mxu0 0.0
        %229 = vmatpush1.msra.mxu0 0.0
        %230 = vmatprep.subr.mxu0 0.0
        %231 = vmatpush1.msra.mxu0 0.0
        %232 = vmatprep.subr.mxu0 0.0
        %233 = vmatpush1.msra.mxu0 0.0
        %234 = vmatprep.subr.mxu0 0.0
        %235 = vmatpush1.msra.mxu0 0.0
        %236 = vmatprep.subr.mxu0 0.0
        %237 = vmatpush1.msra.mxu0 0.0
        %238 = vmatprep.subr.mxu0 0.0
        %239 = vmatpush1.msra.mxu0 0.0
        %240 = vmatprep.subr.mxu0 0.0
        %241 = vmatpush1.msra.mxu0 0.0
        %242 = vmatprep.subr.mxu0 0.0
        %243 = vmatpush1.msra.mxu0 0.0
        %244 = vmatprep.subr.mxu0 0.0
        %245 = vmatpush1.msra.mxu0 0.0
        %246 = vmatprep.subr.mxu0 0.0
        %247 = vmatpush1.msra.mxu0 0.0
        %248 = vmatprep.subr.mxu0 0.0
        %249 = vmatpush1.msra.mxu0 0.0
        %250 = vmatprep.subr.mxu0 0.0
        %251 = vmatpush1.msra.mxu0 0.0
        %252 = vmatprep.subr.mxu0 0.0
        %253 = vmatpush1.msra.mxu0 0.0
        %254 = vmatprep.subr.mxu0 0.0
        %255 = vmatpush1.msra.mxu0 0.0
        %256 = vmatprep.subr.mxu0 0.0
        %257 = vmatpush1.msra.mxu0 0.0
        %258 = vmatprep.subr.mxu0 0.0
        %259 = vmatpush1.msra.mxu0 0.0
        %260 = vmatprep.subr.mxu0 0.0
        %261 = vmatpush1.msra.mxu0 0.0
        %262 = vmatprep.subr.mxu0 0.0
        %263 = vmatpush1.msra.mxu0 0.0
        %264 = vmatprep.mubr.f32.mxu0 0.0
        %265 = vmatmul.mubr.f32.gmra.mrb[0].mxu0 %v189
        %v266 = vpop.f32.mrb[0].mxu0
        %v267 = vadd.f32 0.0, %v266
        %v268 = vpop.f32.mrb[0].mxu0
        %269 = vmatprep.mubr.f32.mxu0 0.0
        %270 = vmatmul.mubr.f32.gmra.mrb[0].mxu0 %v192
        %v271 = vpop.f32.mrb[0].mxu0
        %v272 = vadd.f32 0.0, %v271
        %v273 = vpop.f32.mrb[0].mxu0
        %274 = vmatprep.mubr.f32.mxu0 0.0
        %275 = vmatmul.mubr.f32.gmra.mrb[0].mxu0 %v195
        %v276 = vpop.f32.mrb[0].mxu0
        %v277 = vadd.f32 0.0, %v276
        %v278 = vpop.f32.mrb[0].mxu0
        %279 = vmatprep.mubr.f32.mxu0 0.0
        %280 = vmatmul.mubr.f32.gmra.mrb[0].mxu0 %v198
        %v281 = vpop.f32.mrb[0].mxu0
        %v282 = vadd.f32 0.0, %v281
        %v283 = vpop.f32.mrb[0].mxu0
        %284 = vdwg.mxu0
        %286 = vrot.lane.b32.xlu0 %v267, 96
        %v287 = vpop.permute.xlu0 %286
        %vm288 = vcmask 64512
        %v289 = vsel %vm288, %v267, 0
        %v291 = vsel %vm288, %v287, 0
        %293 = vmatprep.subr.mxu0 0.0
        %294 = vmatpush1.xpose.msra.mxu0 %v291
        %295 = vmatprep.subr.mxu0 0.0
        %296 = vmatpush1.xpose.msra.mxu0 0.0
        %297 = vmatprep.subr.mxu0 0.0
        %298 = vmatpush1.xpose.msra.mxu0 0.0
        %299 = vmatprep.subr.mxu0 0.0
        %300 = vmatpush1.xpose.msra.mxu0 0.0
        %301 = vmatprep.subr.mxu0 0.0
        %302 = vmatpush1.xpose.msra.mxu0 0.0
        %303 = vmatprep.subr.mxu0 0.0
        %304 = vmatpush1.xpose.msra.mxu0 0.0
        %305 = vmatprep.subr.mxu0 0.0
        %306 = vmatpush1.xpose.msra.mxu0 0.0
        %307 = vmatprep.subr.mxu0 0.0
        %308 = vmatpush1.xpose.msra.mxu0 0.0
        %309 = vmatprep.subr.mxu0 0.0
        %310 = vmatpush1.xpose.msra.mxu0 0.0
        %311 = vmatprep.subr.mxu0 0.0
        %312 = vmatpush1.xpose.msra.mxu0 0.0
        %313 = vmatprep.subr.mxu0 0.0
        %314 = vmatpush1.xpose.msra.mxu0 0.0
        %315 = vmatprep.subr.mxu0 0.0
        %316 = vmatpush1.xpose.msra.mxu0 0.0
        %317 = vmatprep.subr.mxu0 0.0
        %318 = vmatpush1.xpose.msra.mxu0 0.0
        %319 = vmatprep.subr.mxu0 0.0
        %320 = vmatpush1.xpose.msra.mxu0 0.0
        %321 = vmatprep.subr.mxu0 0.0
        %322 = vmatpush1.xpose.msra.mxu0 0.0
        %323 = vmatprep.subr.mxu0 0.0
        %324 = vmatpush1.xpose.msra.mxu0 0.0
        %325 = vmatprep.subr.mxu0 0.0
        %326 = vmatpush1.xpose.msra.mxu0 0.0
        %327 = vmatprep.subr.mxu0 0.0
        %328 = vmatpush1.xpose.msra.mxu0 0.0
        %329 = vmatprep.subr.mxu0 0.0
        %330 = vmatpush1.xpose.msra.mxu0 0.0
        %331 = vmatprep.subr.mxu0 0.0
        %332 = vmatpush1.xpose.msra.mxu0 0.0
        %333 = vmatprep.subr.mxu0 0.0
        %334 = vmatpush1.xpose.msra.mxu0 0.0
        %335 = vmatprep.subr.mxu0 0.0
        %336 = vmatpush1.xpose.msra.mxu0 0.0
        %337 = vmatprep.subr.mxu0 0.0
        %338 = vmatpush1.xpose.msra.mxu0 0.0
        %339 = vmatprep.subr.mxu0 0.0
        %340 = vmatpush1.xpose.msra.mxu0 0.0
        %341 = vmatprep.subr.mxu0 0.0
        %342 = vmatpush1.xpose.msra.mxu0 0.0
        %343 = vmatprep.subr.mxu0 0.0
        %344 = vmatpush1.xpose.msra.mxu0 0.0
        %345 = vmatprep.subr.mxu0 0.0
        %346 = vmatpush1.xpose.msra.mxu0 0.0
        %347 = vmatprep.subr.mxu0 0.0
        %348 = vmatpush1.xpose.msra.mxu0 0.0
        %349 = vmatprep.subr.mxu0 0.0
        %350 = vmatpush1.xpose.msra.mxu0 0.0
        %351 = vmatprep.subr.mxu0 0.0
        %352 = vmatpush1.xpose.msra.mxu0 0.0
        %353 = vmatprep.subr.mxu0 0.0
        %354 = vmatpush1.xpose.msra.mxu0 0.0
        %355 = vmatprep.subr.mxu0 0.0
        %356 = vmatpush1.xpose.msra.mxu0 0.0
        %357 = vmatprep.mubr.f32.mxu0 0.0
        %358 = vmatmul.mubr.f32.gmra.mrb[0].mxu0 %v289
        %v359 = vpop.f32.mrb[0].mxu0
        %v360 = vadd.f32 0.0, %v359
        %v361 = vpop.f32.mrb[0].mxu0
        %362 = vdwg.mxu0
        %364 = vrot.lane.b32.xlu0 %v272, 96
        %v365 = vpop.permute.xlu0 %364
        %v366 = vsel %vm288, %v272, 0
        %v368 = vsel %vm288, %v365, 0
        %370 = vmatprep.subr.mxu0 0.0
        %371 = vmatpush1.xpose.msra.mxu0 %v368
        %372 = vmatprep.subr.mxu0 0.0
        %373 = vmatpush1.xpose.msra.mxu0 0.0
        %374 = vmatprep.subr.mxu0 0.0
        %375 = vmatpush1.xpose.msra.mxu0 0.0
        %376 = vmatprep.subr.mxu0 0.0
        %377 = vmatpush1.xpose.msra.mxu0 0.0
        %378 = vmatprep.subr.mxu0 0.0
        %379 = vmatpush1.xpose.msra.mxu0 0.0
        %380 = vmatprep.subr.mxu0 0.0
        %381 = vmatpush1.xpose.msra.mxu0 0.0
        %382 = vmatprep.subr.mxu0 0.0
        %383 = vmatpush1.xpose.msra.mxu0 0.0
        %384 = vmatprep.subr.mxu0 0.0
        %385 = vmatpush1.xpose.msra.mxu0 0.0
        %386 = vmatprep.subr.mxu0 0.0
        %387 = vmatpush1.xpose.msra.mxu0 0.0
        %388 = vmatprep.subr.mxu0 0.0
        %389 = vmatpush1.xpose.msra.mxu0 0.0
        %390 = vmatprep.subr.mxu0 0.0
        %391 = vmatpush1.xpose.msra.mxu0 0.0
        %392 = vmatprep.subr.mxu0 0.0
        %393 = vmatpush1.xpose.msra.mxu0 0.0
        %394 = vmatprep.subr.mxu0 0.0
        %395 = vmatpush1.xpose.msra.mxu0 0.0
        %396 = vmatprep.subr.mxu0 0.0
        %397 = vmatpush1.xpose.msra.mxu0 0.0
        %398 = vmatprep.subr.mxu0 0.0
        %399 = vmatpush1.xpose.msra.mxu0 0.0
        %400 = vmatprep.subr.mxu0 0.0
        %401 = vmatpush1.xpose.msra.mxu0 0.0
        %402 = vmatprep.subr.mxu0 0.0
        %403 = vmatpush1.xpose.msra.mxu0 0.0
        %404 = vmatprep.subr.mxu0 0.0
        %405 = vmatpush1.xpose.msra.mxu0 0.0
        %406 = vmatprep.subr.mxu0 0.0
        %407 = vmatpush1.xpose.msra.mxu0 0.0
        %408 = vmatprep.subr.mxu0 0.0
        %409 = vmatpush1.xpose.msra.mxu0 0.0
        %410 = vmatprep.subr.mxu0 0.0
        %411 = vmatpush1.xpose.msra.mxu0 0.0
        %412 = vmatprep.subr.mxu0 0.0
        %413 = vmatpush1.xpose.msra.mxu0 0.0
        %414 = vmatprep.subr.mxu0 0.0
        %415 = vmatpush1.xpose.msra.mxu0 0.0
        %416 = vmatprep.subr.mxu0 0.0
        %417 = vmatpush1.xpose.msra.mxu0 0.0
        %418 = vmatprep.subr.mxu0 0.0
        %419 = vmatpush1.xpose.msra.mxu0 0.0
        %420 = vmatprep.subr.mxu0 0.0
        %421 = vmatpush1.xpose.msra.mxu0 0.0
        %422 = vmatprep.subr.mxu0 0.0
        %423 = vmatpush1.xpose.msra.mxu0 0.0
        %424 = vmatprep.subr.mxu0 0.0
        %425 = vmatpush1.xpose.msra.mxu0 0.0
        %426 = vmatprep.subr.mxu0 0.0
        %427 = vmatpush1.xpose.msra.mxu0 0.0
        %428 = vmatprep.subr.mxu0 0.0
        %429 = vmatpush1.xpose.msra.mxu0 0.0
        %430 = vmatprep.subr.mxu0 0.0
        %431 = vmatpush1.xpose.msra.mxu0 0.0
        %432 = vmatprep.subr.mxu0 0.0
        %433 = vmatpush1.xpose.msra.mxu0 0.0
        %434 = vmatprep.mubr.f32.mxu0 0.0
        %435 = vmatmul.mubr.f32.gmra.mrb[0].mxu0 %v366
        %v436 = vpop.f32.mrb[0].mxu0
        %v437 = vadd.f32 0.0, %v436
        %v438 = vpop.f32.mrb[0].mxu0
        %439 = vdwg.mxu0
        %441 = vrot.lane.b32.xlu0 %v277, 96
        %v442 = vpop.permute.xlu0 %441
        %v443 = vsel %vm288, %v277, 0
        %v445 = vsel %vm288, %v442, 0
        %447 = vmatprep.subr.mxu0 0.0
        %448 = vmatpush1.xpose.msra.mxu0 %v445
        %449 = vmatprep.subr.mxu0 0.0
        %450 = vmatpush1.xpose.msra.mxu0 0.0
        %451 = vmatprep.subr.mxu0 0.0
        %452 = vmatpush1.xpose.msra.mxu0 0.0
        %453 = vmatprep.subr.mxu0 0.0
        %454 = vmatpush1.xpose.msra.mxu0 0.0
        %455 = vmatprep.subr.mxu0 0.0
        %456 = vmatpush1.xpose.msra.mxu0 0.0
        %457 = vmatprep.subr.mxu0 0.0
        %458 = vmatpush1.xpose.msra.mxu0 0.0
        %459 = vmatprep.subr.mxu0 0.0
        %460 = vmatpush1.xpose.msra.mxu0 0.0
        %461 = vmatprep.subr.mxu0 0.0
        %462 = vmatpush1.xpose.msra.mxu0 0.0
        %463 = vmatprep.subr.mxu0 0.0
        %464 = vmatpush1.xpose.msra.mxu0 0.0
        %465 = vmatprep.subr.mxu0 0.0
        %466 = vmatpush1.xpose.msra.mxu0 0.0
        %467 = vmatprep.subr.mxu0 0.0
        %468 = vmatpush1.xpose.msra.mxu0 0.0
        %469 = vmatprep.subr.mxu0 0.0
        %470 = vmatpush1.xpose.msra.mxu0 0.0
        %471 = vmatprep.subr.mxu0 0.0
        %472 = vmatpush1.xpose.msra.mxu0 0.0
        %473 = vmatprep.subr.mxu0 0.0
        %474 = vmatpush1.xpose.msra.mxu0 0.0
        %475 = vmatprep.subr.mxu0 0.0
        %476 = vmatpush1.xpose.msra.mxu0 0.0
        %477 = vmatprep.subr.mxu0 0.0
        %478 = vmatpush1.xpose.msra.mxu0 0.0
        %479 = vmatprep.subr.mxu0 0.0
        %480 = vmatpush1.xpose.msra.mxu0 0.0
        %481 = vmatprep.subr.mxu0 0.0
        %482 = vmatpush1.xpose.msra.mxu0 0.0
        %483 = vmatprep.subr.mxu0 0.0
        %484 = vmatpush1.xpose.msra.mxu0 0.0
        %485 = vmatprep.subr.mxu0 0.0
        %486 = vmatpush1.xpose.msra.mxu0 0.0
        %487 = vmatprep.subr.mxu0 0.0
        %488 = vmatpush1.xpose.msra.mxu0 0.0
        %489 = vmatprep.subr.mxu0 0.0
        %490 = vmatpush1.xpose.msra.mxu0 0.0
        %491 = vmatprep.subr.mxu0 0.0
        %492 = vmatpush1.xpose.msra.mxu0 0.0
        %493 = vmatprep.subr.mxu0 0.0
        %494 = vmatpush1.xpose.msra.mxu0 0.0
        %495 = vmatprep.subr.mxu0 0.0
        %496 = vmatpush1.xpose.msra.mxu0 0.0
        %497 = vmatprep.subr.mxu0 0.0
        %498 = vmatpush1.xpose.msra.mxu0 0.0
        %499 = vmatprep.subr.mxu0 0.0
        %500 = vmatpush1.xpose.msra.mxu0 0.0
        %501 = vmatprep.subr.mxu0 0.0
        %502 = vmatpush1.xpose.msra.mxu0 0.0
        %503 = vmatprep.subr.mxu0 0.0
        %504 = vmatpush1.xpose.msra.mxu0 0.0
        %505 = vmatprep.subr.mxu0 0.0
        %506 = vmatpush1.xpose.msra.mxu0 0.0
        %507 = vmatprep.subr.mxu0 0.0
        %508 = vmatpush1.xpose.msra.mxu0 0.0
        %509 = vmatprep.subr.mxu0 0.0
        %510 = vmatpush1.xpose.msra.mxu0 0.0
        %511 = vmatprep.mubr.f32.mxu0 0.0
        %512 = vmatmul.mubr.f32.gmra.mrb[0].mxu0 %v443
        %v513 = vpop.f32.mrb[0].mxu0
        %v514 = vadd.f32 0.0, %v513
        %v515 = vpop.f32.mrb[0].mxu0
        %516 = vdwg.mxu0
        %518 = vrot.lane.b32.xlu0 %v282, 96
        %v519 = vpop.permute.xlu0 %518
        %v520 = vsel %vm288, %v282, 0
        %v522 = vsel %vm288, %v519, 0
        %524 = vmatprep.subr.mxu0 0.0
        %525 = vmatpush1.xpose.msra.mxu0 %v522
        %526 = vmatprep.subr.mxu0 0.0
        %527 = vmatpush1.xpose.msra.mxu0 0.0
        %528 = vmatprep.subr.mxu0 0.0
        %529 = vmatpush1.xpose.msra.mxu0 0.0
        %530 = vmatprep.subr.mxu0 0.0
        %531 = vmatpush1.xpose.msra.mxu0 0.0
        %532 = vmatprep.subr.mxu0 0.0
        %533 = vmatpush1.xpose.msra.mxu0 0.0
        %534 = vmatprep.subr.mxu0 0.0
        %535 = vmatpush1.xpose.msra.mxu0 0.0
        %536 = vmatprep.subr.mxu0 0.0
        %537 = vmatpush1.xpose.msra.mxu0 0.0
        %538 = vmatprep.subr.mxu0 0.0
        %539 = vmatpush1.xpose.msra.mxu0 0.0
        %540 = vmatprep.subr.mxu0 0.0
        %541 = vmatpush1.xpose.msra.mxu0 0.0
        %542 = vmatprep.subr.mxu0 0.0
        %543 = vmatpush1.xpose.msra.mxu0 0.0
        %544 = vmatprep.subr.mxu0 0.0
        %545 = vmatpush1.xpose.msra.mxu0 0.0
        %546 = vmatprep.subr.mxu0 0.0
        %547 = vmatpush1.xpose.msra.mxu0 0.0
        %548 = vmatprep.subr.mxu0 0.0
        %549 = vmatpush1.xpose.msra.mxu0 0.0
        %550 = vmatprep.subr.mxu0 0.0
        %551 = vmatpush1.xpose.msra.mxu0 0.0
        %552 = vmatprep.subr.mxu0 0.0
        %553 = vmatpush1.xpose.msra.mxu0 0.0
        %554 = vmatprep.subr.mxu0 0.0
        %555 = vmatpush1.xpose.msra.mxu0 0.0
        %556 = vmatprep.subr.mxu0 0.0
        %557 = vmatpush1.xpose.msra.mxu0 0.0
        %558 = vmatprep.subr.mxu0 0.0
        %559 = vmatpush1.xpose.msra.mxu0 0.0
        %560 = vmatprep.subr.mxu0 0.0
        %561 = vmatpush1.xpose.msra.mxu0 0.0
        %562 = vmatprep.subr.mxu0 0.0
        %563 = vmatpush1.xpose.msra.mxu0 0.0
        %564 = vmatprep.subr.mxu0 0.0
        %565 = vmatpush1.xpose.msra.mxu0 0.0
        %566 = vmatprep.subr.mxu0 0.0
        %567 = vmatpush1.xpose.msra.mxu0 0.0
        %568 = vmatprep.subr.mxu0 0.0
        %569 = vmatpush1.xpose.msra.mxu0 0.0
        %570 = vmatprep.subr.mxu0 0.0
        %571 = vmatpush1.xpose.msra.mxu0 0.0
        %572 = vmatprep.subr.mxu0 0.0
        %573 = vmatpush1.xpose.msra.mxu0 0.0
        %574 = vmatprep.subr.mxu0 0.0
        %575 = vmatpush1.xpose.msra.mxu0 0.0
        %576 = vmatprep.subr.mxu0 0.0
        %577 = vmatpush1.xpose.msra.mxu0 0.0
        %578 = vmatprep.subr.mxu0 0.0
        %579 = vmatpush1.xpose.msra.mxu0 0.0
        %580 = vmatprep.subr.mxu0 0.0
        %581 = vmatpush1.xpose.msra.mxu0 0.0
        %582 = vmatprep.subr.mxu0 0.0
        %583 = vmatpush1.xpose.msra.mxu0 0.0
        %584 = vmatprep.subr.mxu0 0.0
        %585 = vmatpush1.xpose.msra.mxu0 0.0
        %586 = vmatprep.subr.mxu0 0.0
        %587 = vmatpush1.xpose.msra.mxu0 0.0
        %588 = vmatprep.mubr.f32.mxu0 0.0
        %589 = vmatmul.mubr.f32.gmra.mrb[0].mxu0 %v520
        %v590 = vpop.f32.mrb[0].mxu0
        %v591 = vadd.f32 0.0, %v590
        %v592 = vpop.f32.mrb[0].mxu0
        %593 = vdwg.mxu0
        %v594 = vsel %vm288, %v360, -inf
        %595 = vmax.xlane.f32.xlu0 %v594
        %v596 = vpop.xlane.xlu0 %595
        %v597 = vsel %vm288, %v437, -inf
        %598 = vmax.xlane.f32.xlu0 %v597
        %v599 = vpop.xlane.xlu0 %598
        %v600 = vsel %vm288, %v514, -inf
        %601 = vmax.xlane.f32.xlu0 %v600
        %v602 = vpop.xlane.xlu0 %601
        %v603 = vsel %vm288, %v591, -inf
        %604 = vmax.xlane.f32.xlu0 %v603
        %v605 = vpop.xlane.xlu0 %604
        %v606 = vsub.f32 %v360, %v596
        %v607 = vsub.f32 %v437, %v599
        %v608 = vsub.f32 %v514, %v602
        %v609 = vsub.f32 %v591, %v605
        %v610 = vmul.f32 %v606, 1.442695
        %v611 = vpow.pop %v610
        %v612 = vmul.f32 %v607, 1.442695
        %v613 = vpow.pop %v612
        %v614 = vmul.f32 %v608, 1.442695
        %v615 = vpow.pop %v614
        %v616 = vmul.f32 %v609, 1.442695
        %v617 = vpow.pop %v616
        %v618 = vsel %vm288, %v611, 0.0
        %619 = vadd.xlane.f32.xlu0 %v618
        %v620 = vpop.xlane.xlu0 %619
        %v621 = vsel %vm288, %v613, 0.0
        %622 = vadd.xlane.f32.xlu0 %v621
        %v623 = vpop.xlane.xlu0 %622
        %v624 = vsel %vm288, %v615, 0.0
        %625 = vadd.xlane.f32.xlu0 %v624
        %v626 = vpop.xlane.xlu0 %625
        %v627 = vsel %vm288, %v617, 0.0
        %628 = vadd.xlane.f32.xlu0 %v627
        %v629 = vpop.xlane.xlu0 %628
        %v630 = vrcp.pop %v620
        %v631 = vrcp.pop %v623
        %v632 = vrcp.pop %v626
        %v633 = vrcp.pop %v629
        %634 = vrot.lane.b32.xlu0 %v267, 64
        %v635 = vpop.permute.xlu0 %634
        %v638 = vsel %vm288, %v611, 0
        %640 = vmatprep.subr.mxu0 0.0
        %641 = vmatpush1.msra.mxu0 %v635
        %642 = vmatprep.subr.mxu0 0.0
        %643 = vmatpush1.msra.mxu0 0.0
        %644 = vmatprep.subr.mxu0 0.0
        %645 = vmatpush1.msra.mxu0 0.0
        %646 = vmatprep.subr.mxu0 0.0
        %647 = vmatpush1.msra.mxu0 0.0
        %648 = vmatprep.subr.mxu0 0.0
        %649 = vmatpush1.msra.mxu0 0.0
        %650 = vmatprep.subr.mxu0 0.0
        %651 = vmatpush1.msra.mxu0 0.0
        %652 = vmatprep.subr.mxu0 0.0
        %653 = vmatpush1.msra.mxu0 0.0
        %654 = vmatprep.subr.mxu0 0.0
        %655 = vmatpush1.msra.mxu0 0.0
        %656 = vmatprep.subr.mxu0 0.0
        %657 = vmatpush1.msra.mxu0 0.0
        %658 = vmatprep.subr.mxu0 0.0
        %659 = vmatpush1.msra.mxu0 0.0
        %660 = vmatprep.subr.mxu0 0.0
        %661 = vmatpush1.msra.mxu0 0.0
        %662 = vmatprep.subr.mxu0 0.0
        %663 = vmatpush1.msra.mxu0 0.0
        %664 = vmatprep.subr.mxu0 0.0
        %665 = vmatpush1.msra.mxu0 0.0
        %666 = vmatprep.subr.mxu0 0.0
        %667 = vmatpush1.msra.mxu0 0.0
        %668 = vmatprep.subr.mxu0 0.0
        %669 = vmatpush1.msra.mxu0 0.0
        %670 = vmatprep.subr.mxu0 0.0
        %671 = vmatpush1.msra.mxu0 0.0
        %672 = vmatprep.subr.mxu0 0.0
        %673 = vmatpush1.msra.mxu0 0.0
        %674 = vmatprep.subr.mxu0 0.0
        %675 = vmatpush1.msra.mxu0 0.0
        %676 = vmatprep.subr.mxu0 0.0
        %677 = vmatpush1.msra.mxu0 0.0
        %678 = vmatprep.subr.mxu0 0.0
        %679 = vmatpush1.msra.mxu0 0.0
        %680 = vmatprep.subr.mxu0 0.0
        %681 = vmatpush1.msra.mxu0 0.0
        %682 = vmatprep.subr.mxu0 0.0
        %683 = vmatpush1.msra.mxu0 0.0
        %684 = vmatprep.subr.mxu0 0.0
        %685 = vmatpush1.msra.mxu0 0.0
        %686 = vmatprep.subr.mxu0 0.0
        %687 = vmatpush1.msra.mxu0 0.0
        %688 = vmatprep.subr.mxu0 0.0
        %689 = vmatpush1.msra.mxu0 0.0
        %690 = vmatprep.subr.mxu0 0.0
        %691 = vmatpush1.msra.mxu0 0.0
        %692 = vmatprep.subr.mxu0 0.0
        %693 = vmatpush1.msra.mxu0 0.0
        %694 = vmatprep.subr.mxu0 0.0
        %695 = vmatpush1.msra.mxu0 0.0
        %696 = vmatprep.subr.mxu0 0.0
        %697 = vmatpush1.msra.mxu0 0.0
        %698 = vmatprep.subr.mxu0 0.0
        %699 = vmatpush1.msra.mxu0 0.0
        %700 = vmatprep.subr.mxu0 0.0
        %701 = vmatpush1.msra.mxu0 0.0
        %702 = vmatprep.subr.mxu0 0.0
        %703 = vmatpush1.msra.mxu0 0.0
        %704 = vmatprep.mubr.f32.mxu0 0.0
        %705 = vmatmul.mubr.f32.gmra.mrb[0].mxu0 %v638
        %v706 = vpop.f32.mrb[0].mxu0
        %v707 = vadd.f32 0.0, %v706
        %v708 = vpop.f32.mrb[0].mxu0
        %709 = vdwg.mxu0
        %710 = vrot.lane.b32.xlu0 %v272, 64
        %v711 = vpop.permute.xlu0 %710
        %v714 = vsel %vm288, %v613, 0
        %716 = vmatprep.subr.mxu0 0.0
        %717 = vmatpush1.msra.mxu0 %v711
        %718 = vmatprep.subr.mxu0 0.0
        %719 = vmatpush1.msra.mxu0 0.0
        %720 = vmatprep.subr.mxu0 0.0
        %721 = vmatpush1.msra.mxu0 0.0
        %722 = vmatprep.subr.mxu0 0.0
        %723 = vmatpush1.msra.mxu0 0.0
        %724 = vmatprep.subr.mxu0 0.0
        %725 = vmatpush1.msra.mxu0 0.0
        %726 = vmatprep.subr.mxu0 0.0
        %727 = vmatpush1.msra.mxu0 0.0
        %728 = vmatprep.subr.mxu0 0.0
        %729 = vmatpush1.msra.mxu0 0.0
        %730 = vmatprep.subr.mxu0 0.0
        %731 = vmatpush1.msra.mxu0 0.0
        %732 = vmatprep.subr.mxu0 0.0
        %733 = vmatpush1.msra.mxu0 0.0
        %734 = vmatprep.subr.mxu0 0.0
        %735 = vmatpush1.msra.mxu0 0.0
        %736 = vmatprep.subr.mxu0 0.0
        %737 = vmatpush1.msra.mxu0 0.0
        %738 = vmatprep.subr.mxu0 0.0
        %739 = vmatpush1.msra.mxu0 0.0
        %740 = vmatprep.subr.mxu0 0.0
        %741 = vmatpush1.msra.mxu0 0.0
        %742 = vmatprep.subr.mxu0 0.0
        %743 = vmatpush1.msra.mxu0 0.0
        %744 = vmatprep.subr.mxu0 0.0
        %745 = vmatpush1.msra.mxu0 0.0
        %746 = vmatprep.subr.mxu0 0.0
        %747 = vmatpush1.msra.mxu0 0.0
        %748 = vmatprep.subr.mxu0 0.0
        %749 = vmatpush1.msra.mxu0 0.0
        %750 = vmatprep.subr.mxu0 0.0
        %751 = vmatpush1.msra.mxu0 0.0
        %752 = vmatprep.subr.mxu0 0.0
        %753 = vmatpush1.msra.mxu0 0.0
        %754 = vmatprep.subr.mxu0 0.0
        %755 = vmatpush1.msra.mxu0 0.0
        %756 = vmatprep.subr.mxu0 0.0
        %757 = vmatpush1.msra.mxu0 0.0
        %758 = vmatprep.subr.mxu0 0.0
        %759 = vmatpush1.msra.mxu0 0.0
        %760 = vmatprep.subr.mxu0 0.0
        %761 = vmatpush1.msra.mxu0 0.0
        %762 = vmatprep.subr.mxu0 0.0
        %763 = vmatpush1.msra.mxu0 0.0
        %764 = vmatprep.subr.mxu0 0.0
        %765 = vmatpush1.msra.mxu0 0.0
        %766 = vmatprep.subr.mxu0 0.0
        %767 = vmatpush1.msra.mxu0 0.0
        %768 = vmatprep.subr.mxu0 0.0
        %769 = vmatpush1.msra.mxu0 0.0
        %770 = vmatprep.subr.mxu0 0.0
        %771 = vmatpush1.msra.mxu0 0.0
        %772 = vmatprep.subr.mxu0 0.0
        %773 = vmatpush1.msra.mxu0 0.0
        %774 = vmatprep.subr.mxu0 0.0
        %775 = vmatpush1.msra.mxu0 0.0
        %776 = vmatprep.subr.mxu0 0.0
        %777 = vmatpush1.msra.mxu0 0.0
        %778 = vmatprep.subr.mxu0 0.0
        %779 = vmatpush1.msra.mxu0 0.0
        %780 = vmatprep.mubr.f32.mxu0 0.0
        %781 = vmatmul.mubr.f32.gmra.mrb[0].mxu0 %v714
        %v782 = vpop.f32.mrb[0].mxu0
        %v783 = vadd.f32 0.0, %v782
        %v784 = vpop.f32.mrb[0].mxu0
        %785 = vdwg.mxu0
        %786 = vrot.lane.b32.xlu0 %v277, 64
        %v787 = vpop.permute.xlu0 %786
        %v790 = vsel %vm288, %v615, 0
        %792 = vmatprep.subr.mxu0 0.0
        %793 = vmatpush1.msra.mxu0 %v787
        %794 = vmatprep.subr.mxu0 0.0
        %795 = vmatpush1.msra.mxu0 0.0
        %796 = vmatprep.subr.mxu0 0.0
        %797 = vmatpush1.msra.mxu0 0.0
        %798 = vmatprep.subr.mxu0 0.0
        %799 = vmatpush1.msra.mxu0 0.0
        %800 = vmatprep.subr.mxu0 0.0
        %801 = vmatpush1.msra.mxu0 0.0
        %802 = vmatprep.subr.mxu0 0.0
        %803 = vmatpush1.msra.mxu0 0.0
        %804 = vmatprep.subr.mxu0 0.0
        %805 = vmatpush1.msra.mxu0 0.0
        %806 = vmatprep.subr.mxu0 0.0
        %807 = vmatpush1.msra.mxu0 0.0
        %808 = vmatprep.subr.mxu0 0.0
        %809 = vmatpush1.msra.mxu0 0.0
        %810 = vmatprep.subr.mxu0 0.0
        %811 = vmatpush1.msra.mxu0 0.0
        %812 = vmatprep.subr.mxu0 0.0
        %813 = vmatpush1.msra.mxu0 0.0
        %814 = vmatprep.subr.mxu0 0.0
        %815 = vmatpush1.msra.mxu0 0.0
        %816 = vmatprep.subr.mxu0 0.0
        %817 = vmatpush1.msra.mxu0 0.0
        %818 = vmatprep.subr.mxu0 0.0
        %819 = vmatpush1.msra.mxu0 0.0
        %820 = vmatprep.subr.mxu0 0.0
        %821 = vmatpush1.msra.mxu0 0.0
        %822 = vmatprep.subr.mxu0 0.0
        %823 = vmatpush1.msra.mxu0 0.0
        %824 = vmatprep.subr.mxu0 0.0
        %825 = vmatpush1.msra.mxu0 0.0
        %826 = vmatprep.subr.mxu0 0.0
        %827 = vmatpush1.msra.mxu0 0.0
        %828 = vmatprep.subr.mxu0 0.0
        %829 = vmatpush1.msra.mxu0 0.0
        %830 = vmatprep.subr.mxu0 0.0
        %831 = vmatpush1.msra.mxu0 0.0
        %832 = vmatprep.subr.mxu0 0.0
        %833 = vmatpush1.msra.mxu0 0.0
        %834 = vmatprep.subr.mxu0 0.0
        %835 = vmatpush1.msra.mxu0 0.0
        %836 = vmatprep.subr.mxu0 0.0
        %837 = vmatpush1.msra.mxu0 0.0
        %838 = vmatprep.subr.mxu0 0.0
        %839 = vmatpush1.msra.mxu0 0.0
        %840 = vmatprep.subr.mxu0 0.0
        %841 = vmatpush1.msra.mxu0 0.0
        %842 = vmatprep.subr.mxu0 0.0
        %843 = vmatpush1.msra.mxu0 0.0
        %844 = vmatprep.subr.mxu0 0.0
        %845 = vmatpush1.msra.mxu0 0.0
        %846 = vmatprep.subr.mxu0 0.0
        %847 = vmatpush1.msra.mxu0 0.0
        %848 = vmatprep.subr.mxu0 0.0
        %849 = vmatpush1.msra.mxu0 0.0
        %850 = vmatprep.subr.mxu0 0.0
        %851 = vmatpush1.msra.mxu0 0.0
        %852 = vmatprep.subr.mxu0 0.0
        %853 = vmatpush1.msra.mxu0 0.0
        %854 = vmatprep.subr.mxu0 0.0
        %855 = vmatpush1.msra.mxu0 0.0
        %856 = vmatprep.mubr.f32.mxu0 0.0
        %857 = vmatmul.mubr.f32.gmra.mrb[0].mxu0 %v790
        %v858 = vpop.f32.mrb[0].mxu0
        %v859 = vadd.f32 0.0, %v858
        %v860 = vpop.f32.mrb[0].mxu0
        %861 = vdwg.mxu0
        %862 = vrot.lane.b32.xlu0 %v282, 64
        %v863 = vpop.permute.xlu0 %862
        %v866 = vsel %vm288, %v617, 0
        %868 = vmatprep.subr.mxu0 0.0
        %869 = vmatpush1.msra.mxu0 %v863
        %870 = vmatprep.subr.mxu0 0.0
        %871 = vmatpush1.msra.mxu0 0.0
        %872 = vmatprep.subr.mxu0 0.0
        %873 = vmatpush1.msra.mxu0 0.0
        %874 = vmatprep.subr.mxu0 0.0
        %875 = vmatpush1.msra.mxu0 0.0
        %876 = vmatprep.subr.mxu0 0.0
        %877 = vmatpush1.msra.mxu0 0.0
        %878 = vmatprep.subr.mxu0 0.0
        %879 = vmatpush1.msra.mxu0 0.0
        %880 = vmatprep.subr.mxu0 0.0
        %881 = vmatpush1.msra.mxu0 0.0
        %882 = vmatprep.subr.mxu0 0.0
        %883 = vmatpush1.msra.mxu0 0.0
        %884 = vmatprep.subr.mxu0 0.0
        %885 = vmatpush1.msra.mxu0 0.0
        %886 = vmatprep.subr.mxu0 0.0
        %887 = vmatpush1.msra.mxu0 0.0
        %888 = vmatprep.subr.mxu0 0.0
        %889 = vmatpush1.msra.mxu0 0.0
        %890 = vmatprep.subr.mxu0 0.0
        %891 = vmatpush1.msra.mxu0 0.0
        %892 = vmatprep.subr.mxu0 0.0
        %893 = vmatpush1.msra.mxu0 0.0
        %894 = vmatprep.subr.mxu0 0.0
        %895 = vmatpush1.msra.mxu0 0.0
        %896 = vmatprep.subr.mxu0 0.0
        %897 = vmatpush1.msra.mxu0 0.0
        %898 = vmatprep.subr.mxu0 0.0
        %899 = vmatpush1.msra.mxu0 0.0
        %900 = vmatprep.subr.mxu0 0.0
        %901 = vmatpush1.msra.mxu0 0.0
        %902 = vmatprep.subr.mxu0 0.0
        %903 = vmatpush1.msra.mxu0 0.0
        %904 = vmatprep.subr.mxu0 0.0
        %905 = vmatpush1.msra.mxu0 0.0
        %906 = vmatprep.subr.mxu0 0.0
        %907 = vmatpush1.msra.mxu0 0.0
        %908 = vmatprep.subr.mxu0 0.0
        %909 = vmatpush1.msra.mxu0 0.0
        %910 = vmatprep.subr.mxu0 0.0
        %911 = vmatpush1.msra.mxu0 0.0
        %912 = vmatprep.subr.mxu0 0.0
        %913 = vmatpush1.msra.mxu0 0.0
        %914 = vmatprep.subr.mxu0 0.0
        %915 = vmatpush1.msra.mxu0 0.0
        %916 = vmatprep.subr.mxu0 0.0
        %917 = vmatpush1.msra.mxu0 0.0
        %918 = vmatprep.subr.mxu0 0.0
        %919 = vmatpush1.msra.mxu0 0.0
        %920 = vmatprep.subr.mxu0 0.0
        %921 = vmatpush1.msra.mxu0 0.0
        %922 = vmatprep.subr.mxu0 0.0
        %923 = vmatpush1.msra.mxu0 0.0
        %924 = vmatprep.subr.mxu0 0.0
        %925 = vmatpush1.msra.mxu0 0.0
        %926 = vmatprep.subr.mxu0 0.0
        %927 = vmatpush1.msra.mxu0 0.0
        %928 = vmatprep.subr.mxu0 0.0
        %929 = vmatpush1.msra.mxu0 0.0
        %930 = vmatprep.subr.mxu0 0.0
        %931 = vmatpush1.msra.mxu0 0.0
        %932 = vmatprep.mubr.f32.mxu0 0.0
        %933 = vmatmul.mubr.f32.gmra.mrb[0].mxu0 %v866
        %v934 = vpop.f32.mrb[0].mxu0
        %v935 = vadd.f32 0.0, %v934
        %v936 = vpop.f32.mrb[0].mxu0
        %937 = vdwg.mxu0
        %v938 = vmul.f32 %v707, %v630
        %v939 = vmul.f32 %v783, %v631
        %v940 = vmul.f32 %v859, %v632
        %v941 = vmul.f32 %v935, %v633
        %942 = vrot.lane.b32.xlu0 %v267, 120
        %v943 = vpop.permute.xlu0 %942
        %944 = vrot.lane.b32.xlu0 %v267, 88
        %v945 = vpop.permute.xlu0 %944
        %v946 = vsel %vm288, %v943, 0
        %v948 = vsel %vm288, %v945, 0
        %950 = vmatprep.subr.mxu0 0.0
        %951 = vmatpush1.xpose.msra.mxu0 %v948
        %952 = vmatprep.subr.mxu0 0.0
        %953 = vmatpush1.xpose.msra.mxu0 0.0
        %954 = vmatprep.subr.mxu0 0.0
        %955 = vmatpush1.xpose.msra.mxu0 0.0
        %956 = vmatprep.subr.mxu0 0.0
        %957 = vmatpush1.xpose.msra.mxu0 0.0
        %958 = vmatprep.subr.mxu0 0.0
        %959 = vmatpush1.xpose.msra.mxu0 0.0
        %960 = vmatprep.subr.mxu0 0.0
        %961 = vmatpush1.xpose.msra.mxu0 0.0
        %962 = vmatprep.subr.mxu0 0.0
        %963 = vmatpush1.xpose.msra.mxu0 0.0
        %964 = vmatprep.subr.mxu0 0.0
        %965 = vmatpush1.xpose.msra.mxu0 0.0
        %966 = vmatprep.subr.mxu0 0.0
        %967 = vmatpush1.xpose.msra.mxu0 0.0
        %968 = vmatprep.subr.mxu0 0.0
        %969 = vmatpush1.xpose.msra.mxu0 0.0
        %970 = vmatprep.subr.mxu0 0.0
        %971 = vmatpush1.xpose.msra.mxu0 0.0
        %972 = vmatprep.subr.mxu0 0.0
        %973 = vmatpush1.xpose.msra.mxu0 0.0
        %974 = vmatprep.subr.mxu0 0.0
        %975 = vmatpush1.xpose.msra.mxu0 0.0
        %976 = vmatprep.subr.mxu0 0.0
        %977 = vmatpush1.xpose.msra.mxu0 0.0
        %978 = vmatprep.subr.mxu0 0.0
        %979 = vmatpush1.xpose.msra.mxu0 0.0
        %980 = vmatprep.subr.mxu0 0.0
        %981 = vmatpush1.xpose.msra.mxu0 0.0
        %982 = vmatprep.subr.mxu0 0.0
        %983 = vmatpush1.xpose.msra.mxu0 0.0
        %984 = vmatprep.subr.mxu0 0.0
        %985 = vmatpush1.xpose.msra.mxu0 0.0
        %986 = vmatprep.subr.mxu0 0.0
        %987 = vmatpush1.xpose.msra.mxu0 0.0
        %988 = vmatprep.subr.mxu0 0.0
        %989 = vmatpush1.xpose.msra.mxu0 0.0
        %990 = vmatprep.subr.mxu0 0.0
        %991 = vmatpush1.xpose.msra.mxu0 0.0
        %992 = vmatprep.subr.mxu0 0.0
        %993 = vmatpush1.xpose.msra.mxu0 0.0
        %994 = vmatprep.subr.mxu0 0.0
        %995 = vmatpush1.xpose.msra.mxu0 0.0
        %996 = vmatprep.subr.mxu0 0.0
        %997 = vmatpush1.xpose.msra.mxu0 0.0
        %998 = vmatprep.subr.mxu0 0.0
        %999 = vmatpush1.xpose.msra.mxu0 0.0
        %1000 = vmatprep.subr.mxu0 0.0
        %1001 = vmatpush1.xpose.msra.mxu0 0.0
        %1002 = vmatprep.subr.mxu0 0.0
        %1003 = vmatpush1.xpose.msra.mxu0 0.0
        %1004 = vmatprep.subr.mxu0 0.0
        %1005 = vmatpush1.xpose.msra.mxu0 0.0
        %1006 = vmatprep.subr.mxu0 0.0
        %1007 = vmatpush1.xpose.msra.mxu0 0.0
        %1008 = vmatprep.subr.mxu0 0.0
        %1009 = vmatpush1.xpose.msra.mxu0 0.0
        %1010 = vmatprep.subr.mxu0 0.0
        %1011 = vmatpush1.xpose.msra.mxu0 0.0
        %1012 = vmatprep.subr.mxu0 0.0
        %1013 = vmatpush1.xpose.msra.mxu0 0.0
        %1014 = vmatprep.mubr.f32.mxu0 0.0
        %1015 = vmatmul.mubr.f32.gmra.mrb[0].mxu0 %v946
        %v1016 = vpop.f32.mrb[0].mxu0
        %v1017 = vadd.f32 0.0, %v1016
        %v1018 = vpop.f32.mrb[0].mxu0
        %1019 = vdwg.mxu0
        %1020 = vrot.lane.b32.xlu0 %v272, 120
        %v1021 = vpop.permute.xlu0 %1020
        %1022 = vrot.lane.b32.xlu0 %v272, 88
        %v1023 = vpop.permute.xlu0 %1022
        %v1024 = vsel %vm288, %v1021, 0
        %v1026 = vsel %vm288, %v1023, 0
        %1028 = vmatprep.subr.mxu0 0.0
        %1029 = vmatpush1.xpose.msra.mxu0 %v1026
        %1030 = vmatprep.subr.mxu0 0.0
        %1031 = vmatpush1.xpose.msra.mxu0 0.0
        %1032 = vmatprep.subr.mxu0 0.0
        %1033 = vmatpush1.xpose.msra.mxu0 0.0
        %1034 = vmatprep.subr.mxu0 0.0
        %1035 = vmatpush1.xpose.msra.mxu0 0.0
        %1036 = vmatprep.subr.mxu0 0.0
        %1037 = vmatpush1.xpose.msra.mxu0 0.0
        %1038 = vmatprep.subr.mxu0 0.0
        %1039 = vmatpush1.xpose.msra.mxu0 0.0
        %1040 = vmatprep.subr.mxu0 0.0
        %1041 = vmatpush1.xpose.msra.mxu0 0.0
        %1042 = vmatprep.subr.mxu0 0.0
        %1043 = vmatpush1.xpose.msra.mxu0 0.0
        %1044 = vmatprep.subr.mxu0 0.0
        %1045 = vmatpush1.xpose.msra.mxu0 0.0
        %1046 = vmatprep.subr.mxu0 0.0
        %1047 = vmatpush1.xpose.msra.mxu0 0.0
        %1048 = vmatprep.subr.mxu0 0.0
        %1049 = vmatpush1.xpose.msra.mxu0 0.0
        %1050 = vmatprep.subr.mxu0 0.0
        %1051 = vmatpush1.xpose.msra.mxu0 0.0
        %1052 = vmatprep.subr.mxu0 0.0
        %1053 = vmatpush1.xpose.msra.mxu0 0.0
        %1054 = vmatprep.subr.mxu0 0.0
        %1055 = vmatpush1.xpose.msra.mxu0 0.0
        %1056 = vmatprep.subr.mxu0 0.0
        %1057 = vmatpush1.xpose.msra.mxu0 0.0
        %1058 = vmatprep.subr.mxu0 0.0
        %1059 = vmatpush1.xpose.msra.mxu0 0.0
        %1060 = vmatprep.subr.mxu0 0.0
        %1061 = vmatpush1.xpose.msra.mxu0 0.0
        %1062 = vmatprep.subr.mxu0 0.0
        %1063 = vmatpush1.xpose.msra.mxu0 0.0
        %1064 = vmatprep.subr.mxu0 0.0
        %1065 = vmatpush1.xpose.msra.mxu0 0.0
        %1066 = vmatprep.subr.mxu0 0.0
        %1067 = vmatpush1.xpose.msra.mxu0 0.0
        %1068 = vmatprep.subr.mxu0 0.0
        %1069 = vmatpush1.xpose.msra.mxu0 0.0
        %1070 = vmatprep.subr.mxu0 0.0
        %1071 = vmatpush1.xpose.msra.mxu0 0.0
        %1072 = vmatprep.subr.mxu0 0.0
        %1073 = vmatpush1.xpose.msra.mxu0 0.0
        %1074 = vmatprep.subr.mxu0 0.0
        %1075 = vmatpush1.xpose.msra.mxu0 0.0
        %1076 = vmatprep.subr.mxu0 0.0
        %1077 = vmatpush1.xpose.msra.mxu0 0.0
        %1078 = vmatprep.subr.mxu0 0.0
        %1079 = vmatpush1.xpose.msra.mxu0 0.0
        %1080 = vmatprep.subr.mxu0 0.0
        %1081 = vmatpush1.xpose.msra.mxu0 0.0
        %1082 = vmatprep.subr.mxu0 0.0
        %1083 = vmatpush1.xpose.msra.mxu0 0.0
        %1084 = vmatprep.subr.mxu0 0.0
        %1085 = vmatpush1.xpose.msra.mxu0 0.0
        %1086 = vmatprep.subr.mxu0 0.0
        %1087 = vmatpush1.xpose.msra.mxu0 0.0
        %1088 = vmatprep.subr.mxu0 0.0
        %1089 = vmatpush1.xpose.msra.mxu0 0.0
        %1090 = vmatprep.subr.mxu0 0.0
        %1091 = vmatpush1.xpose.msra.mxu0 0.0
        %1092 = vmatprep.mubr.f32.mxu0 0.0
        %1093 = vmatmul.mubr.f32.gmra.mrb[0].mxu0 %v1024
        %v1094 = vpop.f32.mrb[0].mxu0
        %v1095 = vadd.f32 0.0, %v1094
        %v1096 = vpop.f32.mrb[0].mxu0
        %1097 = vdwg.mxu0
        %1098 = vrot.lane.b32.xlu0 %v277, 120
        %v1099 = vpop.permute.xlu0 %1098
        %1100 = vrot.lane.b32.xlu0 %v277, 88
        %v1101 = vpop.permute.xlu0 %1100
        %v1102 = vsel %vm288, %v1099, 0
        %v1104 = vsel %vm288, %v1101, 0
        %1106 = vmatprep.subr.mxu0 0.0
        %1107 = vmatpush1.xpose.msra.mxu0 %v1104
        %1108 = vmatprep.subr.mxu0 0.0
        %1109 = vmatpush1.xpose.msra.mxu0 0.0
        %1110 = vmatprep.subr.mxu0 0.0
        %1111 = vmatpush1.xpose.msra.mxu0 0.0
        %1112 = vmatprep.subr.mxu0 0.0
        %1113 = vmatpush1.xpose.msra.mxu0 0.0
        %1114 = vmatprep.subr.mxu0 0.0
        %1115 = vmatpush1.xpose.msra.mxu0 0.0
        %1116 = vmatprep.subr.mxu0 0.0
        %1117 = vmatpush1.xpose.msra.mxu0 0.0
        %1118 = vmatprep.subr.mxu0 0.0
        %1119 = vmatpush1.xpose.msra.mxu0 0.0
        %1120 = vmatprep.subr.mxu0 0.0
        %1121 = vmatpush1.xpose.msra.mxu0 0.0
        %1122 = vmatprep.subr.mxu0 0.0
        %1123 = vmatpush1.xpose.msra.mxu0 0.0
        %1124 = vmatprep.subr.mxu0 0.0
        %1125 = vmatpush1.xpose.msra.mxu0 0.0
        %1126 = vmatprep.subr.mxu0 0.0
        %1127 = vmatpush1.xpose.msra.mxu0 0.0
        %1128 = vmatprep.subr.mxu0 0.0
        %1129 = vmatpush1.xpose.msra.mxu0 0.0
        %1130 = vmatprep.subr.mxu0 0.0
        %1131 = vmatpush1.xpose.msra.mxu0 0.0
        %1132 = vmatprep.subr.mxu0 0.0
        %1133 = vmatpush1.xpose.msra.mxu0 0.0
        %1134 = vmatprep.subr.mxu0 0.0
        %1135 = vmatpush1.xpose.msra.mxu0 0.0
        %1136 = vmatprep.subr.mxu0 0.0
        %1137 = vmatpush1.xpose.msra.mxu0 0.0
        %1138 = vmatprep.subr.mxu0 0.0
        %1139 = vmatpush1.xpose.msra.mxu0 0.0
        %1140 = vmatprep.subr.mxu0 0.0
        %1141 = vmatpush1.xpose.msra.mxu0 0.0
        %1142 = vmatprep.subr.mxu0 0.0
        %1143 = vmatpush1.xpose.msra.mxu0 0.0
        %1144 = vmatprep.subr.mxu0 0.0
        %1145 = vmatpush1.xpose.msra.mxu0 0.0
        %1146 = vmatprep.subr.mxu0 0.0
        %1147 = vmatpush1.xpose.msra.mxu0 0.0
        %1148 = vmatprep.subr.mxu0 0.0
        %1149 = vmatpush1.xpose.msra.mxu0 0.0
        %1150 = vmatprep.subr.mxu0 0.0
        %1151 = vmatpush1.xpose.msra.mxu0 0.0
        %1152 = vmatprep.subr.mxu0 0.0
        %1153 = vmatpush1.xpose.msra.mxu0 0.0
        %1154 = vmatprep.subr.mxu0 0.0
        %1155 = vmatpush1.xpose.msra.mxu0 0.0
        %1156 = vmatprep.subr.mxu0 0.0
        %1157 = vmatpush1.xpose.msra.mxu0 0.0
        %1158 = vmatprep.subr.mxu0 0.0
        %1159 = vmatpush1.xpose.msra.mxu0 0.0
        %1160 = vmatprep.subr.mxu0 0.0
        %1161 = vmatpush1.xpose.msra.mxu0 0.0
        %1162 = vmatprep.subr.mxu0 0.0
        %1163 = vmatpush1.xpose.msra.mxu0 0.0
        %1164 = vmatprep.subr.mxu0 0.0
        %1165 = vmatpush1.xpose.msra.mxu0 0.0
        %1166 = vmatprep.subr.mxu0 0.0
        %1167 = vmatpush1.xpose.msra.mxu0 0.0
        %1168 = vmatprep.subr.mxu0 0.0
        %1169 = vmatpush1.xpose.msra.mxu0 0.0
        %1170 = vmatprep.mubr.f32.mxu0 0.0
        %1171 = vmatmul.mubr.f32.gmra.mrb[0].mxu0 %v1102
        %v1172 = vpop.f32.mrb[0].mxu0
        %v1173 = vadd.f32 0.0, %v1172
        %v1174 = vpop.f32.mrb[0].mxu0
        %1175 = vdwg.mxu0
        %1176 = vrot.lane.b32.xlu0 %v282, 120
        %v1177 = vpop.permute.xlu0 %1176
        %1178 = vrot.lane.b32.xlu0 %v282, 88
        %v1179 = vpop.permute.xlu0 %1178
        %v1180 = vsel %vm288, %v1177, 0
        %v1182 = vsel %vm288, %v1179, 0
        %1184 = vmatprep.subr.mxu0 0.0
        %1185 = vmatpush1.xpose.msra.mxu0 %v1182
        %1186 = vmatprep.subr.mxu0 0.0
        %1187 = vmatpush1.xpose.msra.mxu0 0.0
        %1188 = vmatprep.subr.mxu0 0.0
        %1189 = vmatpush1.xpose.msra.mxu0 0.0
        %1190 = vmatprep.subr.mxu0 0.0
        %1191 = vmatpush1.xpose.msra.mxu0 0.0
        %1192 = vmatprep.subr.mxu0 0.0
        %1193 = vmatpush1.xpose.msra.mxu0 0.0
        %1194 = vmatprep.subr.mxu0 0.0
        %1195 = vmatpush1.xpose.msra.mxu0 0.0
        %1196 = vmatprep.subr.mxu0 0.0
        %1197 = vmatpush1.xpose.msra.mxu0 0.0
        %1198 = vmatprep.subr.mxu0 0.0
        %1199 = vmatpush1.xpose.msra.mxu0 0.0
        %1200 = vmatprep.subr.mxu0 0.0
        %1201 = vmatpush1.xpose.msra.mxu0 0.0
        %1202 = vmatprep.subr.mxu0 0.0
        %1203 = vmatpush1.xpose.msra.mxu0 0.0
        %1204 = vmatprep.subr.mxu0 0.0
        %1205 = vmatpush1.xpose.msra.mxu0 0.0
        %1206 = vmatprep.subr.mxu0 0.0
        %1207 = vmatpush1.xpose.msra.mxu0 0.0
        %1208 = vmatprep.subr.mxu0 0.0
        %1209 = vmatpush1.xpose.msra.mxu0 0.0
        %1210 = vmatprep.subr.mxu0 0.0
        %1211 = vmatpush1.xpose.msra.mxu0 0.0
        %1212 = vmatprep.subr.mxu0 0.0
        %1213 = vmatpush1.xpose.msra.mxu0 0.0
        %1214 = vmatprep.subr.mxu0 0.0
        %1215 = vmatpush1.xpose.msra.mxu0 0.0
        %1216 = vmatprep.subr.mxu0 0.0
        %1217 = vmatpush1.xpose.msra.mxu0 0.0
        %1218 = vmatprep.subr.mxu0 0.0
        %1219 = vmatpush1.xpose.msra.mxu0 0.0
        %1220 = vmatprep.subr.mxu0 0.0
        %1221 = vmatpush1.xpose.msra.mxu0 0.0
        %1222 = vmatprep.subr.mxu0 0.0
        %1223 = vmatpush1.xpose.msra.mxu0 0.0
        %1224 = vmatprep.subr.mxu0 0.0
        %1225 = vmatpush1.xpose.msra.mxu0 0.0
        %1226 = vmatprep.subr.mxu0 0.0
        %1227 = vmatpush1.xpose.msra.mxu0 0.0
        %1228 = vmatprep.subr.mxu0 0.0
        %1229 = vmatpush1.xpose.msra.mxu0 0.0
        %1230 = vmatprep.subr.mxu0 0.0
        %1231 = vmatpush1.xpose.msra.mxu0 0.0
        %1232 = vmatprep.subr.mxu0 0.0
        %1233 = vmatpush1.xpose.msra.mxu0 0.0
        %1234 = vmatprep.subr.mxu0 0.0
        %1235 = vmatpush1.xpose.msra.mxu0 0.0
        %1236 = vmatprep.subr.mxu0 0.0
        %1237 = vmatpush1.xpose.msra.mxu0 0.0
        %1238 = vmatprep.subr.mxu0 0.0
        %1239 = vmatpush1.xpose.msra.mxu0 0.0
        %1240 = vmatprep.subr.mxu0 0.0
        %1241 = vmatpush1.xpose.msra.mxu0 0.0
        %1242 = vmatprep.subr.mxu0 0.0
        %1243 = vmatpush1.xpose.msra.mxu0 0.0
        %1244 = vmatprep.subr.mxu0 0.0
        %1245 = vmatpush1.xpose.msra.mxu0 0.0
        %1246 = vmatprep.subr.mxu0 0.0
        %1247 = vmatpush1.xpose.msra.mxu0 0.0
        %1248 = vmatprep.mubr.f32.mxu0 0.0
        %1249 = vmatmul.mubr.f32.gmra.mrb[0].mxu0 %v1180
        %v1250 = vpop.f32.mrb[0].mxu0
        %v1251 = vadd.f32 0.0, %v1250
        %v1252 = vpop.f32.mrb[0].mxu0
        %1253 = vdwg.mxu0
        %v1254 = vsel %vm288, %v1017, -inf
        %1255 = vmax.xlane.f32.xlu0 %v1254
        %v1256 = vpop.xlane.xlu0 %1255
        %v1257 = vsel %vm288, %v1095, -inf
        %1258 = vmax.xlane.f32.xlu0 %v1257
        %v1259 = vpop.xlane.xlu0 %1258
        %v1260 = vsel %vm288, %v1173, -inf
        %1261 = vmax.xlane.f32.xlu0 %v1260
        %v1262 = vpop.xlane.xlu0 %1261
        %v1263 = vsel %vm288, %v1251, -inf
        %1264 = vmax.xlane.f32.xlu0 %v1263
        %v1265 = vpop.xlane.xlu0 %1264
        %v1266 = vsub.f32 %v1017, %v1256
        %v1267 = vsub.f32 %v1095, %v1259
        %v1268 = vsub.f32 %v1173, %v1262
        %v1269 = vsub.f32 %v1251, %v1265
        %v1270 = vmul.f32 %v1266, 1.442695
        %v1271 = vpow.pop %v1270
        %v1272 = vmul.f32 %v1267, 1.442695
        %v1273 = vpow.pop %v1272
        %v1274 = vmul.f32 %v1268, 1.442695
        %v1275 = vpow.pop %v1274
        %v1276 = vmul.f32 %v1269, 1.442695
        %v1277 = vpow.pop %v1276
        %v1278 = vsel %vm288, %v1271, 0.0
        %1279 = vadd.xlane.f32.xlu0 %v1278
        %v1280 = vpop.xlane.xlu0 %1279
        %v1281 = vsel %vm288, %v1273, 0.0
        %1282 = vadd.xlane.f32.xlu0 %v1281
        %v1283 = vpop.xlane.xlu0 %1282
        %v1284 = vsel %vm288, %v1275, 0.0
        %1285 = vadd.xlane.f32.xlu0 %v1284
        %v1286 = vpop.xlane.xlu0 %1285
        %v1287 = vsel %vm288, %v1277, 0.0
        %1288 = vadd.xlane.f32.xlu0 %v1287
        %v1289 = vpop.xlane.xlu0 %1288
        %v1290 = vrcp.pop %v1280
        %v1291 = vrcp.pop %v1283
        %v1292 = vrcp.pop %v1286
        %v1293 = vrcp.pop %v1289
        %1294 = vrot.lane.b32.xlu0 %v267, 56
        %v1295 = vpop.permute.xlu0 %1294
        %v1298 = vsel %vm288, %v1271, 0
        %1300 = vmatprep.subr.mxu0 0.0
        %1301 = vmatpush1.msra.mxu0 %v1295
        %1302 = vmatprep.subr.mxu0 0.0
        %1303 = vmatpush1.msra.mxu0 0.0
        %1304 = vmatprep.subr.mxu0 0.0
        %1305 = vmatpush1.msra.mxu0 0.0
        %1306 = vmatprep.subr.mxu0 0.0
        %1307 = vmatpush1.msra.mxu0 0.0
        %1308 = vmatprep.subr.mxu0 0.0
        %1309 = vmatpush1.msra.mxu0 0.0
        %1310 = vmatprep.subr.mxu0 0.0
        %1311 = vmatpush1.msra.mxu0 0.0
        %1312 = vmatprep.subr.mxu0 0.0
        %1313 = vmatpush1.msra.mxu0 0.0
        %1314 = vmatprep.subr.mxu0 0.0
        %1315 = vmatpush1.msra.mxu0 0.0
        %1316 = vmatprep.subr.mxu0 0.0
        %1317 = vmatpush1.msra.mxu0 0.0
        %1318 = vmatprep.subr.mxu0 0.0
        %1319 = vmatpush1.msra.mxu0 0.0
        %1320 = vmatprep.subr.mxu0 0.0
        %1321 = vmatpush1.msra.mxu0 0.0
        %1322 = vmatprep.subr.mxu0 0.0
        %1323 = vmatpush1.msra.mxu0 0.0
        %1324 = vmatprep.subr.mxu0 0.0
        %1325 = vmatpush1.msra.mxu0 0.0
        %1326 = vmatprep.subr.mxu0 0.0
        %1327 = vmatpush1.msra.mxu0 0.0
        %1328 = vmatprep.subr.mxu0 0.0
        %1329 = vmatpush1.msra.mxu0 0.0
        %1330 = vmatprep.subr.mxu0 0.0
        %1331 = vmatpush1.msra.mxu0 0.0
        %1332 = vmatprep.subr.mxu0 0.0
        %1333 = vmatpush1.msra.mxu0 0.0
        %1334 = vmatprep.subr.mxu0 0.0
        %1335 = vmatpush1.msra.mxu0 0.0
        %1336 = vmatprep.subr.mxu0 0.0
        %1337 = vmatpush1.msra.mxu0 0.0
        %1338 = vmatprep.subr.mxu0 0.0
        %1339 = vmatpush1.msra.mxu0 0.0
        %1340 = vmatprep.subr.mxu0 0.0
        %1341 = vmatpush1.msra.mxu0 0.0
        %1342 = vmatprep.subr.mxu0 0.0
        %1343 = vmatpush1.msra.mxu0 0.0
        %1344 = vmatprep.subr.mxu0 0.0
        %1345 = vmatpush1.msra.mxu0 0.0
        %1346 = vmatprep.subr.mxu0 0.0
        %1347 = vmatpush1.msra.mxu0 0.0
        %1348 = vmatprep.subr.mxu0 0.0
        %1349 = vmatpush1.msra.mxu0 0.0
        %1350 = vmatprep.subr.mxu0 0.0
        %1351 = vmatpush1.msra.mxu0 0.0
        %1352 = vmatprep.subr.mxu0 0.0
        %1353 = vmatpush1.msra.mxu0 0.0
        %1354 = vmatprep.subr.mxu0 0.0
        %1355 = vmatpush1.msra.mxu0 0.0
        %1356 = vmatprep.subr.mxu0 0.0
        %1357 = vmatpush1.msra.mxu0 0.0
        %1358 = vmatprep.subr.mxu0 0.0
        %1359 = vmatpush1.msra.mxu0 0.0
        %1360 = vmatprep.subr.mxu0 0.0
        %1361 = vmatpush1.msra.mxu0 0.0
        %1362 = vmatprep.subr.mxu0 0.0
        %1363 = vmatpush1.msra.mxu0 0.0
        %1364 = vmatprep.mubr.f32.mxu0 0.0
        %1365 = vmatmul.mubr.f32.gmra.mrb[0].mxu0 %v1298
        %v1366 = vpop.f32.mrb[0].mxu0
        %v1367 = vadd.f32 0.0, %v1366
        %v1368 = vpop.f32.mrb[0].mxu0
        %1369 = vdwg.mxu0
        %1370 = vrot.lane.b32.xlu0 %v272, 56
        %v1371 = vpop.permute.xlu0 %1370
        %v1374 = vsel %vm288, %v1273, 0
        %1376 = vmatprep.subr.mxu0 0.0
        %1377 = vmatpush1.msra.mxu0 %v1371
        %1378 = vmatprep.subr.mxu0 0.0
        %1379 = vmatpush1.msra.mxu0 0.0
        %1380 = vmatprep.subr.mxu0 0.0
        %1381 = vmatpush1.msra.mxu0 0.0
        %1382 = vmatprep.subr.mxu0 0.0
        %1383 = vmatpush1.msra.mxu0 0.0
        %1384 = vmatprep.subr.mxu0 0.0
        %1385 = vmatpush1.msra.mxu0 0.0
        %1386 = vmatprep.subr.mxu0 0.0
        %1387 = vmatpush1.msra.mxu0 0.0
        %1388 = vmatprep.subr.mxu0 0.0
        %1389 = vmatpush1.msra.mxu0 0.0
        %1390 = vmatprep.subr.mxu0 0.0
        %1391 = vmatpush1.msra.mxu0 0.0
        %1392 = vmatprep.subr.mxu0 0.0
        %1393 = vmatpush1.msra.mxu0 0.0
        %1394 = vmatprep.subr.mxu0 0.0
        %1395 = vmatpush1.msra.mxu0 0.0
        %1396 = vmatprep.subr.mxu0 0.0
        %1397 = vmatpush1.msra.mxu0 0.0
        %1398 = vmatprep.subr.mxu0 0.0
        %1399 = vmatpush1.msra.mxu0 0.0
        %1400 = vmatprep.subr.mxu0 0.0
        %1401 = vmatpush1.msra.mxu0 0.0
        %1402 = vmatprep.subr.mxu0 0.0
        %1403 = vmatpush1.msra.mxu0 0.0
        %1404 = vmatprep.subr.mxu0 0.0
        %1405 = vmatpush1.msra.mxu0 0.0
        %1406 = vmatprep.subr.mxu0 0.0
        %1407 = vmatpush1.msra.mxu0 0.0
        %1408 = vmatprep.subr.mxu0 0.0
        %1409 = vmatpush1.msra.mxu0 0.0
        %1410 = vmatprep.subr.mxu0 0.0
        %1411 = vmatpush1.msra.mxu0 0.0
        %1412 = vmatprep.subr.mxu0 0.0
        %1413 = vmatpush1.msra.mxu0 0.0
        %1414 = vmatprep.subr.mxu0 0.0
        %1415 = vmatpush1.msra.mxu0 0.0
        %1416 = vmatprep.subr.mxu0 0.0
        %1417 = vmatpush1.msra.mxu0 0.0
        %1418 = vmatprep.subr.mxu0 0.0
        %1419 = vmatpush1.msra.mxu0 0.0
        %1420 = vmatprep.subr.mxu0 0.0
        %1421 = vmatpush1.msra.mxu0 0.0
        %1422 = vmatprep.subr.mxu0 0.0
        %1423 = vmatpush1.msra.mxu0 0.0
        %1424 = vmatprep.subr.mxu0 0.0
        %1425 = vmatpush1.msra.mxu0 0.0
        %1426 = vmatprep.subr.mxu0 0.0
        %1427 = vmatpush1.msra.mxu0 0.0
        %1428 = vmatprep.subr.mxu0 0.0
        %1429 = vmatpush1.msra.mxu0 0.0
        %1430 = vmatprep.subr.mxu0 0.0
        %1431 = vmatpush1.msra.mxu0 0.0
        %1432 = vmatprep.subr.mxu0 0.0
        %1433 = vmatpush1.msra.mxu0 0.0
        %1434 = vmatprep.subr.mxu0 0.0
        %1435 = vmatpush1.msra.mxu0 0.0
        %1436 = vmatprep.subr.mxu0 0.0
        %1437 = vmatpush1.msra.mxu0 0.0
        %1438 = vmatprep.subr.mxu0 0.0
        %1439 = vmatpush1.msra.mxu0 0.0
        %1440 = vmatprep.mubr.f32.mxu0 0.0
        %1441 = vmatmul.mubr.f32.gmra.mrb[0].mxu0 %v1374
        %v1442 = vpop.f32.mrb[0].mxu0
        %v1443 = vadd.f32 0.0, %v1442
        %v1444 = vpop.f32.mrb[0].mxu0
        %1445 = vdwg.mxu0
        %1446 = vrot.lane.b32.xlu0 %v277, 56
        %v1447 = vpop.permute.xlu0 %1446
        %v1450 = vsel %vm288, %v1275, 0
        %1452 = vmatprep.subr.mxu0 0.0
        %1453 = vmatpush1.msra.mxu0 %v1447
        %1454 = vmatprep.subr.mxu0 0.0
        %1455 = vmatpush1.msra.mxu0 0.0
        %1456 = vmatprep.subr.mxu0 0.0
        %1457 = vmatpush1.msra.mxu0 0.0
        %1458 = vmatprep.subr.mxu0 0.0
        %1459 = vmatpush1.msra.mxu0 0.0
        %1460 = vmatprep.subr.mxu0 0.0
        %1461 = vmatpush1.msra.mxu0 0.0
        %1462 = vmatprep.subr.mxu0 0.0
        %1463 = vmatpush1.msra.mxu0 0.0
        %1464 = vmatprep.subr.mxu0 0.0
        %1465 = vmatpush1.msra.mxu0 0.0
        %1466 = vmatprep.subr.mxu0 0.0
        %1467 = vmatpush1.msra.mxu0 0.0
        %1468 = vmatprep.subr.mxu0 0.0
        %1469 = vmatpush1.msra.mxu0 0.0
        %1470 = vmatprep.subr.mxu0 0.0
        %1471 = vmatpush1.msra.mxu0 0.0
        %1472 = vmatprep.subr.mxu0 0.0
        %1473 = vmatpush1.msra.mxu0 0.0
        %1474 = vmatprep.subr.mxu0 0.0
        %1475 = vmatpush1.msra.mxu0 0.0
        %1476 = vmatprep.subr.mxu0 0.0
        %1477 = vmatpush1.msra.mxu0 0.0
        %1478 = vmatprep.subr.mxu0 0.0
        %1479 = vmatpush1.msra.mxu0 0.0
        %1480 = vmatprep.subr.mxu0 0.0
        %1481 = vmatpush1.msra.mxu0 0.0
        %1482 = vmatprep.subr.mxu0 0.0
        %1483 = vmatpush1.msra.mxu0 0.0
        %1484 = vmatprep.subr.mxu0 0.0
        %1485 = vmatpush1.msra.mxu0 0.0
        %1486 = vmatprep.subr.mxu0 0.0
        %1487 = vmatpush1.msra.mxu0 0.0
        %1488 = vmatprep.subr.mxu0 0.0
        %1489 = vmatpush1.msra.mxu0 0.0
        %1490 = vmatprep.subr.mxu0 0.0
        %1491 = vmatpush1.msra.mxu0 0.0
        %1492 = vmatprep.subr.mxu0 0.0
        %1493 = vmatpush1.msra.mxu0 0.0
        %1494 = vmatprep.subr.mxu0 0.0
        %1495 = vmatpush1.msra.mxu0 0.0
        %1496 = vmatprep.subr.mxu0 0.0
        %1497 = vmatpush1.msra.mxu0 0.0
        %1498 = vmatprep.subr.mxu0 0.0
        %1499 = vmatpush1.msra.mxu0 0.0
        %1500 = vmatprep.subr.mxu0 0.0
        %1501 = vmatpush1.msra.mxu0 0.0
        %1502 = vmatprep.subr.mxu0 0.0
        %1503 = vmatpush1.msra.mxu0 0.0
        %1504 = vmatprep.subr.mxu0 0.0
        %1505 = vmatpush1.msra.mxu0 0.0
        %1506 = vmatprep.subr.mxu0 0.0
        %1507 = vmatpush1.msra.mxu0 0.0
        %1508 = vmatprep.subr.mxu0 0.0
        %1509 = vmatpush1.msra.mxu0 0.0
        %1510 = vmatprep.subr.mxu0 0.0
        %1511 = vmatpush1.msra.mxu0 0.0
        %1512 = vmatprep.subr.mxu0 0.0
        %1513 = vmatpush1.msra.mxu0 0.0
        %1514 = vmatprep.subr.mxu0 0.0
        %1515 = vmatpush1.msra.mxu0 0.0
        %1516 = vmatprep.mubr.f32.mxu0 0.0
        %1517 = vmatmul.mubr.f32.gmra.mrb[0].mxu0 %v1450
        %v1518 = vpop.f32.mrb[0].mxu0
        %v1519 = vadd.f32 0.0, %v1518
        %v1520 = vpop.f32.mrb[0].mxu0
        %1521 = vdwg.mxu0
        %1522 = vrot.lane.b32.xlu0 %v282, 56
        %v1523 = vpop.permute.xlu0 %1522
        %v1526 = vsel %vm288, %v1277, 0
        %1528 = vmatprep.subr.mxu0 0.0
        %1529 = vmatpush1.msra.mxu0 %v1523
        %1530 = vmatprep.subr.mxu0 0.0
        %1531 = vmatpush1.msra.mxu0 0.0
        %1532 = vmatprep.subr.mxu0 0.0
        %1533 = vmatpush1.msra.mxu0 0.0
        %1534 = vmatprep.subr.mxu0 0.0
        %1535 = vmatpush1.msra.mxu0 0.0
        %1536 = vmatprep.subr.mxu0 0.0
        %1537 = vmatpush1.msra.mxu0 0.0
        %1538 = vmatprep.subr.mxu0 0.0
        %1539 = vmatpush1.msra.mxu0 0.0
        %1540 = vmatprep.subr.mxu0 0.0
        %1541 = vmatpush1.msra.mxu0 0.0
        %1542 = vmatprep.subr.mxu0 0.0
        %1543 = vmatpush1.msra.mxu0 0.0
        %1544 = vmatprep.subr.mxu0 0.0
        %1545 = vmatpush1.msra.mxu0 0.0
        %1546 = vmatprep.subr.mxu0 0.0
        %1547 = vmatpush1.msra.mxu0 0.0
        %1548 = vmatprep.subr.mxu0 0.0
        %1549 = vmatpush1.msra.mxu0 0.0
        %1550 = vmatprep.subr.mxu0 0.0
        %1551 = vmatpush1.msra.mxu0 0.0
        %1552 = vmatprep.subr.mxu0 0.0
        %1553 = vmatpush1.msra.mxu0 0.0
        %1554 = vmatprep.subr.mxu0 0.0
        %1555 = vmatpush1.msra.mxu0 0.0
        %1556 = vmatprep.subr.mxu0 0.0
        %1557 = vmatpush1.msra.mxu0 0.0
        %1558 = vmatprep.subr.mxu0 0.0
        %1559 = vmatpush1.msra.mxu0 0.0
        %1560 = vmatprep.subr.mxu0 0.0
        %1561 = vmatpush1.msra.mxu0 0.0
        %1562 = vmatprep.subr.mxu0 0.0
        %1563 = vmatpush1.msra.mxu0 0.0
        %1564 = vmatprep.subr.mxu0 0.0
        %1565 = vmatpush1.msra.mxu0 0.0
        %1566 = vmatprep.subr.mxu0 0.0
        %1567 = vmatpush1.msra.mxu0 0.0
        %1568 = vmatprep.subr.mxu0 0.0
        %1569 = vmatpush1.msra.mxu0 0.0
        %1570 = vmatprep.subr.mxu0 0.0
        %1571 = vmatpush1.msra.mxu0 0.0
        %1572 = vmatprep.subr.mxu0 0.0
        %1573 = vmatpush1.msra.mxu0 0.0
        %1574 = vmatprep.subr.mxu0 0.0
        %1575 = vmatpush1.msra.mxu0 0.0
        %1576 = vmatprep.subr.mxu0 0.0
        %1577 = vmatpush1.msra.mxu0 0.0
        %1578 = vmatprep.subr.mxu0 0.0
        %1579 = vmatpush1.msra.mxu0 0.0
        %1580 = vmatprep.subr.mxu0 0.0
        %1581 = vmatpush1.msra.mxu0 0.0
        %1582 = vmatprep.subr.mxu0 0.0
        %1583 = vmatpush1.msra.mxu0 0.0
        %1584 = vmatprep.subr.mxu0 0.0
        %1585 = vmatpush1.msra.mxu0 0.0
        %1586 = vmatprep.subr.mxu0 0.0
        %1587 = vmatpush1.msra.mxu0 0.0
        %1588 = vmatprep.subr.mxu0 0.0
        %1589 = vmatpush1.msra.mxu0 0.0
        %1590 = vmatprep.subr.mxu0 0.0
        %1591 = vmatpush1.msra.mxu0 0.0
        %1592 = vmatprep.mubr.f32.mxu0 0.0
        %1593 = vmatmul.mubr.f32.gmra.mrb[0].mxu0 %v1526
        %v1594 = vpop.f32.mrb[0].mxu0
        %v1595 = vadd.f32 0.0, %v1594
        %v1596 = vpop.f32.mrb[0].mxu0
        %1597 = vdwg.mxu0
        %v1598 = vmul.f32 %v1367, %v1290
        %v1599 = vmul.f32 %v1443, %v1291
        %v1600 = vmul.f32 %v1519, %v1292
        %v1601 = vmul.f32 %v1595, %v1293
        %1602 = vrot.lane.b32.xlu0 %v267, 112
        %v1603 = vpop.permute.xlu0 %1602
        %1604 = vrot.lane.b32.xlu0 %v267, 80
        %v1605 = vpop.permute.xlu0 %1604
        %v1606 = vsel %vm288, %v1603, 0
        %v1608 = vsel %vm288, %v1605, 0
        %1610 = vmatprep.subr.mxu0 0.0
        %1611 = vmatpush1.xpose.msra.mxu0 %v1608
        %1612 = vmatprep.subr.mxu0 0.0
        %1613 = vmatpush1.xpose.msra.mxu0 0.0
        %1614 = vmatprep.subr.mxu0 0.0
        %1615 = vmatpush1.xpose.msra.mxu0 0.0
        %1616 = vmatprep.subr.mxu0 0.0
        %1617 = vmatpush1.xpose.msra.mxu0 0.0
        %1618 = vmatprep.subr.mxu0 0.0
        %1619 = vmatpush1.xpose.msra.mxu0 0.0
        %1620 = vmatprep.subr.mxu0 0.0
        %1621 = vmatpush1.xpose.msra.mxu0 0.0
        %1622 = vmatprep.subr.mxu0 0.0
        %1623 = vmatpush1.xpose.msra.mxu0 0.0
        %1624 = vmatprep.subr.mxu0 0.0
        %1625 = vmatpush1.xpose.msra.mxu0 0.0
        %1626 = vmatprep.subr.mxu0 0.0
        %1627 = vmatpush1.xpose.msra.mxu0 0.0
        %1628 = vmatprep.subr.mxu0 0.0
        %1629 = vmatpush1.xpose.msra.mxu0 0.0
        %1630 = vmatprep.subr.mxu0 0.0
        %1631 = vmatpush1.xpose.msra.mxu0 0.0
        %1632 = vmatprep.subr.mxu0 0.0
        %1633 = vmatpush1.xpose.msra.mxu0 0.0
        %1634 = vmatprep.subr.mxu0 0.0
        %1635 = vmatpush1.xpose.msra.mxu0 0.0
        %1636 = vmatprep.subr.mxu0 0.0
        %1637 = vmatpush1.xpose.msra.mxu0 0.0
        %1638 = vmatprep.subr.mxu0 0.0
        %1639 = vmatpush1.xpose.msra.mxu0 0.0
        %1640 = vmatprep.subr.mxu0 0.0
        %1641 = vmatpush1.xpose.msra.mxu0 0.0
        %1642 = vmatprep.subr.mxu0 0.0
        %1643 = vmatpush1.xpose.msra.mxu0 0.0
        %1644 = vmatprep.subr.mxu0 0.0
        %1645 = vmatpush1.xpose.msra.mxu0 0.0
        %1646 = vmatprep.subr.mxu0 0.0
        %1647 = vmatpush1.xpose.msra.mxu0 0.0
        %1648 = vmatprep.subr.mxu0 0.0
        %1649 = vmatpush1.xpose.msra.mxu0 0.0
        %1650 = vmatprep.subr.mxu0 0.0
        %1651 = vmatpush1.xpose.msra.mxu0 0.0
        %1652 = vmatprep.subr.mxu0 0.0
        %1653 = vmatpush1.xpose.msra.mxu0 0.0
        %1654 = vmatprep.subr.mxu0 0.0
        %1655 = vmatpush1.xpose.msra.mxu0 0.0
        %1656 = vmatprep.subr.mxu0 0.0
        %1657 = vmatpush1.xpose.msra.mxu0 0.0
        %1658 = vmatprep.subr.mxu0 0.0
        %1659 = vmatpush1.xpose.msra.mxu0 0.0
        %1660 = vmatprep.subr.mxu0 0.0
        %1661 = vmatpush1.xpose.msra.mxu0 0.0
        %1662 = vmatprep.subr.mxu0 0.0
        %1663 = vmatpush1.xpose.msra.mxu0 0.0
        %1664 = vmatprep.subr.mxu0 0.0
        %1665 = vmatpush1.xpose.msra.mxu0 0.0
        %1666 = vmatprep.subr.mxu0 0.0
        %1667 = vmatpush1.xpose.msra.mxu0 0.0
        %1668 = vmatprep.subr.mxu0 0.0
        %1669 = vmatpush1.xpose.msra.mxu0 0.0
        %1670 = vmatprep.subr.mxu0 0.0
        %1671 = vmatpush1.xpose.msra.mxu0 0.0
        %1672 = vmatprep.subr.mxu0 0.0
        %1673 = vmatpush1.xpose.msra.mxu0 0.0
        %1674 = vmatprep.mubr.f32.mxu0 0.0
        %1675 = vmatmul.mubr.f32.gmra.mrb[0].mxu0 %v1606
        %v1676 = vpop.f32.mrb[0].mxu0
        %v1677 = vadd.f32 0.0, %v1676
        %v1678 = vpop.f32.mrb[0].mxu0
        %1679 = vdwg.mxu0
        %1680 = vrot.lane.b32.xlu0 %v272, 112
        %v1681 = vpop.permute.xlu0 %1680
        %1682 = vrot.lane.b32.xlu0 %v272, 80
        %v1683 = vpop.permute.xlu0 %1682
        %v1684 = vsel %vm288, %v1681, 0
        %v1686 = vsel %vm288, %v1683, 0
        %1688 = vmatprep.subr.mxu0 0.0
        %1689 = vmatpush1.xpose.msra.mxu0 %v1686
        %1690 = vmatprep.subr.mxu0 0.0
        %1691 = vmatpush1.xpose.msra.mxu0 0.0
        %1692 = vmatprep.subr.mxu0 0.0
        %1693 = vmatpush1.xpose.msra.mxu0 0.0
        %1694 = vmatprep.subr.mxu0 0.0
        %1695 = vmatpush1.xpose.msra.mxu0 0.0
        %1696 = vmatprep.subr.mxu0 0.0
        %1697 = vmatpush1.xpose.msra.mxu0 0.0
        %1698 = vmatprep.subr.mxu0 0.0
        %1699 = vmatpush1.xpose.msra.mxu0 0.0
        %1700 = vmatprep.subr.mxu0 0.0
        %1701 = vmatpush1.xpose.msra.mxu0 0.0
        %1702 = vmatprep.subr.mxu0 0.0
        %1703 = vmatpush1.xpose.msra.mxu0 0.0
        %1704 = vmatprep.subr.mxu0 0.0
        %1705 = vmatpush1.xpose.msra.mxu0 0.0
        %1706 = vmatprep.subr.mxu0 0.0
        %1707 = vmatpush1.xpose.msra.mxu0 0.0
        %1708 = vmatprep.subr.mxu0 0.0
        %1709 = vmatpush1.xpose.msra.mxu0 0.0
        %1710 = vmatprep.subr.mxu0 0.0
        %1711 = vmatpush1.xpose.msra.mxu0 0.0
        %1712 = vmatprep.subr.mxu0 0.0
        %1713 = vmatpush1.xpose.msra.mxu0 0.0
        %1714 = vmatprep.subr.mxu0 0.0
        %1715 = vmatpush1.xpose.msra.mxu0 0.0
        %1716 = vmatprep.subr.mxu0 0.0
        %1717 = vmatpush1.xpose.msra.mxu0 0.0
        %1718 = vmatprep.subr.mxu0 0.0
        %1719 = vmatpush1.xpose.msra.mxu0 0.0
        %1720 = vmatprep.subr.mxu0 0.0
        %1721 = vmatpush1.xpose.msra.mxu0 0.0
        %1722 = vmatprep.subr.mxu0 0.0
        %1723 = vmatpush1.xpose.msra.mxu0 0.0
        %1724 = vmatprep.subr.mxu0 0.0
        %1725 = vmatpush1.xpose.msra.mxu0 0.0
        %1726 = vmatprep.subr.mxu0 0.0
        %1727 = vmatpush1.xpose.msra.mxu0 0.0
        %1728 = vmatprep.subr.mxu0 0.0
        %1729 = vmatpush1.xpose.msra.mxu0 0.0
        %1730 = vmatprep.subr.mxu0 0.0
        %1731 = vmatpush1.xpose.msra.mxu0 0.0
        %1732 = vmatprep.subr.mxu0 0.0
        %1733 = vmatpush1.xpose.msra.mxu0 0.0
        %1734 = vmatprep.subr.mxu0 0.0
        %1735 = vmatpush1.xpose.msra.mxu0 0.0
        %1736 = vmatprep.subr.mxu0 0.0
        %1737 = vmatpush1.xpose.msra.mxu0 0.0
        %1738 = vmatprep.subr.mxu0 0.0
        %1739 = vmatpush1.xpose.msra.mxu0 0.0
        %1740 = vmatprep.subr.mxu0 0.0
        %1741 = vmatpush1.xpose.msra.mxu0 0.0
        %1742 = vmatprep.subr.mxu0 0.0
        %1743 = vmatpush1.xpose.msra.mxu0 0.0
        %1744 = vmatprep.subr.mxu0 0.0
        %1745 = vmatpush1.xpose.msra.mxu0 0.0
        %1746 = vmatprep.subr.mxu0 0.0
        %1747 = vmatpush1.xpose.msra.mxu0 0.0
        %1748 = vmatprep.subr.mxu0 0.0
        %1749 = vmatpush1.xpose.msra.mxu0 0.0
        %1750 = vmatprep.subr.mxu0 0.0
        %1751 = vmatpush1.xpose.msra.mxu0 0.0
        %1752 = vmatprep.mubr.f32.mxu0 0.0
        %1753 = vmatmul.mubr.f32.gmra.mrb[0].mxu0 %v1684
        %v1754 = vpop.f32.mrb[0].mxu0
        %v1755 = vadd.f32 0.0, %v1754
        %v1756 = vpop.f32.mrb[0].mxu0
        %1757 = vdwg.mxu0
        %1758 = vrot.lane.b32.xlu0 %v277, 112
        %v1759 = vpop.permute.xlu0 %1758
        %1760 = vrot.lane.b32.xlu0 %v277, 80
        %v1761 = vpop.permute.xlu0 %1760
        %v1762 = vsel %vm288, %v1759, 0
        %v1764 = vsel %vm288, %v1761, 0
        %1766 = vmatprep.subr.mxu0 0.0
        %1767 = vmatpush1.xpose.msra.mxu0 %v1764
        %1768 = vmatprep.subr.mxu0 0.0
        %1769 = vmatpush1.xpose.msra.mxu0 0.0
        %1770 = vmatprep.subr.mxu0 0.0
        %1771 = vmatpush1.xpose.msra.mxu0 0.0
        %1772 = vmatprep.subr.mxu0 0.0
        %1773 = vmatpush1.xpose.msra.mxu0 0.0
        %1774 = vmatprep.subr.mxu0 0.0
        %1775 = vmatpush1.xpose.msra.mxu0 0.0
        %1776 = vmatprep.subr.mxu0 0.0
        %1777 = vmatpush1.xpose.msra.mxu0 0.0
        %1778 = vmatprep.subr.mxu0 0.0
        %1779 = vmatpush1.xpose.msra.mxu0 0.0
        %1780 = vmatprep.subr.mxu0 0.0
        %1781 = vmatpush1.xpose.msra.mxu0 0.0
        %1782 = vmatprep.subr.mxu0 0.0
        %1783 = vmatpush1.xpose.msra.mxu0 0.0
        %1784 = vmatprep.subr.mxu0 0.0
        %1785 = vmatpush1.xpose.msra.mxu0 0.0
        %1786 = vmatprep.subr.mxu0 0.0
        %1787 = vmatpush1.xpose.msra.mxu0 0.0
        %1788 = vmatprep.subr.mxu0 0.0
        %1789 = vmatpush1.xpose.msra.mxu0 0.0
        %1790 = vmatprep.subr.mxu0 0.0
        %1791 = vmatpush1.xpose.msra.mxu0 0.0
        %1792 = vmatprep.subr.mxu0 0.0
        %1793 = vmatpush1.xpose.msra.mxu0 0.0
        %1794 = vmatprep.subr.mxu0 0.0
        %1795 = vmatpush1.xpose.msra.mxu0 0.0
        %1796 = vmatprep.subr.mxu0 0.0
        %1797 = vmatpush1.xpose.msra.mxu0 0.0
        %1798 = vmatprep.subr.mxu0 0.0
        %1799 = vmatpush1.xpose.msra.mxu0 0.0
        %1800 = vmatprep.subr.mxu0 0.0
        %1801 = vmatpush1.xpose.msra.mxu0 0.0
        %1802 = vmatprep.subr.mxu0 0.0
        %1803 = vmatpush1.xpose.msra.mxu0 0.0
        %1804 = vmatprep.subr.mxu0 0.0
        %1805 = vmatpush1.xpose.msra.mxu0 0.0
        %1806 = vmatprep.subr.mxu0 0.0
        %1807 = vmatpush1.xpose.msra.mxu0 0.0
        %1808 = vmatprep.subr.mxu0 0.0
        %1809 = vmatpush1.xpose.msra.mxu0 0.0
        %1810 = vmatprep.subr.mxu0 0.0
        %1811 = vmatpush1.xpose.msra.mxu0 0.0
        %1812 = vmatprep.subr.mxu0 0.0
        %1813 = vmatpush1.xpose.msra.mxu0 0.0
        %1814 = vmatprep.subr.mxu0 0.0
        %1815 = vmatpush1.xpose.msra.mxu0 0.0
        %1816 = vmatprep.subr.mxu0 0.0
        %1817 = vmatpush1.xpose.msra.mxu0 0.0
        %1818 = vmatprep.subr.mxu0 0.0
        %1819 = vmatpush1.xpose.msra.mxu0 0.0
        %1820 = vmatprep.subr.mxu0 0.0
        %1821 = vmatpush1.xpose.msra.mxu0 0.0
        %1822 = vmatprep.subr.mxu0 0.0
        %1823 = vmatpush1.xpose.msra.mxu0 0.0
        %1824 = vmatprep.subr.mxu0 0.0
        %1825 = vmatpush1.xpose.msra.mxu0 0.0
        %1826 = vmatprep.subr.mxu0 0.0
        %1827 = vmatpush1.xpose.msra.mxu0 0.0
        %1828 = vmatprep.subr.mxu0 0.0
        %1829 = vmatpush1.xpose.msra.mxu0 0.0
        %1830 = vmatprep.mubr.f32.mxu0 0.0
        %1831 = vmatmul.mubr.f32.gmra.mrb[0].mxu0 %v1762
        %v1832 = vpop.f32.mrb[0].mxu0
        %v1833 = vadd.f32 0.0, %v1832
        %v1834 = vpop.f32.mrb[0].mxu0
        %1835 = vdwg.mxu0
        %1836 = vrot.lane.b32.xlu0 %v282, 112
        %v1837 = vpop.permute.xlu0 %1836
        %1838 = vrot.lane.b32.xlu0 %v282, 80
        %v1839 = vpop.permute.xlu0 %1838
        %v1840 = vsel %vm288, %v1837, 0
        %v1842 = vsel %vm288, %v1839, 0
        %1844 = vmatprep.subr.mxu0 0.0
        %1845 = vmatpush1.xpose.msra.mxu0 %v1842
        %1846 = vmatprep.subr.mxu0 0.0
        %1847 = vmatpush1.xpose.msra.mxu0 0.0
        %1848 = vmatprep.subr.mxu0 0.0
        %1849 = vmatpush1.xpose.msra.mxu0 0.0
        %1850 = vmatprep.subr.mxu0 0.0
        %1851 = vmatpush1.xpose.msra.mxu0 0.0
        %1852 = vmatprep.subr.mxu0 0.0
        %1853 = vmatpush1.xpose.msra.mxu0 0.0
        %1854 = vmatprep.subr.mxu0 0.0
        %1855 = vmatpush1.xpose.msra.mxu0 0.0
        %1856 = vmatprep.subr.mxu0 0.0
        %1857 = vmatpush1.xpose.msra.mxu0 0.0
        %1858 = vmatprep.subr.mxu0 0.0
        %1859 = vmatpush1.xpose.msra.mxu0 0.0
        %1860 = vmatprep.subr.mxu0 0.0
        %1861 = vmatpush1.xpose.msra.mxu0 0.0
        %1862 = vmatprep.subr.mxu0 0.0
        %1863 = vmatpush1.xpose.msra.mxu0 0.0
        %1864 = vmatprep.subr.mxu0 0.0
        %1865 = vmatpush1.xpose.msra.mxu0 0.0
        %1866 = vmatprep.subr.mxu0 0.0
        %1867 = vmatpush1.xpose.msra.mxu0 0.0
        %1868 = vmatprep.subr.mxu0 0.0
        %1869 = vmatpush1.xpose.msra.mxu0 0.0
        %1870 = vmatprep.subr.mxu0 0.0
        %1871 = vmatpush1.xpose.msra.mxu0 0.0
        %1872 = vmatprep.subr.mxu0 0.0
        %1873 = vmatpush1.xpose.msra.mxu0 0.0
        %1874 = vmatprep.subr.mxu0 0.0
        %1875 = vmatpush1.xpose.msra.mxu0 0.0
        %1876 = vmatprep.subr.mxu0 0.0
        %1877 = vmatpush1.xpose.msra.mxu0 0.0
        %1878 = vmatprep.subr.mxu0 0.0
        %1879 = vmatpush1.xpose.msra.mxu0 0.0
        %1880 = vmatprep.subr.mxu0 0.0
        %1881 = vmatpush1.xpose.msra.mxu0 0.0
        %1882 = vmatprep.subr.mxu0 0.0
        %1883 = vmatpush1.xpose.msra.mxu0 0.0
        %1884 = vmatprep.subr.mxu0 0.0
        %1885 = vmatpush1.xpose.msra.mxu0 0.0
        %1886 = vmatprep.subr.mxu0 0.0
        %1887 = vmatpush1.xpose.msra.mxu0 0.0
        %1888 = vmatprep.subr.mxu0 0.0
        %1889 = vmatpush1.xpose.msra.mxu0 0.0
        %1890 = vmatprep.subr.mxu0 0.0
        %1891 = vmatpush1.xpose.msra.mxu0 0.0
        %1892 = vmatprep.subr.mxu0 0.0
        %1893 = vmatpush1.xpose.msra.mxu0 0.0
        %1894 = vmatprep.subr.mxu0 0.0
        %1895 = vmatpush1.xpose.msra.mxu0 0.0
        %1896 = vmatprep.subr.mxu0 0.0
        %1897 = vmatpush1.xpose.msra.mxu0 0.0
        %1898 = vmatprep.subr.mxu0 0.0
        %1899 = vmatpush1.xpose.msra.mxu0 0.0
        %1900 = vmatprep.subr.mxu0 0.0
        %1901 = vmatpush1.xpose.msra.mxu0 0.0
        %1902 = vmatprep.subr.mxu0 0.0
        %1903 = vmatpush1.xpose.msra.mxu0 0.0
        %1904 = vmatprep.subr.mxu0 0.0
        %1905 = vmatpush1.xpose.msra.mxu0 0.0
        %1906 = vmatprep.subr.mxu0 0.0
        %1907 = vmatpush1.xpose.msra.mxu0 0.0
        %1908 = vmatprep.mubr.f32.mxu0 0.0
        %1909 = vmatmul.mubr.f32.gmra.mrb[0].mxu0 %v1840
        %v1910 = vpop.f32.mrb[0].mxu0
        %v1911 = vadd.f32 0.0, %v1910
        %v1912 = vpop.f32.mrb[0].mxu0
        %1913 = vdwg.mxu0
        %v1914 = vsel %vm288, %v1677, -inf
        %1915 = vmax.xlane.f32.xlu0 %v1914
        %v1916 = vpop.xlane.xlu0 %1915
        %v1917 = vsel %vm288, %v1755, -inf
        %1918 = vmax.xlane.f32.xlu0 %v1917
        %v1919 = vpop.xlane.xlu0 %1918
        %v1920 = vsel %vm288, %v1833, -inf
        %1921 = vmax.xlane.f32.xlu0 %v1920
        %v1922 = vpop.xlane.xlu0 %1921
        %v1923 = vsel %vm288, %v1911, -inf
        %1924 = vmax.xlane.f32.xlu0 %v1923
        %v1925 = vpop.xlane.xlu0 %1924
        %v1926 = vsub.f32 %v1677, %v1916
        %v1927 = vsub.f32 %v1755, %v1919
        %v1928 = vsub.f32 %v1833, %v1922
        %v1929 = vsub.f32 %v1911, %v1925
        %v1930 = vmul.f32 %v1926, 1.442695
        %v1931 = vpow.pop %v1930
        %v1932 = vmul.f32 %v1927, 1.442695
        %v1933 = vpow.pop %v1932
        %v1934 = vmul.f32 %v1928, 1.442695
        %v1935 = vpow.pop %v1934
        %v1936 = vmul.f32 %v1929, 1.442695
        %v1937 = vpow.pop %v1936
        %v1938 = vsel %vm288, %v1931, 0.0
        %1939 = vadd.xlane.f32.xlu0 %v1938
        %v1940 = vpop.xlane.xlu0 %1939
        %v1941 = vsel %vm288, %v1933, 0.0
        %1942 = vadd.xlane.f32.xlu0 %v1941
        %v1943 = vpop.xlane.xlu0 %1942
        %v1944 = vsel %vm288, %v1935, 0.0
        %1945 = vadd.xlane.f32.xlu0 %v1944
        %v1946 = vpop.xlane.xlu0 %1945
        %v1947 = vsel %vm288, %v1937, 0.0
        %1948 = vadd.xlane.f32.xlu0 %v1947
        %v1949 = vpop.xlane.xlu0 %1948
        %v1950 = vrcp.pop %v1940
        %v1951 = vrcp.pop %v1943
        %v1952 = vrcp.pop %v1946
        %v1953 = vrcp.pop %v1949
        %1954 = vrot.lane.b32.xlu0 %v267, 48
        %v1955 = vpop.permute.xlu0 %1954
        %v1958 = vsel %vm288, %v1931, 0
        %1960 = vmatprep.subr.mxu0 0.0
        %1961 = vmatpush1.msra.mxu0 %v1955
        %1962 = vmatprep.subr.mxu0 0.0
        %1963 = vmatpush1.msra.mxu0 0.0
        %1964 = vmatprep.subr.mxu0 0.0
        %1965 = vmatpush1.msra.mxu0 0.0
        %1966 = vmatprep.subr.mxu0 0.0
        %1967 = vmatpush1.msra.mxu0 0.0
        %1968 = vmatprep.subr.mxu0 0.0
        %1969 = vmatpush1.msra.mxu0 0.0
        %1970 = vmatprep.subr.mxu0 0.0
        %1971 = vmatpush1.msra.mxu0 0.0
        %1972 = vmatprep.subr.mxu0 0.0
        %1973 = vmatpush1.msra.mxu0 0.0
        %1974 = vmatprep.subr.mxu0 0.0
        %1975 = vmatpush1.msra.mxu0 0.0
        %1976 = vmatprep.subr.mxu0 0.0
        %1977 = vmatpush1.msra.mxu0 0.0
        %1978 = vmatprep.subr.mxu0 0.0
        %1979 = vmatpush1.msra.mxu0 0.0
        %1980 = vmatprep.subr.mxu0 0.0
        %1981 = vmatpush1.msra.mxu0 0.0
        %1982 = vmatprep.subr.mxu0 0.0
        %1983 = vmatpush1.msra.mxu0 0.0
        %1984 = vmatprep.subr.mxu0 0.0
        %1985 = vmatpush1.msra.mxu0 0.0
        %1986 = vmatprep.subr.mxu0 0.0
        %1987 = vmatpush1.msra.mxu0 0.0
        %1988 = vmatprep.subr.mxu0 0.0
        %1989 = vmatpush1.msra.mxu0 0.0
        %1990 = vmatprep.subr.mxu0 0.0
        %1991 = vmatpush1.msra.mxu0 0.0
        %1992 = vmatprep.subr.mxu0 0.0
        %1993 = vmatpush1.msra.mxu0 0.0
        %1994 = vmatprep.subr.mxu0 0.0
        %1995 = vmatpush1.msra.mxu0 0.0
        %1996 = vmatprep.subr.mxu0 0.0
        %1997 = vmatpush1.msra.mxu0 0.0
        %1998 = vmatprep.subr.mxu0 0.0
        %1999 = vmatpush1.msra.mxu0 0.0
        %2000 = vmatprep.subr.mxu0 0.0
        %2001 = vmatpush1.msra.mxu0 0.0
        %2002 = vmatprep.subr.mxu0 0.0
        %2003 = vmatpush1.msra.mxu0 0.0
        %2004 = vmatprep.subr.mxu0 0.0
        %2005 = vmatpush1.msra.mxu0 0.0
        %2006 = vmatprep.subr.mxu0 0.0
        %2007 = vmatpush1.msra.mxu0 0.0
        %2008 = vmatprep.subr.mxu0 0.0
        %2009 = vmatpush1.msra.mxu0 0.0
        %2010 = vmatprep.subr.mxu0 0.0
        %2011 = vmatpush1.msra.mxu0 0.0
        %2012 = vmatprep.subr.mxu0 0.0
        %2013 = vmatpush1.msra.mxu0 0.0
        %2014 = vmatprep.subr.mxu0 0.0
        %2015 = vmatpush1.msra.mxu0 0.0
        %2016 = vmatprep.subr.mxu0 0.0
        %2017 = vmatpush1.msra.mxu0 0.0
        %2018 = vmatprep.subr.mxu0 0.0
        %2019 = vmatpush1.msra.mxu0 0.0
        %2020 = vmatprep.subr.mxu0 0.0
        %2021 = vmatpush1.msra.mxu0 0.0
        %2022 = vmatprep.subr.mxu0 0.0
        %2023 = vmatpush1.msra.mxu0 0.0
        %2024 = vmatprep.mubr.f32.mxu0 0.0
        %2025 = vmatmul.mubr.f32.gmra.mrb[0].mxu0 %v1958
        %v2026 = vpop.f32.mrb[0].mxu0
        %v2027 = vadd.f32 0.0, %v2026
        %v2028 = vpop.f32.mrb[0].mxu0
        %2029 = vdwg.mxu0
        %2030 = vrot.lane.b32.xlu0 %v272, 48
        %v2031 = vpop.permute.xlu0 %2030
        %v2034 = vsel %vm288, %v1933, 0
        %2036 = vmatprep.subr.mxu0 0.0
        %2037 = vmatpush1.msra.mxu0 %v2031
        %2038 = vmatprep.subr.mxu0 0.0
        %2039 = vmatpush1.msra.mxu0 0.0
        %2040 = vmatprep.subr.mxu0 0.0
        %2041 = vmatpush1.msra.mxu0 0.0
        %2042 = vmatprep.subr.mxu0 0.0
        %2043 = vmatpush1.msra.mxu0 0.0
        %2044 = vmatprep.subr.mxu0 0.0
        %2045 = vmatpush1.msra.mxu0 0.0
        %2046 = vmatprep.subr.mxu0 0.0
        %2047 = vmatpush1.msra.mxu0 0.0
        %2048 = vmatprep.subr.mxu0 0.0
        %2049 = vmatpush1.msra.mxu0 0.0
        %2050 = vmatprep.subr.mxu0 0.0
        %2051 = vmatpush1.msra.mxu0 0.0
        %2052 = vmatprep.subr.mxu0 0.0
        %2053 = vmatpush1.msra.mxu0 0.0
        %2054 = vmatprep.subr.mxu0 0.0
        %2055 = vmatpush1.msra.mxu0 0.0
        %2056 = vmatprep.subr.mxu0 0.0
        %2057 = vmatpush1.msra.mxu0 0.0
        %2058 = vmatprep.subr.mxu0 0.0
        %2059 = vmatpush1.msra.mxu0 0.0
        %2060 = vmatprep.subr.mxu0 0.0
        %2061 = vmatpush1.msra.mxu0 0.0
        %2062 = vmatprep.subr.mxu0 0.0
        %2063 = vmatpush1.msra.mxu0 0.0
        %2064 = vmatprep.subr.mxu0 0.0
        %2065 = vmatpush1.msra.mxu0 0.0
        %2066 = vmatprep.subr.mxu0 0.0
        %2067 = vmatpush1.msra.mxu0 0.0
        %2068 = vmatprep.subr.mxu0 0.0
        %2069 = vmatpush1.msra.mxu0 0.0
        %2070 = vmatprep.subr.mxu0 0.0
        %2071 = vmatpush1.msra.mxu0 0.0
        %2072 = vmatprep.subr.mxu0 0.0
        %2073 = vmatpush1.msra.mxu0 0.0
        %2074 = vmatprep.subr.mxu0 0.0
        %2075 = vmatpush1.msra.mxu0 0.0
        %2076 = vmatprep.subr.mxu0 0.0
        %2077 = vmatpush1.msra.mxu0 0.0
        %2078 = vmatprep.subr.mxu0 0.0
        %2079 = vmatpush1.msra.mxu0 0.0
        %2080 = vmatprep.subr.mxu0 0.0
        %2081 = vmatpush1.msra.mxu0 0.0
        %2082 = vmatprep.subr.mxu0 0.0
        %2083 = vmatpush1.msra.mxu0 0.0
        %2084 = vmatprep.subr.mxu0 0.0
        %2085 = vmatpush1.msra.mxu0 0.0
        %2086 = vmatprep.subr.mxu0 0.0
        %2087 = vmatpush1.msra.mxu0 0.0
        %2088 = vmatprep.subr.mxu0 0.0
        %2089 = vmatpush1.msra.mxu0 0.0
        %2090 = vmatprep.subr.mxu0 0.0
        %2091 = vmatpush1.msra.mxu0 0.0
        %2092 = vmatprep.subr.mxu0 0.0
        %2093 = vmatpush1.msra.mxu0 0.0
        %2094 = vmatprep.subr.mxu0 0.0
        %2095 = vmatpush1.msra.mxu0 0.0
        %2096 = vmatprep.subr.mxu0 0.0
        %2097 = vmatpush1.msra.mxu0 0.0
        %2098 = vmatprep.subr.mxu0 0.0
        %2099 = vmatpush1.msra.mxu0 0.0
        %2100 = vmatprep.mubr.f32.mxu0 0.0
        %2101 = vmatmul.mubr.f32.gmra.mrb[0].mxu0 %v2034
        %v2102 = vpop.f32.mrb[0].mxu0
        %v2103 = vadd.f32 0.0, %v2102
        %v2104 = vpop.f32.mrb[0].mxu0
        %2105 = vdwg.mxu0
        %2106 = vrot.lane.b32.xlu0 %v277, 48
        %v2107 = vpop.permute.xlu0 %2106
        %v2110 = vsel %vm288, %v1935, 0
        %2112 = vmatprep.subr.mxu0 0.0
        %2113 = vmatpush1.msra.mxu0 %v2107
        %2114 = vmatprep.subr.mxu0 0.0
        %2115 = vmatpush1.msra.mxu0 0.0
        %2116 = vmatprep.subr.mxu0 0.0
        %2117 = vmatpush1.msra.mxu0 0.0
        %2118 = vmatprep.subr.mxu0 0.0
        %2119 = vmatpush1.msra.mxu0 0.0
        %2120 = vmatprep.subr.mxu0 0.0
        %2121 = vmatpush1.msra.mxu0 0.0
        %2122 = vmatprep.subr.mxu0 0.0
        %2123 = vmatpush1.msra.mxu0 0.0
        %2124 = vmatprep.subr.mxu0 0.0
        %2125 = vmatpush1.msra.mxu0 0.0
        %2126 = vmatprep.subr.mxu0 0.0
        %2127 = vmatpush1.msra.mxu0 0.0
        %2128 = vmatprep.subr.mxu0 0.0
        %2129 = vmatpush1.msra.mxu0 0.0
        %2130 = vmatprep.subr.mxu0 0.0
        %2131 = vmatpush1.msra.mxu0 0.0
        %2132 = vmatprep.subr.mxu0 0.0
        %2133 = vmatpush1.msra.mxu0 0.0
        %2134 = vmatprep.subr.mxu0 0.0
        %2135 = vmatpush1.msra.mxu0 0.0
        %2136 = vmatprep.subr.mxu0 0.0
        %2137 = vmatpush1.msra.mxu0 0.0
        %2138 = vmatprep.subr.mxu0 0.0
        %2139 = vmatpush1.msra.mxu0 0.0
        %2140 = vmatprep.subr.mxu0 0.0
        %2141 = vmatpush1.msra.mxu0 0.0
        %2142 = vmatprep.subr.mxu0 0.0
        %2143 = vmatpush1.msra.mxu0 0.0
        %2144 = vmatprep.subr.mxu0 0.0
        %2145 = vmatpush1.msra.mxu0 0.0
        %2146 = vmatprep.subr.mxu0 0.0
        %2147 = vmatpush1.msra.mxu0 0.0
        %2148 = vmatprep.subr.mxu0 0.0
        %2149 = vmatpush1.msra.mxu0 0.0
        %2150 = vmatprep.subr.mxu0 0.0
        %2151 = vmatpush1.msra.mxu0 0.0
        %2152 = vmatprep.subr.mxu0 0.0
        %2153 = vmatpush1.msra.mxu0 0.0
        %2154 = vmatprep.subr.mxu0 0.0
        %2155 = vmatpush1.msra.mxu0 0.0
        %2156 = vmatprep.subr.mxu0 0.0
        %2157 = vmatpush1.msra.mxu0 0.0
        %2158 = vmatprep.subr.mxu0 0.0
        %2159 = vmatpush1.msra.mxu0 0.0
        %2160 = vmatprep.subr.mxu0 0.0
        %2161 = vmatpush1.msra.mxu0 0.0
        %2162 = vmatprep.subr.mxu0 0.0
        %2163 = vmatpush1.msra.mxu0 0.0
        %2164 = vmatprep.subr.mxu0 0.0
        %2165 = vmatpush1.msra.mxu0 0.0
        %2166 = vmatprep.subr.mxu0 0.0
        %2167 = vmatpush1.msra.mxu0 0.0
        %2168 = vmatprep.subr.mxu0 0.0
        %2169 = vmatpush1.msra.mxu0 0.0
        %2170 = vmatprep.subr.mxu0 0.0
        %2171 = vmatpush1.msra.mxu0 0.0
        %2172 = vmatprep.subr.mxu0 0.0
        %2173 = vmatpush1.msra.mxu0 0.0
        %2174 = vmatprep.subr.mxu0 0.0
        %2175 = vmatpush1.msra.mxu0 0.0
        %2176 = vmatprep.mubr.f32.mxu0 0.0
        %2177 = vmatmul.mubr.f32.gmra.mrb[0].mxu0 %v2110
        %v2178 = vpop.f32.mrb[0].mxu0
        %v2179 = vadd.f32 0.0, %v2178
        %v2180 = vpop.f32.mrb[0].mxu0
        %2181 = vdwg.mxu0
        %2182 = vrot.lane.b32.xlu0 %v282, 48
        %v2183 = vpop.permute.xlu0 %2182
        %v2186 = vsel %vm288, %v1937, 0
        %2188 = vmatprep.subr.mxu0 0.0
        %2189 = vmatpush1.msra.mxu0 %v2183
        %2190 = vmatprep.subr.mxu0 0.0
        %2191 = vmatpush1.msra.mxu0 0.0
        %2192 = vmatprep.subr.mxu0 0.0
        %2193 = vmatpush1.msra.mxu0 0.0
        %2194 = vmatprep.subr.mxu0 0.0
        %2195 = vmatpush1.msra.mxu0 0.0
        %2196 = vmatprep.subr.mxu0 0.0
        %2197 = vmatpush1.msra.mxu0 0.0
        %2198 = vmatprep.subr.mxu0 0.0
        %2199 = vmatpush1.msra.mxu0 0.0
        %2200 = vmatprep.subr.mxu0 0.0
        %2201 = vmatpush1.msra.mxu0 0.0
        %2202 = vmatprep.subr.mxu0 0.0
        %2203 = vmatpush1.msra.mxu0 0.0
        %2204 = vmatprep.subr.mxu0 0.0
        %2205 = vmatpush1.msra.mxu0 0.0
        %2206 = vmatprep.subr.mxu0 0.0
        %2207 = vmatpush1.msra.mxu0 0.0
        %2208 = vmatprep.subr.mxu0 0.0
        %2209 = vmatpush1.msra.mxu0 0.0
        %2210 = vmatprep.subr.mxu0 0.0
        %2211 = vmatpush1.msra.mxu0 0.0
        %2212 = vmatprep.subr.mxu0 0.0
        %2213 = vmatpush1.msra.mxu0 0.0
        %2214 = vmatprep.subr.mxu0 0.0
        %2215 = vmatpush1.msra.mxu0 0.0
        %2216 = vmatprep.subr.mxu0 0.0
        %2217 = vmatpush1.msra.mxu0 0.0
        %2218 = vmatprep.subr.mxu0 0.0
        %2219 = vmatpush1.msra.mxu0 0.0
        %2220 = vmatprep.subr.mxu0 0.0
        %2221 = vmatpush1.msra.mxu0 0.0
        %2222 = vmatprep.subr.mxu0 0.0
        %2223 = vmatpush1.msra.mxu0 0.0
        %2224 = vmatprep.subr.mxu0 0.0
        %2225 = vmatpush1.msra.mxu0 0.0
        %2226 = vmatprep.subr.mxu0 0.0
        %2227 = vmatpush1.msra.mxu0 0.0
        %2228 = vmatprep.subr.mxu0 0.0
        %2229 = vmatpush1.msra.mxu0 0.0
        %2230 = vmatprep.subr.mxu0 0.0
        %2231 = vmatpush1.msra.mxu0 0.0
        %2232 = vmatprep.subr.mxu0 0.0
        %2233 = vmatpush1.msra.mxu0 0.0
        %2234 = vmatprep.subr.mxu0 0.0
        %2235 = vmatpush1.msra.mxu0 0.0
        %2236 = vmatprep.subr.mxu0 0.0
        %2237 = vmatpush1.msra.mxu0 0.0
        %2238 = vmatprep.subr.mxu0 0.0
        %2239 = vmatpush1.msra.mxu0 0.0
        %2240 = vmatprep.subr.mxu0 0.0
        %2241 = vmatpush1.msra.mxu0 0.0
        %2242 = vmatprep.subr.mxu0 0.0
        %2243 = vmatpush1.msra.mxu0 0.0
        %2244 = vmatprep.subr.mxu0 0.0
        %2245 = vmatpush1.msra.mxu0 0.0
        %2246 = vmatprep.subr.mxu0 0.0
        %2247 = vmatpush1.msra.mxu0 0.0
        %2248 = vmatprep.subr.mxu0 0.0
        %2249 = vmatpush1.msra.mxu0 0.0
        %2250 = vmatprep.subr.mxu0 0.0
        %2251 = vmatpush1.msra.mxu0 0.0
        %2252 = vmatprep.mubr.f32.mxu0 0.0
        %2253 = vmatmul.mubr.f32.gmra.mrb[0].mxu0 %v2186
        %v2254 = vpop.f32.mrb[0].mxu0
        %v2255 = vadd.f32 0.0, %v2254
        %v2256 = vpop.f32.mrb[0].mxu0
        %2257 = vdwg.mxu0
        %v2258 = vmul.f32 %v2027, %v1950
        %v2259 = vmul.f32 %v2103, %v1951
        %v2260 = vmul.f32 %v2179, %v1952
        %v2261 = vmul.f32 %v2255, %v1953
        %2262 = vrot.lane.b32.xlu0 %v267, 104
        %v2263 = vpop.permute.xlu0 %2262
        %2264 = vrot.lane.b32.xlu0 %v267, 72
        %v2265 = vpop.permute.xlu0 %2264
        %v2266 = vsel %vm288, %v2263, 0
        %v2268 = vsel %vm288, %v2265, 0
        %2270 = vmatprep.subr.mxu0 0.0
        %2271 = vmatpush1.xpose.msra.mxu0 %v2268
        %2272 = vmatprep.subr.mxu0 0.0
        %2273 = vmatpush1.xpose.msra.mxu0 0.0
        %2274 = vmatprep.subr.mxu0 0.0
        %2275 = vmatpush1.xpose.msra.mxu0 0.0
        %2276 = vmatprep.subr.mxu0 0.0
        %2277 = vmatpush1.xpose.msra.mxu0 0.0
        %2278 = vmatprep.subr.mxu0 0.0
        %2279 = vmatpush1.xpose.msra.mxu0 0.0
        %2280 = vmatprep.subr.mxu0 0.0
        %2281 = vmatpush1.xpose.msra.mxu0 0.0
        %2282 = vmatprep.subr.mxu0 0.0
        %2283 = vmatpush1.xpose.msra.mxu0 0.0
        %2284 = vmatprep.subr.mxu0 0.0
        %2285 = vmatpush1.xpose.msra.mxu0 0.0
        %2286 = vmatprep.subr.mxu0 0.0
        %2287 = vmatpush1.xpose.msra.mxu0 0.0
        %2288 = vmatprep.subr.mxu0 0.0
        %2289 = vmatpush1.xpose.msra.mxu0 0.0
        %2290 = vmatprep.subr.mxu0 0.0
        %2291 = vmatpush1.xpose.msra.mxu0 0.0
        %2292 = vmatprep.subr.mxu0 0.0
        %2293 = vmatpush1.xpose.msra.mxu0 0.0
        %2294 = vmatprep.subr.mxu0 0.0
        %2295 = vmatpush1.xpose.msra.mxu0 0.0
        %2296 = vmatprep.subr.mxu0 0.0
        %2297 = vmatpush1.xpose.msra.mxu0 0.0
        %2298 = vmatprep.subr.mxu0 0.0
        %2299 = vmatpush1.xpose.msra.mxu0 0.0
        %2300 = vmatprep.subr.mxu0 0.0
        %2301 = vmatpush1.xpose.msra.mxu0 0.0
        %2302 = vmatprep.subr.mxu0 0.0
        %2303 = vmatpush1.xpose.msra.mxu0 0.0
        %2304 = vmatprep.subr.mxu0 0.0
        %2305 = vmatpush1.xpose.msra.mxu0 0.0
        %2306 = vmatprep.subr.mxu0 0.0
        %2307 = vmatpush1.xpose.msra.mxu0 0.0
        %2308 = vmatprep.subr.mxu0 0.0
        %2309 = vmatpush1.xpose.msra.mxu0 0.0
        %2310 = vmatprep.subr.mxu0 0.0
        %2311 = vmatpush1.xpose.msra.mxu0 0.0
        %2312 = vmatprep.subr.mxu0 0.0
        %2313 = vmatpush1.xpose.msra.mxu0 0.0
        %2314 = vmatprep.subr.mxu0 0.0
        %2315 = vmatpush1.xpose.msra.mxu0 0.0
        %2316 = vmatprep.subr.mxu0 0.0
        %2317 = vmatpush1.xpose.msra.mxu0 0.0
        %2318 = vmatprep.subr.mxu0 0.0
        %2319 = vmatpush1.xpose.msra.mxu0 0.0
        %2320 = vmatprep.subr.mxu0 0.0
        %2321 = vmatpush1.xpose.msra.mxu0 0.0
        %2322 = vmatprep.subr.mxu0 0.0
        %2323 = vmatpush1.xpose.msra.mxu0 0.0
        %2324 = vmatprep.subr.mxu0 0.0
        %2325 = vmatpush1.xpose.msra.mxu0 0.0
        %2326 = vmatprep.subr.mxu0 0.0
        %2327 = vmatpush1.xpose.msra.mxu0 0.0
        %2328 = vmatprep.subr.mxu0 0.0
        %2329 = vmatpush1.xpose.msra.mxu0 0.0
        %2330 = vmatprep.subr.mxu0 0.0
        %2331 = vmatpush1.xpose.msra.mxu0 0.0
        %2332 = vmatprep.subr.mxu0 0.0
        %2333 = vmatpush1.xpose.msra.mxu0 0.0
        %2334 = vmatprep.mubr.f32.mxu0 0.0
        %2335 = vmatmul.mubr.f32.gmra.mrb[0].mxu0 %v2266
        %v2336 = vpop.f32.mrb[0].mxu0
        %v2337 = vadd.f32 0.0, %v2336
        %v2338 = vpop.f32.mrb[0].mxu0
        %2339 = vdwg.mxu0
        %2340 = vrot.lane.b32.xlu0 %v272, 104
        %v2341 = vpop.permute.xlu0 %2340
        %2342 = vrot.lane.b32.xlu0 %v272, 72
        %v2343 = vpop.permute.xlu0 %2342
        %v2344 = vsel %vm288, %v2341, 0
        %v2346 = vsel %vm288, %v2343, 0
        %2348 = vmatprep.subr.mxu0 0.0
        %2349 = vmatpush1.xpose.msra.mxu0 %v2346
        %2350 = vmatprep.subr.mxu0 0.0
        %2351 = vmatpush1.xpose.msra.mxu0 0.0
        %2352 = vmatprep.subr.mxu0 0.0
        %2353 = vmatpush1.xpose.msra.mxu0 0.0
        %2354 = vmatprep.subr.mxu0 0.0
        %2355 = vmatpush1.xpose.msra.mxu0 0.0
        %2356 = vmatprep.subr.mxu0 0.0
        %2357 = vmatpush1.xpose.msra.mxu0 0.0
        %2358 = vmatprep.subr.mxu0 0.0
        %2359 = vmatpush1.xpose.msra.mxu0 0.0
        %2360 = vmatprep.subr.mxu0 0.0
        %2361 = vmatpush1.xpose.msra.mxu0 0.0
        %2362 = vmatprep.subr.mxu0 0.0
        %2363 = vmatpush1.xpose.msra.mxu0 0.0
        %2364 = vmatprep.subr.mxu0 0.0
        %2365 = vmatpush1.xpose.msra.mxu0 0.0
        %2366 = vmatprep.subr.mxu0 0.0
        %2367 = vmatpush1.xpose.msra.mxu0 0.0
        %2368 = vmatprep.subr.mxu0 0.0
        %2369 = vmatpush1.xpose.msra.mxu0 0.0
        %2370 = vmatprep.subr.mxu0 0.0
        %2371 = vmatpush1.xpose.msra.mxu0 0.0
        %2372 = vmatprep.subr.mxu0 0.0
        %2373 = vmatpush1.xpose.msra.mxu0 0.0
        %2374 = vmatprep.subr.mxu0 0.0
        %2375 = vmatpush1.xpose.msra.mxu0 0.0
        %2376 = vmatprep.subr.mxu0 0.0
        %2377 = vmatpush1.xpose.msra.mxu0 0.0
        %2378 = vmatprep.subr.mxu0 0.0
        %2379 = vmatpush1.xpose.msra.mxu0 0.0
        %2380 = vmatprep.subr.mxu0 0.0
        %2381 = vmatpush1.xpose.msra.mxu0 0.0
        %2382 = vmatprep.subr.mxu0 0.0
        %2383 = vmatpush1.xpose.msra.mxu0 0.0
        %2384 = vmatprep.subr.mxu0 0.0
        %2385 = vmatpush1.xpose.msra.mxu0 0.0
        %2386 = vmatprep.subr.mxu0 0.0
        %2387 = vmatpush1.xpose.msra.mxu0 0.0
        %2388 = vmatprep.subr.mxu0 0.0
        %2389 = vmatpush1.xpose.msra.mxu0 0.0
        %2390 = vmatprep.subr.mxu0 0.0
        %2391 = vmatpush1.xpose.msra.mxu0 0.0
        %2392 = vmatprep.subr.mxu0 0.0
        %2393 = vmatpush1.xpose.msra.mxu0 0.0
        %2394 = vmatprep.subr.mxu0 0.0
        %2395 = vmatpush1.xpose.msra.mxu0 0.0
        %2396 = vmatprep.subr.mxu0 0.0
        %2397 = vmatpush1.xpose.msra.mxu0 0.0
        %2398 = vmatprep.subr.mxu0 0.0
        %2399 = vmatpush1.xpose.msra.mxu0 0.0
        %2400 = vmatprep.subr.mxu0 0.0
        %2401 = vmatpush1.xpose.msra.mxu0 0.0
        %2402 = vmatprep.subr.mxu0 0.0
        %2403 = vmatpush1.xpose.msra.mxu0 0.0
        %2404 = vmatprep.subr.mxu0 0.0
        %2405 = vmatpush1.xpose.msra.mxu0 0.0
        %2406 = vmatprep.subr.mxu0 0.0
        %2407 = vmatpush1.xpose.msra.mxu0 0.0
        %2408 = vmatprep.subr.mxu0 0.0
        %2409 = vmatpush1.xpose.msra.mxu0 0.0
        %2410 = vmatprep.subr.mxu0 0.0
        %2411 = vmatpush1.xpose.msra.mxu0 0.0
        %2412 = vmatprep.mubr.f32.mxu0 0.0
        %2413 = vmatmul.mubr.f32.gmra.mrb[0].mxu0 %v2344
        %v2414 = vpop.f32.mrb[0].mxu0
        %v2415 = vadd.f32 0.0, %v2414
        %v2416 = vpop.f32.mrb[0].mxu0
        %2417 = vdwg.mxu0
        %2418 = vrot.lane.b32.xlu0 %v277, 104
        %v2419 = vpop.permute.xlu0 %2418
        %2420 = vrot.lane.b32.xlu0 %v277, 72
        %v2421 = vpop.permute.xlu0 %2420
        %v2422 = vsel %vm288, %v2419, 0
        %v2424 = vsel %vm288, %v2421, 0
        %2426 = vmatprep.subr.mxu0 0.0
        %2427 = vmatpush1.xpose.msra.mxu0 %v2424
        %2428 = vmatprep.subr.mxu0 0.0
        %2429 = vmatpush1.xpose.msra.mxu0 0.0
        %2430 = vmatprep.subr.mxu0 0.0
        %2431 = vmatpush1.xpose.msra.mxu0 0.0
        %2432 = vmatprep.subr.mxu0 0.0
        %2433 = vmatpush1.xpose.msra.mxu0 0.0
        %2434 = vmatprep.subr.mxu0 0.0
        %2435 = vmatpush1.xpose.msra.mxu0 0.0
        %2436 = vmatprep.subr.mxu0 0.0
        %2437 = vmatpush1.xpose.msra.mxu0 0.0
        %2438 = vmatprep.subr.mxu0 0.0
        %2439 = vmatpush1.xpose.msra.mxu0 0.0
        %2440 = vmatprep.subr.mxu0 0.0
        %2441 = vmatpush1.xpose.msra.mxu0 0.0
        %2442 = vmatprep.subr.mxu0 0.0
        %2443 = vmatpush1.xpose.msra.mxu0 0.0
        %2444 = vmatprep.subr.mxu0 0.0
        %2445 = vmatpush1.xpose.msra.mxu0 0.0
        %2446 = vmatprep.subr.mxu0 0.0
        %2447 = vmatpush1.xpose.msra.mxu0 0.0
        %2448 = vmatprep.subr.mxu0 0.0
        %2449 = vmatpush1.xpose.msra.mxu0 0.0
        %2450 = vmatprep.subr.mxu0 0.0
        %2451 = vmatpush1.xpose.msra.mxu0 0.0
        %2452 = vmatprep.subr.mxu0 0.0
        %2453 = vmatpush1.xpose.msra.mxu0 0.0
        %2454 = vmatprep.subr.mxu0 0.0
        %2455 = vmatpush1.xpose.msra.mxu0 0.0
        %2456 = vmatprep.subr.mxu0 0.0
        %2457 = vmatpush1.xpose.msra.mxu0 0.0
        %2458 = vmatprep.subr.mxu0 0.0
        %2459 = vmatpush1.xpose.msra.mxu0 0.0
        %2460 = vmatprep.subr.mxu0 0.0
        %2461 = vmatpush1.xpose.msra.mxu0 0.0
        %2462 = vmatprep.subr.mxu0 0.0
        %2463 = vmatpush1.xpose.msra.mxu0 0.0
        %2464 = vmatprep.subr.mxu0 0.0
        %2465 = vmatpush1.xpose.msra.mxu0 0.0
        %2466 = vmatprep.subr.mxu0 0.0
        %2467 = vmatpush1.xpose.msra.mxu0 0.0
        %2468 = vmatprep.subr.mxu0 0.0
        %2469 = vmatpush1.xpose.msra.mxu0 0.0
        %2470 = vmatprep.subr.mxu0 0.0
        %2471 = vmatpush1.xpose.msra.mxu0 0.0
        %2472 = vmatprep.subr.mxu0 0.0
        %2473 = vmatpush1.xpose.msra.mxu0 0.0
        %2474 = vmatprep.subr.mxu0 0.0
        %2475 = vmatpush1.xpose.msra.mxu0 0.0
        %2476 = vmatprep.subr.mxu0 0.0
        %2477 = vmatpush1.xpose.msra.mxu0 0.0
        %2478 = vmatprep.subr.mxu0 0.0
        %2479 = vmatpush1.xpose.msra.mxu0 0.0
        %2480 = vmatprep.subr.mxu0 0.0
        %2481 = vmatpush1.xpose.msra.mxu0 0.0
        %2482 = vmatprep.subr.mxu0 0.0
        %2483 = vmatpush1.xpose.msra.mxu0 0.0
        %2484 = vmatprep.subr.mxu0 0.0
        %2485 = vmatpush1.xpose.msra.mxu0 0.0
        %2486 = vmatprep.subr.mxu0 0.0
        %2487 = vmatpush1.xpose.msra.mxu0 0.0
        %2488 = vmatprep.subr.mxu0 0.0
        %2489 = vmatpush1.xpose.msra.mxu0 0.0
        %2490 = vmatprep.mubr.f32.mxu0 0.0
        %2491 = vmatmul.mubr.f32.gmra.mrb[0].mxu0 %v2422
        %v2492 = vpop.f32.mrb[0].mxu0
        %v2493 = vadd.f32 0.0, %v2492
        %v2494 = vpop.f32.mrb[0].mxu0
        %2495 = vdwg.mxu0
        %2496 = vrot.lane.b32.xlu0 %v282, 104
        %v2497 = vpop.permute.xlu0 %2496
        %2498 = vrot.lane.b32.xlu0 %v282, 72
        %v2499 = vpop.permute.xlu0 %2498
        %v2500 = vsel %vm288, %v2497, 0
        %v2502 = vsel %vm288, %v2499, 0
        %2504 = vmatprep.subr.mxu0 0.0
        %2505 = vmatpush1.xpose.msra.mxu0 %v2502
        %2506 = vmatprep.subr.mxu0 0.0
        %2507 = vmatpush1.xpose.msra.mxu0 0.0
        %2508 = vmatprep.subr.mxu0 0.0
        %2509 = vmatpush1.xpose.msra.mxu0 0.0
        %2510 = vmatprep.subr.mxu0 0.0
        %2511 = vmatpush1.xpose.msra.mxu0 0.0
        %2512 = vmatprep.subr.mxu0 0.0
        %2513 = vmatpush1.xpose.msra.mxu0 0.0
        %2514 = vmatprep.subr.mxu0 0.0
        %2515 = vmatpush1.xpose.msra.mxu0 0.0
        %2516 = vmatprep.subr.mxu0 0.0
        %2517 = vmatpush1.xpose.msra.mxu0 0.0
        %2518 = vmatprep.subr.mxu0 0.0
        %2519 = vmatpush1.xpose.msra.mxu0 0.0
        %2520 = vmatprep.subr.mxu0 0.0
        %2521 = vmatpush1.xpose.msra.mxu0 0.0
        %2522 = vmatprep.subr.mxu0 0.0
        %2523 = vmatpush1.xpose.msra.mxu0 0.0
        %2524 = vmatprep.subr.mxu0 0.0
        %2525 = vmatpush1.xpose.msra.mxu0 0.0
        %2526 = vmatprep.subr.mxu0 0.0
        %2527 = vmatpush1.xpose.msra.mxu0 0.0
        %2528 = vmatprep.subr.mxu0 0.0
        %2529 = vmatpush1.xpose.msra.mxu0 0.0
        %2530 = vmatprep.subr.mxu0 0.0
        %2531 = vmatpush1.xpose.msra.mxu0 0.0
        %2532 = vmatprep.subr.mxu0 0.0
        %2533 = vmatpush1.xpose.msra.mxu0 0.0
        %2534 = vmatprep.subr.mxu0 0.0
        %2535 = vmatpush1.xpose.msra.mxu0 0.0
        %2536 = vmatprep.subr.mxu0 0.0
        %2537 = vmatpush1.xpose.msra.mxu0 0.0
        %2538 = vmatprep.subr.mxu0 0.0
        %2539 = vmatpush1.xpose.msra.mxu0 0.0
        %2540 = vmatprep.subr.mxu0 0.0
        %2541 = vmatpush1.xpose.msra.mxu0 0.0
        %2542 = vmatprep.subr.mxu0 0.0
        %2543 = vmatpush1.xpose.msra.mxu0 0.0
        %2544 = vmatprep.subr.mxu0 0.0
        %2545 = vmatpush1.xpose.msra.mxu0 0.0
        %2546 = vmatprep.subr.mxu0 0.0
        %2547 = vmatpush1.xpose.msra.mxu0 0.0
        %2548 = vmatprep.subr.mxu0 0.0
        %2549 = vmatpush1.xpose.msra.mxu0 0.0
        %2550 = vmatprep.subr.mxu0 0.0
        %2551 = vmatpush1.xpose.msra.mxu0 0.0
        %2552 = vmatprep.subr.mxu0 0.0
        %2553 = vmatpush1.xpose.msra.mxu0 0.0
        %2554 = vmatprep.subr.mxu0 0.0
        %2555 = vmatpush1.xpose.msra.mxu0 0.0
        %2556 = vmatprep.subr.mxu0 0.0
        %2557 = vmatpush1.xpose.msra.mxu0 0.0
        %2558 = vmatprep.subr.mxu0 0.0
        %2559 = vmatpush1.xpose.msra.mxu0 0.0
        %2560 = vmatprep.subr.mxu0 0.0
        %2561 = vmatpush1.xpose.msra.mxu0 0.0
        %2562 = vmatprep.subr.mxu0 0.0
        %2563 = vmatpush1.xpose.msra.mxu0 0.0
        %2564 = vmatprep.subr.mxu0 0.0
        %2565 = vmatpush1.xpose.msra.mxu0 0.0
        %2566 = vmatprep.subr.mxu0 0.0
        %2567 = vmatpush1.xpose.msra.mxu0 0.0
        %2568 = vmatprep.mubr.f32.mxu0 0.0
        %2569 = vmatmul.mubr.f32.gmra.mrb[0].mxu0 %v2500
        %v2570 = vpop.f32.mrb[0].mxu0
        %v2571 = vadd.f32 0.0, %v2570
        %v2572 = vpop.f32.mrb[0].mxu0
        %2573 = vdwg.mxu0
        %v2574 = vsel %vm288, %v2337, -inf
        %2575 = vmax.xlane.f32.xlu0 %v2574
        %v2576 = vpop.xlane.xlu0 %2575
        %v2577 = vsel %vm288, %v2415, -inf
        %2578 = vmax.xlane.f32.xlu0 %v2577
        %v2579 = vpop.xlane.xlu0 %2578
        %v2580 = vsel %vm288, %v2493, -inf
        %2581 = vmax.xlane.f32.xlu0 %v2580
        %v2582 = vpop.xlane.xlu0 %2581
        %v2583 = vsel %vm288, %v2571, -inf
        %2584 = vmax.xlane.f32.xlu0 %v2583
        %v2585 = vpop.xlane.xlu0 %2584
        %v2586 = vsub.f32 %v2337, %v2576
        %v2587 = vsub.f32 %v2415, %v2579
        %v2588 = vsub.f32 %v2493, %v2582
        %v2589 = vsub.f32 %v2571, %v2585
        %v2590 = vmul.f32 %v2586, 1.442695
        %v2591 = vpow.pop %v2590
        %v2592 = vmul.f32 %v2587, 1.442695
        %v2593 = vpow.pop %v2592
        %v2594 = vmul.f32 %v2588, 1.442695
        %v2595 = vpow.pop %v2594
        %v2596 = vmul.f32 %v2589, 1.442695
        %v2597 = vpow.pop %v2596
        %v2598 = vsel %vm288, %v2591, 0.0
        %2599 = vadd.xlane.f32.xlu0 %v2598
        %v2600 = vpop.xlane.xlu0 %2599
        %v2601 = vsel %vm288, %v2593, 0.0
        %2602 = vadd.xlane.f32.xlu0 %v2601
        %v2603 = vpop.xlane.xlu0 %2602
        %v2604 = vsel %vm288, %v2595, 0.0
        %2605 = vadd.xlane.f32.xlu0 %v2604
        %v2606 = vpop.xlane.xlu0 %2605
        %v2607 = vsel %vm288, %v2597, 0.0
        %2608 = vadd.xlane.f32.xlu0 %v2607
        %v2609 = vpop.xlane.xlu0 %2608
        %v2610 = vrcp.pop %v2600
        %v2611 = vrcp.pop %v2603
        %v2612 = vrcp.pop %v2606
        %v2613 = vrcp.pop %v2609
        %2614 = vrot.lane.b32.xlu0 %v267, 40
        %v2615 = vpop.permute.xlu0 %2614
        %v2618 = vsel %vm288, %v2591, 0
        %2620 = vmatprep.subr.mxu0 0.0
        %2621 = vmatpush1.msra.mxu0 %v2615
        %2622 = vmatprep.subr.mxu0 0.0
        %2623 = vmatpush1.msra.mxu0 0.0
        %2624 = vmatprep.subr.mxu0 0.0
        %2625 = vmatpush1.msra.mxu0 0.0
        %2626 = vmatprep.subr.mxu0 0.0
        %2627 = vmatpush1.msra.mxu0 0.0
        %2628 = vmatprep.subr.mxu0 0.0
        %2629 = vmatpush1.msra.mxu0 0.0
        %2630 = vmatprep.subr.mxu0 0.0
        %2631 = vmatpush1.msra.mxu0 0.0
        %2632 = vmatprep.subr.mxu0 0.0
        %2633 = vmatpush1.msra.mxu0 0.0
        %2634 = vmatprep.subr.mxu0 0.0
        %2635 = vmatpush1.msra.mxu0 0.0
        %2636 = vmatprep.subr.mxu0 0.0
        %2637 = vmatpush1.msra.mxu0 0.0
        %2638 = vmatprep.subr.mxu0 0.0
        %2639 = vmatpush1.msra.mxu0 0.0
        %2640 = vmatprep.subr.mxu0 0.0
        %2641 = vmatpush1.msra.mxu0 0.0
        %2642 = vmatprep.subr.mxu0 0.0
        %2643 = vmatpush1.msra.mxu0 0.0
        %2644 = vmatprep.subr.mxu0 0.0
        %2645 = vmatpush1.msra.mxu0 0.0
        %2646 = vmatprep.subr.mxu0 0.0
        %2647 = vmatpush1.msra.mxu0 0.0
        %2648 = vmatprep.subr.mxu0 0.0
        %2649 = vmatpush1.msra.mxu0 0.0
        %2650 = vmatprep.subr.mxu0 0.0
        %2651 = vmatpush1.msra.mxu0 0.0
        %2652 = vmatprep.subr.mxu0 0.0
        %2653 = vmatpush1.msra.mxu0 0.0
        %2654 = vmatprep.subr.mxu0 0.0
        %2655 = vmatpush1.msra.mxu0 0.0
        %2656 = vmatprep.subr.mxu0 0.0
        %2657 = vmatpush1.msra.mxu0 0.0
        %2658 = vmatprep.subr.mxu0 0.0
        %2659 = vmatpush1.msra.mxu0 0.0
        %2660 = vmatprep.subr.mxu0 0.0
        %2661 = vmatpush1.msra.mxu0 0.0
        %2662 = vmatprep.subr.mxu0 0.0
        %2663 = vmatpush1.msra.mxu0 0.0
        %2664 = vmatprep.subr.mxu0 0.0
        %2665 = vmatpush1.msra.mxu0 0.0
        %2666 = vmatprep.subr.mxu0 0.0
        %2667 = vmatpush1.msra.mxu0 0.0
        %2668 = vmatprep.subr.mxu0 0.0
        %2669 = vmatpush1.msra.mxu0 0.0
        %2670 = vmatprep.subr.mxu0 0.0
        %2671 = vmatpush1.msra.mxu0 0.0
        %2672 = vmatprep.subr.mxu0 0.0
        %2673 = vmatpush1.msra.mxu0 0.0
        %2674 = vmatprep.subr.mxu0 0.0
        %2675 = vmatpush1.msra.mxu0 0.0
        %2676 = vmatprep.subr.mxu0 0.0
        %2677 = vmatpush1.msra.mxu0 0.0
        %2678 = vmatprep.subr.mxu0 0.0
        %2679 = vmatpush1.msra.mxu0 0.0
        %2680 = vmatprep.subr.mxu0 0.0
        %2681 = vmatpush1.msra.mxu0 0.0
        %2682 = vmatprep.subr.mxu0 0.0
        %2683 = vmatpush1.msra.mxu0 0.0
        %2684 = vmatprep.mubr.f32.mxu0 0.0
        %2685 = vmatmul.mubr.f32.gmra.mrb[0].mxu0 %v2618
        %v2686 = vpop.f32.mrb[0].mxu0
        %v2687 = vadd.f32 0.0, %v2686
        %v2688 = vpop.f32.mrb[0].mxu0
        %2689 = vdwg.mxu0
        %2690 = vrot.lane.b32.xlu0 %v272, 40
        %v2691 = vpop.permute.xlu0 %2690
        %v2694 = vsel %vm288, %v2593, 0
        %2696 = vmatprep.subr.mxu0 0.0
        %2697 = vmatpush1.msra.mxu0 %v2691
        %2698 = vmatprep.subr.mxu0 0.0
        %2699 = vmatpush1.msra.mxu0 0.0
        %2700 = vmatprep.subr.mxu0 0.0
        %2701 = vmatpush1.msra.mxu0 0.0
        %2702 = vmatprep.subr.mxu0 0.0
        %2703 = vmatpush1.msra.mxu0 0.0
        %2704 = vmatprep.subr.mxu0 0.0
        %2705 = vmatpush1.msra.mxu0 0.0
        %2706 = vmatprep.subr.mxu0 0.0
        %2707 = vmatpush1.msra.mxu0 0.0
        %2708 = vmatprep.subr.mxu0 0.0
        %2709 = vmatpush1.msra.mxu0 0.0
        %2710 = vmatprep.subr.mxu0 0.0
        %2711 = vmatpush1.msra.mxu0 0.0
        %2712 = vmatprep.subr.mxu0 0.0
        %2713 = vmatpush1.msra.mxu0 0.0
        %2714 = vmatprep.subr.mxu0 0.0
        %2715 = vmatpush1.msra.mxu0 0.0
        %2716 = vmatprep.subr.mxu0 0.0
        %2717 = vmatpush1.msra.mxu0 0.0
        %2718 = vmatprep.subr.mxu0 0.0
        %2719 = vmatpush1.msra.mxu0 0.0
        %2720 = vmatprep.subr.mxu0 0.0
        %2721 = vmatpush1.msra.mxu0 0.0
        %2722 = vmatprep.subr.mxu0 0.0
        %2723 = vmatpush1.msra.mxu0 0.0
        %2724 = vmatprep.subr.mxu0 0.0
        %2725 = vmatpush1.msra.mxu0 0.0
        %2726 = vmatprep.subr.mxu0 0.0
        %2727 = vmatpush1.msra.mxu0 0.0
        %2728 = vmatprep.subr.mxu0 0.0
        %2729 = vmatpush1.msra.mxu0 0.0
        %2730 = vmatprep.subr.mxu0 0.0
        %2731 = vmatpush1.msra.mxu0 0.0
        %2732 = vmatprep.subr.mxu0 0.0
        %2733 = vmatpush1.msra.mxu0 0.0
        %2734 = vmatprep.subr.mxu0 0.0
        %2735 = vmatpush1.msra.mxu0 0.0
        %2736 = vmatprep.subr.mxu0 0.0
        %2737 = vmatpush1.msra.mxu0 0.0
        %2738 = vmatprep.subr.mxu0 0.0
        %2739 = vmatpush1.msra.mxu0 0.0
        %2740 = vmatprep.subr.mxu0 0.0
        %2741 = vmatpush1.msra.mxu0 0.0
        %2742 = vmatprep.subr.mxu0 0.0
        %2743 = vmatpush1.msra.mxu0 0.0
        %2744 = vmatprep.subr.mxu0 0.0
        %2745 = vmatpush1.msra.mxu0 0.0
        %2746 = vmatprep.subr.mxu0 0.0
        %2747 = vmatpush1.msra.mxu0 0.0
        %2748 = vmatprep.subr.mxu0 0.0
        %2749 = vmatpush1.msra.mxu0 0.0
        %2750 = vmatprep.subr.mxu0 0.0
        %2751 = vmatpush1.msra.mxu0 0.0
        %2752 = vmatprep.subr.mxu0 0.0
        %2753 = vmatpush1.msra.mxu0 0.0
        %2754 = vmatprep.subr.mxu0 0.0
        %2755 = vmatpush1.msra.mxu0 0.0
        %2756 = vmatprep.subr.mxu0 0.0
        %2757 = vmatpush1.msra.mxu0 0.0
        %2758 = vmatprep.subr.mxu0 0.0
        %2759 = vmatpush1.msra.mxu0 0.0
        %2760 = vmatprep.mubr.f32.mxu0 0.0
        %2761 = vmatmul.mubr.f32.gmra.mrb[0].mxu0 %v2694
        %v2762 = vpop.f32.mrb[0].mxu0
        %v2763 = vadd.f32 0.0, %v2762
        %v2764 = vpop.f32.mrb[0].mxu0
        %2765 = vdwg.mxu0
        %2766 = vrot.lane.b32.xlu0 %v277, 40
        %v2767 = vpop.permute.xlu0 %2766
        %v2770 = vsel %vm288, %v2595, 0
        %2772 = vmatprep.subr.mxu0 0.0
        %2773 = vmatpush1.msra.mxu0 %v2767
        %2774 = vmatprep.subr.mxu0 0.0
        %2775 = vmatpush1.msra.mxu0 0.0
        %2776 = vmatprep.subr.mxu0 0.0
        %2777 = vmatpush1.msra.mxu0 0.0
        %2778 = vmatprep.subr.mxu0 0.0
        %2779 = vmatpush1.msra.mxu0 0.0
        %2780 = vmatprep.subr.mxu0 0.0
        %2781 = vmatpush1.msra.mxu0 0.0
        %2782 = vmatprep.subr.mxu0 0.0
        %2783 = vmatpush1.msra.mxu0 0.0
        %2784 = vmatprep.subr.mxu0 0.0
        %2785 = vmatpush1.msra.mxu0 0.0
        %2786 = vmatprep.subr.mxu0 0.0
        %2787 = vmatpush1.msra.mxu0 0.0
        %2788 = vmatprep.subr.mxu0 0.0
        %2789 = vmatpush1.msra.mxu0 0.0
        %2790 = vmatprep.subr.mxu0 0.0
        %2791 = vmatpush1.msra.mxu0 0.0
        %2792 = vmatprep.subr.mxu0 0.0
        %2793 = vmatpush1.msra.mxu0 0.0
        %2794 = vmatprep.subr.mxu0 0.0
        %2795 = vmatpush1.msra.mxu0 0.0
        %2796 = vmatprep.subr.mxu0 0.0
        %2797 = vmatpush1.msra.mxu0 0.0
        %2798 = vmatprep.subr.mxu0 0.0
        %2799 = vmatpush1.msra.mxu0 0.0
        %2800 = vmatprep.subr.mxu0 0.0
        %2801 = vmatpush1.msra.mxu0 0.0
        %2802 = vmatprep.subr.mxu0 0.0
        %2803 = vmatpush1.msra.mxu0 0.0
        %2804 = vmatprep.subr.mxu0 0.0
        %2805 = vmatpush1.msra.mxu0 0.0
        %2806 = vmatprep.subr.mxu0 0.0
        %2807 = vmatpush1.msra.mxu0 0.0
        %2808 = vmatprep.subr.mxu0 0.0
        %2809 = vmatpush1.msra.mxu0 0.0
        %2810 = vmatprep.subr.mxu0 0.0
        %2811 = vmatpush1.msra.mxu0 0.0
        %2812 = vmatprep.subr.mxu0 0.0
        %2813 = vmatpush1.msra.mxu0 0.0
        %2814 = vmatprep.subr.mxu0 0.0
        %2815 = vmatpush1.msra.mxu0 0.0
        %2816 = vmatprep.subr.mxu0 0.0
        %2817 = vmatpush1.msra.mxu0 0.0
        %2818 = vmatprep.subr.mxu0 0.0
        %2819 = vmatpush1.msra.mxu0 0.0
        %2820 = vmatprep.subr.mxu0 0.0
        %2821 = vmatpush1.msra.mxu0 0.0
        %2822 = vmatprep.subr.mxu0 0.0
        %2823 = vmatpush1.msra.mxu0 0.0
        %2824 = vmatprep.subr.mxu0 0.0
        %2825 = vmatpush1.msra.mxu0 0.0
        %2826 = vmatprep.subr.mxu0 0.0
        %2827 = vmatpush1.msra.mxu0 0.0
        %2828 = vmatprep.subr.mxu0 0.0
        %2829 = vmatpush1.msra.mxu0 0.0
        %2830 = vmatprep.subr.mxu0 0.0
        %2831 = vmatpush1.msra.mxu0 0.0
        %2832 = vmatprep.subr.mxu0 0.0
        %2833 = vmatpush1.msra.mxu0 0.0
        %2834 = vmatprep.subr.mxu0 0.0
        %2835 = vmatpush1.msra.mxu0 0.0
        %2836 = vmatprep.mubr.f32.mxu0 0.0
        %2837 = vmatmul.mubr.f32.gmra.mrb[0].mxu0 %v2770
        %v2838 = vpop.f32.mrb[0].mxu0
        %v2839 = vadd.f32 0.0, %v2838
        %v2840 = vpop.f32.mrb[0].mxu0
        %2841 = vdwg.mxu0
        %2842 = vrot.lane.b32.xlu0 %v282, 40
        %v2843 = vpop.permute.xlu0 %2842
        %v2846 = vsel %vm288, %v2597, 0
        %2848 = vmatprep.subr.mxu0 0.0
        %2849 = vmatpush1.msra.mxu0 %v2843
        %2850 = vmatprep.subr.mxu0 0.0
        %2851 = vmatpush1.msra.mxu0 0.0
        %2852 = vmatprep.subr.mxu0 0.0
        %2853 = vmatpush1.msra.mxu0 0.0
        %2854 = vmatprep.subr.mxu0 0.0
        %2855 = vmatpush1.msra.mxu0 0.0
        %2856 = vmatprep.subr.mxu0 0.0
        %2857 = vmatpush1.msra.mxu0 0.0
        %2858 = vmatprep.subr.mxu0 0.0
        %2859 = vmatpush1.msra.mxu0 0.0
        %2860 = vmatprep.subr.mxu0 0.0
        %2861 = vmatpush1.msra.mxu0 0.0
        %2862 = vmatprep.subr.mxu0 0.0
        %2863 = vmatpush1.msra.mxu0 0.0
        %2864 = vmatprep.subr.mxu0 0.0
        %2865 = vmatpush1.msra.mxu0 0.0
        %2866 = vmatprep.subr.mxu0 0.0
        %2867 = vmatpush1.msra.mxu0 0.0
        %2868 = vmatprep.subr.mxu0 0.0
        %2869 = vmatpush1.msra.mxu0 0.0
        %2870 = vmatprep.subr.mxu0 0.0
        %2871 = vmatpush1.msra.mxu0 0.0
        %2872 = vmatprep.subr.mxu0 0.0
        %2873 = vmatpush1.msra.mxu0 0.0
        %2874 = vmatprep.subr.mxu0 0.0
        %2875 = vmatpush1.msra.mxu0 0.0
        %2876 = vmatprep.subr.mxu0 0.0
        %2877 = vmatpush1.msra.mxu0 0.0
        %2878 = vmatprep.subr.mxu0 0.0
        %2879 = vmatpush1.msra.mxu0 0.0
        %2880 = vmatprep.subr.mxu0 0.0
        %2881 = vmatpush1.msra.mxu0 0.0
        %2882 = vmatprep.subr.mxu0 0.0
        %2883 = vmatpush1.msra.mxu0 0.0
        %2884 = vmatprep.subr.mxu0 0.0
        %2885 = vmatpush1.msra.mxu0 0.0
        %2886 = vmatprep.subr.mxu0 0.0
        %2887 = vmatpush1.msra.mxu0 0.0
        %2888 = vmatprep.subr.mxu0 0.0
        %2889 = vmatpush1.msra.mxu0 0.0
        %2890 = vmatprep.subr.mxu0 0.0
        %2891 = vmatpush1.msra.mxu0 0.0
        %2892 = vmatprep.subr.mxu0 0.0
        %2893 = vmatpush1.msra.mxu0 0.0
        %2894 = vmatprep.subr.mxu0 0.0
        %2895 = vmatpush1.msra.mxu0 0.0
        %2896 = vmatprep.subr.mxu0 0.0
        %2897 = vmatpush1.msra.mxu0 0.0
        %2898 = vmatprep.subr.mxu0 0.0
        %2899 = vmatpush1.msra.mxu0 0.0
        %2900 = vmatprep.subr.mxu0 0.0
        %2901 = vmatpush1.msra.mxu0 0.0
        %2902 = vmatprep.subr.mxu0 0.0
        %2903 = vmatpush1.msra.mxu0 0.0
        %2904 = vmatprep.subr.mxu0 0.0
        %2905 = vmatpush1.msra.mxu0 0.0
        %2906 = vmatprep.subr.mxu0 0.0
        %2907 = vmatpush1.msra.mxu0 0.0
        %2908 = vmatprep.subr.mxu0 0.0
        %2909 = vmatpush1.msra.mxu0 0.0
        %2910 = vmatprep.subr.mxu0 0.0
        %2911 = vmatpush1.msra.mxu0 0.0
        %2912 = vmatprep.mubr.f32.mxu0 0.0
        %2913 = vmatmul.mubr.f32.gmra.mrb[0].mxu0 %v2846
        %v2914 = vpop.f32.mrb[0].mxu0
        %v2915 = vadd.f32 0.0, %v2914
        %v2916 = vpop.f32.mrb[0].mxu0
        %2917 = vdwg.mxu0
        %v2918 = vmul.f32 %v2687, %v2610
        %v2919 = vmul.f32 %v2763, %v2611
        %v2920 = vmul.f32 %v2839, %v2612
        %v2921 = vmul.f32 %v2915, %v2613
        %2926 = vrot.lane.b32.xlu0 %v1598, 8
        %v2927 = vpop.permute.xlu0 %2926
        %2928 = vrot.lane.b32.xlu0 %v1599, 8
        %v2929 = vpop.permute.xlu0 %2928
        %2930 = vrot.lane.b32.xlu0 %v1600, 8
        %v2931 = vpop.permute.xlu0 %2930
        %2932 = vrot.lane.b32.xlu0 %v1601, 8
        %v2933 = vpop.permute.xlu0 %2932
        %2942 = vrot.lane.b32.xlu0 %v2258, 16
        %v2943 = vpop.permute.xlu0 %2942
        %2944 = vrot.lane.b32.xlu0 %v2259, 16
        %v2945 = vpop.permute.xlu0 %2944
        %2946 = vrot.lane.b32.xlu0 %v2260, 16
        %v2947 = vpop.permute.xlu0 %2946
        %2948 = vrot.lane.b32.xlu0 %v2261, 16
        %v2949 = vpop.permute.xlu0 %2948
        %2958 = vrot.lane.b32.xlu0 %v2918, 24
        %v2959 = vpop.permute.xlu0 %2958
        %2960 = vrot.lane.b32.xlu0 %v2919, 24
        %v2961 = vpop.permute.xlu0 %2960
        %2962 = vrot.lane.b32.xlu0 %v2920, 24
        %v2963 = vpop.permute.xlu0 %2962
        %2964 = vrot.lane.b32.xlu0 %v2921, 24
        %v2965 = vpop.permute.xlu0 %2964
        %v2970 = vsel %vm288, %v938, %v2927
        %v2971 = vsel %vm288, %v939, %v2929
        %v2972 = vsel %vm288, %v940, %v2931
        %v2973 = vsel %vm288, %v941, %v2933
        %vm2974 = vcmask 130048
        %v2975 = vsel %vm2974, %v2970, %v2943
        %v2976 = vsel %vm2974, %v2971, %v2945
        %v2977 = vsel %vm2974, %v2972, %v2947
        %v2978 = vsel %vm2974, %v2973, %v2949
        %vm2979 = vcmask 195584
        %v2980 = vsel %vm2979, %v2975, %v2959
        %v2981 = vsel %vm2979, %v2976, %v2961
        %v2982 = vsel %vm2979, %v2977, %v2963
        %v2983 = vsel %vm2979, %v2978, %v2965
        %2984 = vrot.lane.b32.xlu0 %v267, 32
        %v2985 = vpop.permute.xlu0 %2984
        %2986 = vrot.lane.b32.xlu0 %v272, 32
        %v2987 = vpop.permute.xlu0 %2986
        %2988 = vrot.lane.b32.xlu0 %v277, 32
        %v2989 = vpop.permute.xlu0 %2988
        %2990 = vrot.lane.b32.xlu0 %v282, 32
        %v2991 = vpop.permute.xlu0 %2990
        %v2996 = vadd.f32 %v2980, %v2985
        %v2997 = vadd.f32 %v2981, %v2987
        %v2998 = vadd.f32 %v2982, %v2989
        %v2999 = vadd.f32 %v2983, %v2991
        %v3000 = vtanh.pop %v2996
        %v3001 = vtanh.pop %v2997
        %v3002 = vtanh.pop %v2998
        %v3003 = vtanh.pop %v2999
        %3004 = vst.msk [vmem:[%s176] sm:$0xff] %vm187, %v3000
        %3005 = vst.msk [vmem:[%s176 + $0x8] sm:$0xff] %vm187, %v3001
        %3006 = vst.msk [vmem:[%s176 + $0x10] sm:$0xff] %vm187, %v3002
        %3007 = vst.msk [vmem:[%s176 + $0x18] sm:$0xff] %vm187, %v3003
        %s3008 = sand.u32 %s75, 1
        %s3009 = scalar_lea.sflag [#allocation4], %s3008
        %s3010 = sand.u32 %s75, 1
        %s3011 = smul.addr %s3010, 32
        %s3012 = scalar_lea.vmem [#allocation7], %s3011
        // Predicated region
        $region37: #{tpu_custom_call.1} parent=27 // pred_check
          %p3013 = pneg %p85
        $region38: #{tpu_custom_call.1} parent=27 // pred_check_branch
          %3015 = sbr.rel (%p3013) target = $region40
        $region39: #{tpu_custom_call.1} parent=27 // pred_region
          %s3016 = smul.u32 4, %s20
          %s3018 = ssub.s32 512, 512
          %3019 = vsyncadd %s3009, %s3018
          %s3020 = smul.addr %s3016, 128
          %s3021 = scalar_lea.hbm %s2, %s3020
          %s3022 = sshll.u32 %s3012, 4
          %s3023 = int_to_ptr.vmem [resolvable:$true] %s3022
          %3028 = dma.vmem_to_hbm [thread:$0]  %s3023, 512, %s3021, %s3009, 128, 128, 8
        $region40: #{tpu_custom_call.1} parent=27 // pred_fallthru
          _
      $region28: #{tpu_custom_call.1} parent=5 // pred_fallthru
        _
      %p3029 = scmp.le.s32.totalorder 2, %s15
      // Predicated region
      $region41: #{tpu_custom_call.1} parent=5 // pred_check
        %p3030 = pneg %p3029
      $region42: #{tpu_custom_call.1} parent=5 // pred_check_branch
        %3032 = sbr.rel (%p3030) target = $region44
      $region43: #{tpu_custom_call.1} parent=5 // pred_region
        %s3033 = ssub.s32 %s15, 2
        // Predicated region
        $region45: #{tpu_custom_call.1} parent=43 // pred_check
          %p3034 = pneg %p91
        $region46: #{tpu_custom_call.1} parent=43 // pred_check_branch
          %3036 = sbr.rel (%p3034) target = $region48
        $region47: #{tpu_custom_call.1} parent=43 // pred_region
          %s3037 = sand.u32 %s76, 1
          %s3038 = scalar_lea.sflag [#allocation4], %s3037
          %s3039 = sand.u32 %s76, 1
          %s3040 = smul.addr %s3039, 32
          %s3041 = scalar_lea.vmem [#allocation7], %s3040
          %3042 = dma.done %s3038, 512
        $region48: #{tpu_custom_call.1} parent=43 // pred_fallthru
          _
      $region44: #{tpu_custom_call.1} parent=5 // pred_fallthru
        _
    $region6: #{tpu_custom_call.1} parent=1 // loop_footer
      %s19 = sadd.s32 1, %s15
    $region7: #{tpu_custom_call.1} parent=1 // loop_footer_branch
      %14 = sbr.rel target = $region3
    $region8: #{tpu_custom_call.1} parent=1 // loop_exit
      _
    %3043 = vsyncpa [#allocation3], 1
    %s3044 = scalar_lea.sflag [#allocation3], 1
    %3045 = vsyncpa %s3044, 1
    %3046 = vsyncpa [#allocation6], 1
    %3047 = vsyncpa [#allocation4], 1
    %s3048 = scalar_lea.sflag [#allocation4], 1
    %3049 = vsyncpa %s3048, 1

// kernel: tpu_custom_call.1
$region0: #{tpu_custom_call.1}
  #allocation0 [shape = 'u32[]', space=smem, size = 0x4, offset = 0x4, fixed_abs, tag = 'smem constant byte address 0x4 - core index']
  #allocation1 [shape = 'u32[144,128]{1,0:T(1,128)}', space=vmem, size = 0x12000, scoped, tag = 'internal scratch']
  %s0 = inlined_call_operand.hbm [shape: f32[8,8,32], index: 0, kind: input, shape index: {}]
  %s1 = inlined_call_operand.hbm [shape: f32[32,128], index: 1, kind: input, shape index: {}]
  %s2 = inlined_call_operand.hbm [shape: f32[8,8,32], index: 2, kind: output, shape index: {}]
  %s3 = sld [smem:[#allocation0]]
  $region49: #{tpu_custom_call.1} parent=0
    _
  %s5 = ssub.s32 1, %s3
  %s6 = scalar_select 0, %s5, %s3
  $region1: #{tpu_custom_call.1} parent=0
    #allocation2 [shape = 'u8[32768]{0}', space=vmem, size = 0x8000, scoped, tag = 'input window, operand 0']
    #allocation3 [shape = 's32[2]{0}', space=sflag, size = 0x8, scoped, tag = 'scoped memory for tpu_custom_call.1']
    #allocation4 [shape = 's32[2]{0}', space=sflag, size = 0x8, scoped, tag = 'scoped memory for tpu_custom_call.1']
    #allocation5 [shape = 'u8[16384]{0}', space=vmem, size = 0x4000, scoped, tag = 'input window, operand 1, single buffered']
    #allocation6 [shape = 's32[1]{0}', space=sflag, size = 0x4, scoped, tag = 'scoped memory for tpu_custom_call.1']
    #allocation7 [shape = 'u8[32768]{0}', space=vmem, size = 0x8000, scoped, tag = 'output window, operand 0']
    %7 = vsyncpa [#allocation3], 0
    %s8 = scalar_lea.sflag [#allocation3], 1
    %9 = vsyncpa %s8, 0
    %10 = vsyncpa [#allocation6], 0
    %11 = vsyncpa [#allocation4], 0
    %s12 = scalar_lea.sflag [#allocation4], 1
    %13 = vsyncpa %s12, 0
    loop: start=0, step=1, limit=4
    $region2: #{tpu_custom_call.1} parent=1 // loop_pre_header
      _
    $region3: #{tpu_custom_call.1} parent=1 // loop_header
      %s15 = sphi 0, %s19
      %p16 = scmp.ge.s32.totalorder %s15, 4
      %s25 = sphi 0, %s27
      %s28 = sphi 0, %s25
      %s29 = sphi 0, %s28
      %s45 = sphi 0, %s29
      %s49 = sphi 0, %s49
      %s51 = sphi 0, %s49
      %s52 = sphi 0, %s51
      %s66 = sphi 0, %s52
      %s72 = sphi 0, %s74
      %s75 = sphi 0, %s72
      %s76 = sphi 0, %s75
      %s92 = sphi 0, %s76
    $region4: #{tpu_custom_call.1} parent=1 // loop_header_branch
      %18 = sbr.rel (%p16) target = $region8
    $region5: #{tpu_custom_call.1} parent=1 // loop_body
      %s20 = ssub.s32 %s15, 1
      %s21 = ssub.s32 %s15, 2
      %s22 = sadd.s32 %s15, 1
      %s23 = ssub.s32 %s15, %s22
      %p24 = scmp.eq.s32.totalorder %s23, 0
      %s26 = sadd.s32 %s25, 1
      %s27 = scalar_select %p24, %s25, %s26
      %p30 = pneg %p24
      %p31 = scmp.eq.s32.totalorder %s15, 1
      %p32 = por %p30, %p31
      %p33 = scmp.ne.s32.totalorder %s25, %s28
      %p34 = scmp.eq.s32.totalorder %s15, 0
      %p35 = por %p33, %p34
      %p36 = scmp.ne.s32.totalorder %s25, %s28
      %p37 = scmp.eq.s32.totalorder %s20, 1
      %p38 = por %p36, %p37
      %p39 = scmp.ne.s32.totalorder %s28, %s29
      %p40 = scmp.eq.s32.totalorder %s20, 0
      %p41 = por %p39, %p40
      %p42 = scmp.ne.s32.totalorder %s28, %s29
      %p43 = scmp.eq.s32.totalorder %s21, 1
      %p44 = por %p42, %p43
      %p46 = scmp.ne.s32.totalorder %s29, %s45
      %p47 = scmp.eq.s32.totalorder %s21, 0
      %p48 = por %p46, %p47
      %s50 = sadd.s32 %s49, 1
      %p53 = scmp.eq.s32.totalorder %s15, 1
      %p54 = scmp.ne.s32.totalorder %s49, %s51
      %p55 = scmp.eq.s32.totalorder %s15, 0
      %p56 = por %p54, %p55
      %p57 = scmp.ne.s32.totalorder %s49, %s51
      %p58 = scmp.eq.s32.totalorder %s20, 1
      %p59 = por %p57, %p58
      %p60 = scmp.ne.s32.totalorder %s51, %s52
      %p61 = scmp.eq.s32.totalorder %s20, 0
      %p62 = por %p60, %p61
      %p63 = scmp.ne.s32.totalorder %s51, %s52
      %p64 = scmp.eq.s32.totalorder %s21, 1
      %p65 = por %p63, %p64
      %p67 = scmp.ne.s32.totalorder %s52, %s66
      %p68 = scmp.eq.s32.totalorder %s21, 0
      %p69 = por %p67, %p68
      %s70 = ssub.s32 %s15, %s22
      %p71 = scmp.eq.s32.totalorder %s70, 0
      %s73 = sadd.s32 %s72, 1
      %s74 = scalar_select %p71, %s72, %s73
      %p77 = pneg %p71
      %p78 = scmp.eq.s32.totalorder %s15, 1
      %p79 = por %p77, %p78
      %p80 = scmp.ne.s32.totalorder %s72, %s75
      %p81 = scmp.eq.s32.totalorder %s15, 0
      %p82 = por %p80, %p81
      %p83 = scmp.ne.s32.totalorder %s72, %s75
      %p84 = scmp.eq.s32.totalorder %s20, 1
      %p85 = por %p83, %p84
      %p86 = scmp.ne.s32.totalorder %s75, %s76
      %p87 = scmp.eq.s32.totalorder %s20, 0
      %p88 = por %p86, %p87
      %p89 = scmp.ne.s32.totalorder %s75, %s76
      %p90 = scmp.eq.s32.totalorder %s21, 1
      %p91 = por %p89, %p90
      %p93 = scmp.ne.s32.totalorder %s76, %s92
      %p94 = scmp.eq.s32.totalorder %s21, 0
      %p95 = por %p93, %p94
      %p96 = scmp.le.s32.totalorder 1, %s15
      %p97 = scmp.lt.s32.totalorder %s15, 3
      %p98 = pnand %p96, %p97
      %p99 = pneg %p98
      // Predicated region
      $region9: #{tpu_custom_call.1} parent=5 // pred_check
        _
      $region10: #{tpu_custom_call.1} parent=5 // pred_check_branch
        %101 = sbr.rel (%p98) target = $region12
      $region11: #{tpu_custom_call.1} parent=5 // pred_region
        %s102 = ssub.s32 %s15, 1
        // Predicated region
        $region13: #{tpu_custom_call.1} parent=11 // pred_check
          %p103 = pneg %p62
        $region14: #{tpu_custom_call.1} parent=11 // pred_check_branch
          %105 = sbr.rel (%p103) target = $region16
        $region15: #{tpu_custom_call.1} parent=11 // pred_region
          %s107 = ssub.s32 512, 512
          %108 = vsyncadd [#allocation6], %s107
          %s109 = sshll.u32 [#allocation5], 4
          %s110 = int_to_ptr.vmem [resolvable:$true] %s109
          %115 = dma.hbm_to_vmem [thread:$0]  %s1, 512, %s110, [#allocation6], 128, 128, 8
        $region16: #{tpu_custom_call.1} parent=11 // pred_fallthru
          _
      $region12: #{tpu_custom_call.1} parent=5 // pred_fallthru
        _
      %p116 = scmp.lt.s32.totalorder %s15, 2
      // Predicated region
      $region17: #{tpu_custom_call.1} parent=5 // pred_check
        %p117 = pneg %p116
      $region18: #{tpu_custom_call.1} parent=5 // pred_check_branch
        %119 = sbr.rel (%p117) target = $region20
      $region19: #{tpu_custom_call.1} parent=5 // pred_region
        // Predicated region
        $region21: #{tpu_custom_call.1} parent=19 // pred_check
          %p120 = pneg %p35
        $region22: #{tpu_custom_call.1} parent=19 // pred_check_branch
          %122 = sbr.rel (%p120) target = $region24
        $region23: #{tpu_custom_call.1} parent=19 // pred_region
          %s123 = sand.u32 %s25, 1
          %s124 = scalar_lea.sflag [#allocation3], %s123
          %s125 = sand.u32 %s25, 1
          %s126 = smul.addr %s125, 32
          %s127 = scalar_lea.vmem [#allocation2], %s126
          %s128 = smul.u32 4, %s15
          %s130 = ssub.s32 512, 512
          %131 = vsyncadd %s124, %s130
          %s132 = smul.addr %s128, 128
          %s133 = scalar_lea.hbm %s0, %s132
          %s134 = sshll.u32 %s127, 4
          %s135 = int_to_ptr.vmem [resolvable:$true] %s134
          %140 = dma.hbm_to_vmem [thread:$0]  %s133, 512, %s135, %s124, 128, 128, 8
        $region24: #{tpu_custom_call.1} parent=19 // pred_fallthru
          _
      $region20: #{tpu_custom_call.1} parent=5 // pred_fallthru
        _
      %p141 = scmp.le.s32.totalorder 1, %s15
      %p142 = scmp.lt.s32.totalorder %s15, 3
      %p143 = pnand %p141, %p142
      %p144 = pneg %p143
      // Predicated region
      $region25: #{tpu_custom_call.1} parent=5 // pred_check
        _
      $region26: #{tpu_custom_call.1} parent=5 // pred_check_branch
        %146 = sbr.rel (%p143) target = $region28
      $region27: #{tpu_custom_call.1} parent=5 // pred_region
        %s147 = ssub.s32 %s15, 1
        %s148 = sand.u32 %s28, 1
        %s149 = scalar_lea.sflag [#allocation3], %s148
        %s150 = sand.u32 %s28, 1
        %s151 = smul.addr %s150, 32
        %s152 = scalar_lea.vmem [#allocation2], %s151
        // Predicated region
        $region29: #{tpu_custom_call.1} parent=27 // pred_check
          %p153 = pneg %p41
        $region30: #{tpu_custom_call.1} parent=27 // pred_check_branch
          %155 = sbr.rel (%p153) target = $region32
        $region31: #{tpu_custom_call.1} parent=27 // pred_region
          %156 = dma.done %s149, 512
        $region32: #{tpu_custom_call.1} parent=27 // pred_fallthru
          _
        // Predicated region
        $region33: #{tpu_custom_call.1} parent=27 // pred_check
          %p157 = pneg %p62
        $region34: #{tpu_custom_call.1} parent=27 // pred_check_branch
          %159 = sbr.rel (%p157) target = $region36
        $region35: #{tpu_custom_call.1} parent=27 // pred_region
          %160 = dma.done [#allocation6], 512
        $region36: #{tpu_custom_call.1} parent=27 // pred_fallthru
          _
        %s161 = sand.u32 %s28, 1
        %s162 = scalar_lea.sflag [#allocation3], %s161
        %s163 = sand.u32 %s28, 1
        %s164 = smul.addr %s163, 32
        %s165 = scalar_lea.vmem [#allocation2], %s164
        %p166 = pneg %p41
        %p167 = pneg %p38
        %p168 = pneg %p62
        %p169 = pneg %p59
        %p170 = pneg %p88
        %p171 = pneg %p85
        %s172 = sand.u32 %s75, 1
        %s173 = scalar_lea.sflag [#allocation4], %s172
        %s174 = sand.u32 %s75, 1
        %s175 = smul.addr %s174, 32
        %s176 = scalar_lea.vmem [#allocation7], %s175
        %s177 = smul.u32 4, %s20
        %s178 = smul.u32 4, %s20
        %v179 = vld [vmem:[%s152] sm:$0xff]
        %v180 = vld [vmem:[%s152 + $0x8] sm:$0xff]
        %v181 = vld [vmem:[%s152 + $0x10] sm:$0xff]
        %v182 = vld [vmem:[%s152 + $0x18] sm:$0xff]
        %v183 = vld [vmem:[#allocation5] sm:$0xff]
        %v184 = vld [vmem:[#allocation5 + $0x8] sm:$0xff]
        %v185 = vld [vmem:[#allocation5 + $0x10] sm:$0xff]
        %v186 = vld [vmem:[#allocation5 + $0x18] sm:$0xff]
        %vm187 = vcmask 261120
        %v189 = vsel %vm187, %v179, 0
        %v192 = vsel %vm187, %v180, 0
        %v195 = vsel %vm187, %v181, 0
        %v198 = vsel %vm187, %v182, 0
        %200 = vmatprep.subr.mxu0 0.0
        %201 = vmatpush1.msra.mxu0 %v183
        %202 = vmatprep.subr.mxu0 0.0
        %203 = vmatpush1.msra.mxu0 %v184
        %204 = vmatprep.subr.mxu0 0.0
        %205 = vmatpush1.msra.mxu0 %v185
        %206 = vmatprep.subr.mxu0 0.0
        %207 = vmatpush1.msra.mxu0 %v186
        %208 = vmatprep.subr.mxu0 0.0
        %209 = vmatpush1.msra.mxu0 0.0
        %210 = vmatprep.subr.mxu0 0.0
        %211 = vmatpush1.msra.mxu0 0.0
        %212 = vmatprep.subr.mxu0 0.0
        %213 = vmatpush1.msra.mxu0 0.0
        %214 = vmatprep.subr.mxu0 0.0
        %215 = vmatpush1.msra.mxu0 0.0
        %216 = vmatprep.subr.mxu0 0.0
        %217 = vmatpush1.msra.mxu0 0.0
        %218 = vmatprep.subr.mxu0 0.0
        %219 = vmatpush1.msra.mxu0 0.0
        %220 = vmatprep.subr.mxu0 0.0
        %221 = vmatpush1.msra.mxu0 0.0
        %222 = vmatprep.subr.mxu0 0.0
        %223 = vmatpush1.msra.mxu0 0.0
        %224 = vmatprep.subr.mxu0 0.0
        %225 = vmatpush1.msra.mxu0 0.0
        %226 = vmatprep.subr.mxu0 0.0
        %227 = vmatpush1.msra.mxu0 0.0
        %228 = vmatprep.subr.mxu0 0.0
        %229 = vmatpush1.msra.mxu0 0.0
        %230 = vmatprep.subr.mxu0 0.0
        %231 = vmatpush1.msra.mxu0 0.0
        %232 = vmatprep.subr.mxu0 0.0
        %233 = vmatpush1.msra.mxu0 0.0
        %234 = vmatprep.subr.mxu0 0.0
        %235 = vmatpush1.msra.mxu0 0.0
        %236 = vmatprep.subr.mxu0 0.0
        %237 = vmatpush1.msra.mxu0 0.0
        %238 = vmatprep.subr.mxu0 0.0
        %239 = vmatpush1.msra.mxu0 0.0
        %240 = vmatprep.subr.mxu0 0.0
        %241 = vmatpush1.msra.mxu0 0.0
        %242 = vmatprep.subr.mxu0 0.0
        %243 = vmatpush1.msra.mxu0 0.0
        %244 = vmatprep.subr.mxu0 0.0
        %245 = vmatpush1.msra.mxu0 0.0
        %246 = vmatprep.subr.mxu0 0.0
        %247 = vmatpush1.msra.mxu0 0.0
        %248 = vmatprep.subr.mxu0 0.0
        %249 = vmatpush1.msra.mxu0 0.0
        %250 = vmatprep.subr.mxu0 0.0
        %251 = vmatpush1.msra.mxu0 0.0
        %252 = vmatprep.subr.mxu0 0.0
        %253 = vmatpush1.msra.mxu0 0.0
        %254 = vmatprep.subr.mxu0 0.0
        %255 = vmatpush1.msra.mxu0 0.0
        %256 = vmatprep.subr.mxu0 0.0
        %257 = vmatpush1.msra.mxu0 0.0
        %258 = vmatprep.subr.mxu0 0.0
        %259 = vmatpush1.msra.mxu0 0.0
        %260 = vmatprep.subr.mxu0 0.0
        %261 = vmatpush1.msra.mxu0 0.0
        %262 = vmatprep.subr.mxu0 0.0
        %263 = vmatpush1.msra.mxu0 0.0
        %264 = vmatprep.mubr.f32.mxu0 0.0
        %265 = vmatmul.mubr.f32.gmra.mrb[0].mxu0 %v189
        %v266 = vpop.f32.mrb[0].mxu0
        %v267 = vadd.f32 0.0, %v266
        %v268 = vpop.f32.mrb[0].mxu0
        %269 = vmatprep.mubr.f32.mxu0 0.0
        %270 = vmatmul.mubr.f32.gmra.mrb[0].mxu0 %v192
        %v271 = vpop.f32.mrb[0].mxu0
        %v272 = vadd.f32 0.0, %v271
        %v273 = vpop.f32.mrb[0].mxu0
        %274 = vmatprep.mubr.f32.mxu0 0.0
        %275 = vmatmul.mubr.f32.gmra.mrb[0].mxu0 %v195
        %v276 = vpop.f32.mrb[0].mxu0
        %v277 = vadd.f32 0.0, %v276
        %v278 = vpop.f32.mrb[0].mxu0
        %279 = vmatprep.mubr.f32.mxu0 0.0
        %280 = vmatmul.mubr.f32.gmra.mrb[0].mxu0 %v198
        %v281 = vpop.f32.mrb[0].mxu0
        %v282 = vadd.f32 0.0, %v281
        %v283 = vpop.f32.mrb[0].mxu0
        %284 = vdwg.mxu0
        %286 = vrot.lane.b32.xlu0 %v267, 96
        %v287 = vpop.permute.xlu0 %286
        %vm288 = vcmask 64512
        %v289 = vsel %vm288, %v267, 0
        %v291 = vsel %vm288, %v287, 0
        %293 = vmatprep.subr.mxu0 0.0
        %294 = vmatpush1.xpose.msra.mxu0 %v291
        %295 = vmatprep.subr.mxu0 0.0
        %296 = vmatpush1.xpose.msra.mxu0 0.0
        %297 = vmatprep.subr.mxu0 0.0
        %298 = vmatpush1.xpose.msra.mxu0 0.0
        %299 = vmatprep.subr.mxu0 0.0
        %300 = vmatpush1.xpose.msra.mxu0 0.0
        %301 = vmatprep.subr.mxu0 0.0
        %302 = vmatpush1.xpose.msra.mxu0 0.0
        %303 = vmatprep.subr.mxu0 0.0
        %304 = vmatpush1.xpose.msra.mxu0 0.0
        %305 = vmatprep.subr.mxu0 0.0
        %306 = vmatpush1.xpose.msra.mxu0 0.0
        %307 = vmatprep.subr.mxu0 0.0
        %308 = vmatpush1.xpose.msra.mxu0 0.0
        %309 = vmatprep.subr.mxu0 0.0
        %310 = vmatpush1.xpose.msra.mxu0 0.0
        %311 = vmatprep.subr.mxu0 0.0
        %312 = vmatpush1.xpose.msra.mxu0 0.0
        %313 = vmatprep.subr.mxu0 0.0
        %314 = vmatpush1.xpose.msra.mxu0 0.0
        %315 = vmatprep.subr.mxu0 0.0
        %316 = vmatpush1.xpose.msra.mxu0 0.0
        %317 = vmatprep.subr.mxu0 0.0
        %318 = vmatpush1.xpose.msra.mxu0 0.0
        %319 = vmatprep.subr.mxu0 0.0
        %320 = vmatpush1.xpose.msra.mxu0 0.0
        %321 = vmatprep.subr.mxu0 0.0
        %322 = vmatpush1.xpose.msra.mxu0 0.0
        %323 = vmatprep.subr.mxu0 0.0
        %324 = vmatpush1.xpose.msra.mxu0 0.0
        %325 = vmatprep.subr.mxu0 0.0
        %326 = vmatpush1.xpose.msra.mxu0 0.0
        %327 = vmatprep.subr.mxu0 0.0
        %328 = vmatpush1.xpose.msra.mxu0 0.0
        %329 = vmatprep.subr.mxu0 0.0
        %330 = vmatpush1.xpose.msra.mxu0 0.0
        %331 = vmatprep.subr.mxu0 0.0
        %332 = vmatpush1.xpose.msra.mxu0 0.0
        %333 = vmatprep.subr.mxu0 0.0
        %334 = vmatpush1.xpose.msra.mxu0 0.0
        %335 = vmatprep.subr.mxu0 0.0
        %336 = vmatpush1.xpose.msra.mxu0 0.0
        %337 = vmatprep.subr.mxu0 0.0
        %338 = vmatpush1.xpose.msra.mxu0 0.0
        %339 = vmatprep.subr.mxu0 0.0
        %340 = vmatpush1.xpose.msra.mxu0 0.0
        %341 = vmatprep.subr.mxu0 0.0
        %342 = vmatpush1.xpose.msra.mxu0 0.0
        %343 = vmatprep.subr.mxu0 0.0
        %344 = vmatpush1.xpose.msra.mxu0 0.0
        %345 = vmatprep.subr.mxu0 0.0
        %346 = vmatpush1.xpose.msra.mxu0 0.0
        %347 = vmatprep.subr.mxu0 0.0
        %348 = vmatpush1.xpose.msra.mxu0 0.0
        %349 = vmatprep.subr.mxu0 0.0
        %350 = vmatpush1.xpose.msra.mxu0 0.0
        %351 = vmatprep.subr.mxu0 0.0
        %352 = vmatpush1.xpose.msra.mxu0 0.0
        %353 = vmatprep.subr.mxu0 0.0
        %354 = vmatpush1.xpose.msra.mxu0 0.0
        %355 = vmatprep.subr.mxu0 0.0
        %356 = vmatpush1.xpose.msra.mxu0 0.0
        %357 = vmatprep.mubr.f32.mxu0 0.0
        %358 = vmatmul.mubr.f32.gmra.mrb[0].mxu0 %v289
        %v359 = vpop.f32.mrb[0].mxu0
        %v360 = vadd.f32 0.0, %v359
        %v361 = vpop.f32.mrb[0].mxu0
        %362 = vdwg.mxu0
        %364 = vrot.lane.b32.xlu0 %v272, 96
        %v365 = vpop.permute.xlu0 %364
        %v366 = vsel %vm288, %v272, 0
        %v368 = vsel %vm288, %v365, 0
        %370 = vmatprep.subr.mxu0 0.0
        %371 = vmatpush1.xpose.msra.mxu0 %v368
        %372 = vmatprep.subr.mxu0 0.0
        %373 = vmatpush1.xpose.msra.mxu0 0.0
        %374 = vmatprep.subr.mxu0 0.0
        %375 = vmatpush1.xpose.msra.mxu0 0.0
        %376 = vmatprep.subr.mxu0 0.0
        %377 = vmatpush1.xpose.msra.mxu0 0.0
        %378 = vmatprep.subr.mxu0 0.0
        %379 = vmatpush1.xpose.msra.mxu0 0.0
        %380 = vmatprep.subr.mxu0 0.0
        %381 = vmatpush1.xpose.msra.mxu0 0.0
        %382 = vmatprep.subr.mxu0 0.0
        %383 = vmatpush1.xpose.msra.mxu0 0.0
        %384 = vmatprep.subr.mxu0 0.0
        %385 = vmatpush1.xpose.msra.mxu0 0.0
        %386 = vmatprep.subr.mxu0 0.0
        %387 = vmatpush1.xpose.msra.mxu0 0.0
        %388 = vmatprep.subr.mxu0 0.0
        %389 = vmatpush1.xpose.msra.mxu0 0.0
        %390 = vmatprep.subr.mxu0 0.0
        %391 = vmatpush1.xpose.msra.mxu0 0.0
        %392 = vmatprep.subr.mxu0 0.0
        %393 = vmatpush1.xpose.msra.mxu0 0.0
        %394 = vmatprep.subr.mxu0 0.0
        %395 = vmatpush1.xpose.msra.mxu0 0.0
        %396 = vmatprep.subr.mxu0 0.0
        %397 = vmatpush1.xpose.msra.mxu0 0.0
        %398 = vmatprep.subr.mxu0 0.0
        %399 = vmatpush1.xpose.msra.mxu0 0.0
        %400 = vmatprep.subr.mxu0 0.0
        %401 = vmatpush1.xpose.msra.mxu0 0.0
        %402 = vmatprep.subr.mxu0 0.0
        %403 = vmatpush1.xpose.msra.mxu0 0.0
        %404 = vmatprep.subr.mxu0 0.0
        %405 = vmatpush1.xpose.msra.mxu0 0.0
        %406 = vmatprep.subr.mxu0 0.0
        %407 = vmatpush1.xpose.msra.mxu0 0.0
        %408 = vmatprep.subr.mxu0 0.0
        %409 = vmatpush1.xpose.msra.mxu0 0.0
        %410 = vmatprep.subr.mxu0 0.0
        %411 = vmatpush1.xpose.msra.mxu0 0.0
        %412 = vmatprep.subr.mxu0 0.0
        %413 = vmatpush1.xpose.msra.mxu0 0.0
        %414 = vmatprep.subr.mxu0 0.0
        %415 = vmatpush1.xpose.msra.mxu0 0.0
        %416 = vmatprep.subr.mxu0 0.0
        %417 = vmatpush1.xpose.msra.mxu0 0.0
        %418 = vmatprep.subr.mxu0 0.0
        %419 = vmatpush1.xpose.msra.mxu0 0.0
        %420 = vmatprep.subr.mxu0 0.0
        %421 = vmatpush1.xpose.msra.mxu0 0.0
        %422 = vmatprep.subr.mxu0 0.0
        %423 = vmatpush1.xpose.msra.mxu0 0.0
        %424 = vmatprep.subr.mxu0 0.0
        %425 = vmatpush1.xpose.msra.mxu0 0.0
        %426 = vmatprep.subr.mxu0 0.0
        %427 = vmatpush1.xpose.msra.mxu0 0.0
        %428 = vmatprep.subr.mxu0 0.0
        %429 = vmatpush1.xpose.msra.mxu0 0.0
        %430 = vmatprep.subr.mxu0 0.0
        %431 = vmatpush1.xpose.msra.mxu0 0.0
        %432 = vmatprep.subr.mxu0 0.0
        %433 = vmatpush1.xpose.msra.mxu0 0.0
        %434 = vmatprep.mubr.f32.mxu0 0.0
        %435 = vmatmul.mubr.f32.gmra.mrb[0].mxu0 %v366
        %v436 = vpop.f32.mrb[0].mxu0
        %v437 = vadd.f32 0.0, %v436
        %v438 = vpop.f32.mrb[0].mxu0
        %439 = vdwg.mxu0
        %441 = vrot.lane.b32.xlu0 %v277, 96
        %v442 = vpop.permute.xlu0 %441
        %v443 = vsel %vm288, %v277, 0
        %v445 = vsel %vm288, %v442, 0
        %447 = vmatprep.subr.mxu0 0.0
        %448 = vmatpush1.xpose.msra.mxu0 %v445
        %449 = vmatprep.subr.mxu0 0.0
        %450 = vmatpush1.xpose.msra.mxu0 0.0
        %451 = vmatprep.subr.mxu0 0.0
        %452 = vmatpush1.xpose.msra.mxu0 0.0
        %453 = vmatprep.subr.mxu0 0.0
        %454 = vmatpush1.xpose.msra.mxu0 0.0
        %455 = vmatprep.subr.mxu0 0.0
        %456 = vmatpush1.xpose.msra.mxu0 0.0
        %457 = vmatprep.subr.mxu0 0.0
        %458 = vmatpush1.xpose.msra.mxu0 0.0
        %459 = vmatprep.subr.mxu0 0.0
        %460 = vmatpush1.xpose.msra.mxu0 0.0
        %461 = vmatprep.subr.mxu0 0.0
        %462 = vmatpush1.xpose.msra.mxu0 0.0
        %463 = vmatprep.subr.mxu0 0.0
        %464 = vmatpush1.xpose.msra.mxu0 0.0
        %465 = vmatprep.subr.mxu0 0.0
        %466 = vmatpush1.xpose.msra.mxu0 0.0
        %467 = vmatprep.subr.mxu0 0.0
        %468 = vmatpush1.xpose.msra.mxu0 0.0
        %469 = vmatprep.subr.mxu0 0.0
        %470 = vmatpush1.xpose.msra.mxu0 0.0
        %471 = vmatprep.subr.mxu0 0.0
        %472 = vmatpush1.xpose.msra.mxu0 0.0
        %473 = vmatprep.subr.mxu0 0.0
        %474 = vmatpush1.xpose.msra.mxu0 0.0
        %475 = vmatprep.subr.mxu0 0.0
        %476 = vmatpush1.xpose.msra.mxu0 0.0
        %477 = vmatprep.subr.mxu0 0.0
        %478 = vmatpush1.xpose.msra.mxu0 0.0
        %479 = vmatprep.subr.mxu0 0.0
        %480 = vmatpush1.xpose.msra.mxu0 0.0
        %481 = vmatprep.subr.mxu0 0.0
        %482 = vmatpush1.xpose.msra.mxu0 0.0
        %483 = vmatprep.subr.mxu0 0.0
        %484 = vmatpush1.xpose.msra.mxu0 0.0
        %485 = vmatprep.subr.mxu0 0.0
        %486 = vmatpush1.xpose.msra.mxu0 0.0
        %487 = vmatprep.subr.mxu0 0.0
        %488 = vmatpush1.xpose.msra.mxu0 0.0
        %489 = vmatprep.subr.mxu0 0.0
        %490 = vmatpush1.xpose.msra.mxu0 0.0
        %491 = vmatprep.subr.mxu0 0.0
        %492 = vmatpush1.xpose.msra.mxu0 0.0
        %493 = vmatprep.subr.mxu0 0.0
        %494 = vmatpush1.xpose.msra.mxu0 0.0
        %495 = vmatprep.subr.mxu0 0.0
        %496 = vmatpush1.xpose.msra.mxu0 0.0
        %497 = vmatprep.subr.mxu0 0.0
        %498 = vmatpush1.xpose.msra.mxu0 0.0
        %499 = vmatprep.subr.mxu0 0.0
        %500 = vmatpush1.xpose.msra.mxu0 0.0
        %501 = vmatprep.subr.mxu0 0.0
        %502 = vmatpush1.xpose.msra.mxu0 0.0
        %503 = vmatprep.subr.mxu0 0.0
        %504 = vmatpush1.xpose.msra.mxu0 0.0
        %505 = vmatprep.subr.mxu0 0.0
        %506 = vmatpush1.xpose.msra.mxu0 0.0
        %507 = vmatprep.subr.mxu0 0.0
        %508 = vmatpush1.xpose.msra.mxu0 0.0
        %509 = vmatprep.subr.mxu0 0.0
        %510 = vmatpush1.xpose.msra.mxu0 0.0
        %511 = vmatprep.mubr.f32.mxu0 0.0
        %512 = vmatmul.mubr.f32.gmra.mrb[0].mxu0 %v443
        %v513 = vpop.f32.mrb[0].mxu0
        %v514 = vadd.f32 0.0, %v513
        %v515 = vpop.f32.mrb[0].mxu0
        %516 = vdwg.mxu0
        %518 = vrot.lane.b32.xlu0 %v282, 96
        %v519 = vpop.permute.xlu0 %518
        %v520 = vsel %vm288, %v282, 0
        %v522 = vsel %vm288, %v519, 0
        %524 = vmatprep.subr.mxu0 0.0
        %525 = vmatpush1.xpose.msra.mxu0 %v522
        %526 = vmatprep.subr.mxu0 0.0
        %527 = vmatpush1.xpose.msra.mxu0 0.0
        %528 = vmatprep.subr.mxu0 0.0
        %529 = vmatpush1.xpose.msra.mxu0 0.0
        %530 = vmatprep.subr.mxu0 0.0
        %531 = vmatpush1.xpose.msra.mxu0 0.0
        %532 = vmatprep.subr.mxu0 0.0
        %533 = vmatpush1.xpose.msra.mxu0 0.0
        %534 = vmatprep.subr.mxu0 0.0
        %535 = vmatpush1.xpose.msra.mxu0 0.0
        %536 = vmatprep.subr.mxu0 0.0
        %537 = vmatpush1.xpose.msra.mxu0 0.0
        %538 = vmatprep.subr.mxu0 0.0
        %539 = vmatpush1.xpose.msra.mxu0 0.0
        %540 = vmatprep.subr.mxu0 0.0
        %541 = vmatpush1.xpose.msra.mxu0 0.0
        %542 = vmatprep.subr.mxu0 0.0
        %543 = vmatpush1.xpose.msra.mxu0 0.0
        %544 = vmatprep.subr.mxu0 0.0
        %545 = vmatpush1.xpose.msra.mxu0 0.0
        %546 = vmatprep.subr.mxu0 0.0
        %547 = vmatpush1.xpose.msra.mxu0 0.0
        %548 = vmatprep.subr.mxu0 0.0
        %549 = vmatpush1.xpose.msra.mxu0 0.0
        %550 = vmatprep.subr.mxu0 0.0
        %551 = vmatpush1.xpose.msra.mxu0 0.0
        %552 = vmatprep.subr.mxu0 0.0
        %553 = vmatpush1.xpose.msra.mxu0 0.0
        %554 = vmatprep.subr.mxu0 0.0
        %555 = vmatpush1.xpose.msra.mxu0 0.0
        %556 = vmatprep.subr.mxu0 0.0
        %557 = vmatpush1.xpose.msra.mxu0 0.0
        %558 = vmatprep.subr.mxu0 0.0
        %559 = vmatpush1.xpose.msra.mxu0 0.0
        %560 = vmatprep.subr.mxu0 0.0
        %561 = vmatpush1.xpose.msra.mxu0 0.0
        %562 = vmatprep.subr.mxu0 0.0
        %563 = vmatpush1.xpose.msra.mxu0 0.0
        %564 = vmatprep.subr.mxu0 0.0
        %565 = vmatpush1.xpose.msra.mxu0 0.0
        %566 = vmatprep.subr.mxu0 0.0
        %567 = vmatpush1.xpose.msra.mxu0 0.0
        %568 = vmatprep.subr.mxu0 0.0
        %569 = vmatpush1.xpose.msra.mxu0 0.0
        %570 = vmatprep.subr.mxu0 0.0
        %571 = vmatpush1.xpose.msra.mxu0 0.0
        %572 = vmatprep.subr.mxu0 0.0
        %573 = vmatpush1.xpose.msra.mxu0 0.0
        %574 = vmatprep.subr.mxu0 0.0
        %575 = vmatpush1.xpose.msra.mxu0 0.0
        %576 = vmatprep.subr.mxu0 0.0
        %577 = vmatpush1.xpose.msra.mxu0 0.0
        %578 = vmatprep.subr.mxu0 0.0
        %579 = vmatpush1.xpose.msra.mxu0 0.0
        %580 = vmatprep.subr.mxu0 0.0
        %581 = vmatpush1.xpose.msra.mxu0 0.0
        %582 = vmatprep.subr.mxu0 0.0
        %583 = vmatpush1.xpose.msra.mxu0 0.0
        %584 = vmatprep.subr.mxu0 0.0
        %585 = vmatpush1.xpose.msra.mxu0 0.0
        %586 = vmatprep.subr.mxu0 0.0
        %587 = vmatpush1.xpose.msra.mxu0 0.0
        %588 = vmatprep.mubr.f32.mxu0 0.0
        %589 = vmatmul.mubr.f32.gmra.mrb[0].mxu0 %v520
        %v590 = vpop.f32.mrb[0].mxu0
        %v591 = vadd.f32 0.0, %v590
        %v592 = vpop.f32.mrb[0].mxu0
        %593 = vdwg.mxu0
        %v594 = vsel %vm288, %v360, -inf
        %595 = vmax.xlane.f32.xlu0 %v594
        %v596 = vpop.xlane.xlu0 %595
        %v597 = vsel %vm288, %v437, -inf
        %598 = vmax.xlane.f32.xlu0 %v597
        %v599 = vpop.xlane.xlu0 %598
        %v600 = vsel %vm288, %v514, -inf
        %601 = vmax.xlane.f32.xlu0 %v600
        %v602 = vpop.xlane.xlu0 %601
        %v603 = vsel %vm288, %v591, -inf
        %604 = vmax.xlane.f32.xlu0 %v603
        %v605 = vpop.xlane.xlu0 %604
        %v606 = vsub.f32 %v360, %v596
        %v607 = vsub.f32 %v437, %v599
        %v608 = vsub.f32 %v514, %v602
        %v609 = vsub.f32 %v591, %v605
        %v610 = vmul.f32 %v606, 1.442695
        %v611 = vpow.pop %v610
        %v612 = vmul.f32 %v607, 1.442695
        %v613 = vpow.pop %v612
        %v614 = vmul.f32 %v608, 1.442695
        %v615 = vpow.pop %v614
        %v616 = vmul.f32 %v609, 1.442695
        %v617 = vpow.pop %v616
        %v618 = vsel %vm288, %v611, 0.0
        %619 = vadd.xlane.f32.xlu0 %v618
        %v620 = vpop.xlane.xlu0 %619
        %v621 = vsel %vm288, %v613, 0.0
        %622 = vadd.xlane.f32.xlu0 %v621
        %v623 = vpop.xlane.xlu0 %622
        %v624 = vsel %vm288, %v615, 0.0
        %625 = vadd.xlane.f32.xlu0 %v624
        %v626 = vpop.xlane.xlu0 %625
        %v627 = vsel %vm288, %v617, 0.0
        %628 = vadd.xlane.f32.xlu0 %v627
        %v629 = vpop.xlane.xlu0 %628
        %v630 = vrcp.pop %v620
        %v631 = vrcp.pop %v623
        %v632 = vrcp.pop %v626
        %v633 = vrcp.pop %v629
        %634 = vrot.lane.b32.xlu0 %v267, 64
        %v635 = vpop.permute.xlu0 %634
        %v638 = vsel %vm288, %v611, 0
        %640 = vmatprep.subr.mxu0 0.0
        %641 = vmatpush1.msra.mxu0 %v635
        %642 = vmatprep.subr.mxu0 0.0
        %643 = vmatpush1.msra.mxu0 0.0
        %644 = vmatprep.subr.mxu0 0.0
        %645 = vmatpush1.msra.mxu0 0.0
        %646 = vmatprep.subr.mxu0 0.0
        %647 = vmatpush1.msra.mxu0 0.0
        %648 = vmatprep.subr.mxu0 0.0
        %649 = vmatpush1.msra.mxu0 0.0
        %650 = vmatprep.subr.mxu0 0.0
        %651 = vmatpush1.msra.mxu0 0.0
        %652 = vmatprep.subr.mxu0 0.0
        %653 = vmatpush1.msra.mxu0 0.0
        %654 = vmatprep.subr.mxu0 0.0
        %655 = vmatpush1.msra.mxu0 0.0
        %656 = vmatprep.subr.mxu0 0.0
        %657 = vmatpush1.msra.mxu0 0.0
        %658 = vmatprep.subr.mxu0 0.0
        %659 = vmatpush1.msra.mxu0 0.0
        %660 = vmatprep.subr.mxu0 0.0
        %661 = vmatpush1.msra.mxu0 0.0
        %662 = vmatprep.subr.mxu0 0.0
        %663 = vmatpush1.msra.mxu0 0.0
        %664 = vmatprep.subr.mxu0 0.0
        %665 = vmatpush1.msra.mxu0 0.0
        %666 = vmatprep.subr.mxu0 0.0
        %667 = vmatpush1.msra.mxu0 0.0
        %668 = vmatprep.subr.mxu0 0.0
        %669 = vmatpush1.msra.mxu0 0.0
        %670 = vmatprep.subr.mxu0 0.0
        %671 = vmatpush1.msra.mxu0 0.0
        %672 = vmatprep.subr.mxu0 0.0
        %673 = vmatpush1.msra.mxu0 0.0
        %674 = vmatprep.subr.mxu0 0.0
        %675 = vmatpush1.msra.mxu0 0.0
        %676 = vmatprep.subr.mxu0 0.0
        %677 = vmatpush1.msra.mxu0 0.0
        %678 = vmatprep.subr.mxu0 0.0
        %679 = vmatpush1.msra.mxu0 0.0
        %680 = vmatprep.subr.mxu0 0.0
        %681 = vmatpush1.msra.mxu0 0.0
        %682 = vmatprep.subr.mxu0 0.0
        %683 = vmatpush1.msra.mxu0 0.0
        %684 = vmatprep.subr.mxu0 0.0
        %685 = vmatpush1.msra.mxu0 0.0
        %686 = vmatprep.subr.mxu0 0.0
        %687 = vmatpush1.msra.mxu0 0.0
        %688 = vmatprep.subr.mxu0 0.0
        %689 = vmatpush1.msra.mxu0 0.0
        %690 = vmatprep.subr.mxu0 0.0
        %691 = vmatpush1.msra.mxu0 0.0
        %692 = vmatprep.subr.mxu0 0.0
        %693 = vmatpush1.msra.mxu0 0.0
        %694 = vmatprep.subr.mxu0 0.0
        %695 = vmatpush1.msra.mxu0 0.0
        %696 = vmatprep.subr.mxu0 0.0
        %697 = vmatpush1.msra.mxu0 0.0
        %698 = vmatprep.subr.mxu0 0.0
        %699 = vmatpush1.msra.mxu0 0.0
        %700 = vmatprep.subr.mxu0 0.0
        %701 = vmatpush1.msra.mxu0 0.0
        %702 = vmatprep.subr.mxu0 0.0
        %703 = vmatpush1.msra.mxu0 0.0
        %704 = vmatprep.mubr.f32.mxu0 0.0
        %705 = vmatmul.mubr.f32.gmra.mrb[0].mxu0 %v638
        %v706 = vpop.f32.mrb[0].mxu0
        %v707 = vadd.f32 0.0, %v706
        %v708 = vpop.f32.mrb[0].mxu0
        %709 = vdwg.mxu0
        %710 = vrot.lane.b32.xlu0 %v272, 64
        %v711 = vpop.permute.xlu0 %710
        %v714 = vsel %vm288, %v613, 0
        %716 = vmatprep.subr.mxu0 0.0
        %717 = vmatpush1.msra.mxu0 %v711
        %718 = vmatprep.subr.mxu0 0.0
        %719 = vmatpush1.msra.mxu0 0.0
        %720 = vmatprep.subr.mxu0 0.0
        %721 = vmatpush1.msra.mxu0 0.0
        %722 = vmatprep.subr.mxu0 0.0
        %723 = vmatpush1.msra.mxu0 0.0
        %724 = vmatprep.subr.mxu0 0.0
        %725 = vmatpush1.msra.mxu0 0.0
        %726 = vmatprep.subr.mxu0 0.0
        %727 = vmatpush1.msra.mxu0 0.0
        %728 = vmatprep.subr.mxu0 0.0
        %729 = vmatpush1.msra.mxu0 0.0
        %730 = vmatprep.subr.mxu0 0.0
        %731 = vmatpush1.msra.mxu0 0.0
        %732 = vmatprep.subr.mxu0 0.0
        %733 = vmatpush1.msra.mxu0 0.0
        %734 = vmatprep.subr.mxu0 0.0
        %735 = vmatpush1.msra.mxu0 0.0
        %736 = vmatprep.subr.mxu0 0.0
        %737 = vmatpush1.msra.mxu0 0.0
        %738 = vmatprep.subr.mxu0 0.0
        %739 = vmatpush1.msra.mxu0 0.0
        %740 = vmatprep.subr.mxu0 0.0
        %741 = vmatpush1.msra.mxu0 0.0
        %742 = vmatprep.subr.mxu0 0.0
        %743 = vmatpush1.msra.mxu0 0.0
        %744 = vmatprep.subr.mxu0 0.0
        %745 = vmatpush1.msra.mxu0 0.0
        %746 = vmatprep.subr.mxu0 0.0
        %747 = vmatpush1.msra.mxu0 0.0
        %748 = vmatprep.subr.mxu0 0.0
        %749 = vmatpush1.msra.mxu0 0.0
        %750 = vmatprep.subr.mxu0 0.0
        %751 = vmatpush1.msra.mxu0 0.0
        %752 = vmatprep.subr.mxu0 0.0
        %753 = vmatpush1.msra.mxu0 0.0
        %754 = vmatprep.subr.mxu0 0.0
        %755 = vmatpush1.msra.mxu0 0.0
        %756 = vmatprep.subr.mxu0 0.0
        %757 = vmatpush1.msra.mxu0 0.0
        %758 = vmatprep.subr.mxu0 0.0
        %759 = vmatpush1.msra.mxu0 0.0
        %760 = vmatprep.subr.mxu0 0.0
        %761 = vmatpush1.msra.mxu0 0.0
        %762 = vmatprep.subr.mxu0 0.0
        %763 = vmatpush1.msra.mxu0 0.0
        %764 = vmatprep.subr.mxu0 0.0
        %765 = vmatpush1.msra.mxu0 0.0
        %766 = vmatprep.subr.mxu0 0.0
        %767 = vmatpush1.msra.mxu0 0.0
        %768 = vmatprep.subr.mxu0 0.0
        %769 = vmatpush1.msra.mxu0 0.0
        %770 = vmatprep.subr.mxu0 0.0
        %771 = vmatpush1.msra.mxu0 0.0
        %772 = vmatprep.subr.mxu0 0.0
        %773 = vmatpush1.msra.mxu0 0.0
        %774 = vmatprep.subr.mxu0 0.0
        %775 = vmatpush1.msra.mxu0 0.0
        %776 = vmatprep.subr.mxu0 0.0
        %777 = vmatpush1.msra.mxu0 0.0
        %778 = vmatprep.subr.mxu0 0.0
        %779 = vmatpush1.msra.mxu0 0.0
        %780 = vmatprep.mubr.f32.mxu0 0.0
        %781 = vmatmul.mubr.f32.gmra.mrb[0].mxu0 %v714
        %v782 = vpop.f32.mrb[0].mxu0
        %v783 = vadd.f32 0.0, %v782
        %v784 = vpop.f32.mrb[0].mxu0
        %785 = vdwg.mxu0
        %786 = vrot.lane.b32.xlu0 %v277, 64
        %v787 = vpop.permute.xlu0 %786
        %v790 = vsel %vm288, %v615, 0
        %792 = vmatprep.subr.mxu0 0.0
        %793 = vmatpush1.msra.mxu0 %v787
        %794 = vmatprep.subr.mxu0 0.0
        %795 = vmatpush1.msra.mxu0 0.0
        %796 = vmatprep.subr.mxu0 0.0
        %797 = vmatpush1.msra.mxu0 0.0
        %798 = vmatprep.subr.mxu0 0.0
        %799 = vmatpush1.msra.mxu0 0.0
        %800 = vmatprep.subr.mxu0 0.0
        %801 = vmatpush1.msra.mxu0 0.0
        %802 = vmatprep.subr.mxu0 0.0
        %803 = vmatpush1.msra.mxu0 0.0
        %804 = vmatprep.subr.mxu0 0.0
        %805 = vmatpush1.msra.mxu0 0.0
        %806 = vmatprep.subr.mxu0 0.0
        %807 = vmatpush1.msra.mxu0 0.0
        %808 = vmatprep.subr.mxu0 0.0
        %809 = vmatpush1.msra.mxu0 0.0
        %810 = vmatprep.subr.mxu0 0.0
        %811 = vmatpush1.msra.mxu0 0.0
        %812 = vmatprep.subr.mxu0 0.0
        %813 = vmatpush1.msra.mxu0 0.0
        %814 = vmatprep.subr.mxu0 0.0
        %815 = vmatpush1.msra.mxu0 0.0
        %816 = vmatprep.subr.mxu0 0.0
        %817 = vmatpush1.msra.mxu0 0.0
        %818 = vmatprep.subr.mxu0 0.0
        %819 = vmatpush1.msra.mxu0 0.0
        %820 = vmatprep.subr.mxu0 0.0
        %821 = vmatpush1.msra.mxu0 0.0
        %822 = vmatprep.subr.mxu0 0.0
        %823 = vmatpush1.msra.mxu0 0.0
        %824 = vmatprep.subr.mxu0 0.0
        %825 = vmatpush1.msra.mxu0 0.0
        %826 = vmatprep.subr.mxu0 0.0
        %827 = vmatpush1.msra.mxu0 0.0
        %828 = vmatprep.subr.mxu0 0.0
        %829 = vmatpush1.msra.mxu0 0.0
        %830 = vmatprep.subr.mxu0 0.0
        %831 = vmatpush1.msra.mxu0 0.0
        %832 = vmatprep.subr.mxu0 0.0
        %833 = vmatpush1.msra.mxu0 0.0
        %834 = vmatprep.subr.mxu0 0.0
        %835 = vmatpush1.msra.mxu0 0.0
        %836 = vmatprep.subr.mxu0 0.0
        %837 = vmatpush1.msra.mxu0 0.0
        %838 = vmatprep.subr.mxu0 0.0
        %839 = vmatpush1.msra.mxu0 0.0
        %840 = vmatprep.subr.mxu0 0.0
        %841 = vmatpush1.msra.mxu0 0.0
        %842 = vmatprep.subr.mxu0 0.0
        %843 = vmatpush1.msra.mxu0 0.0
        %844 = vmatprep.subr.mxu0 0.0
        %845 = vmatpush1.msra.mxu0 0.0
        %846 = vmatprep.subr.mxu0 0.0
        %847 = vmatpush1.msra.mxu0 0.0
        %848 = vmatprep.subr.mxu0 0.0
        %849 = vmatpush1.msra.mxu0 0.0
        %850 = vmatprep.subr.mxu0 0.0
        %851 = vmatpush1.msra.mxu0 0.0
        %852 = vmatprep.subr.mxu0 0.0
        %853 = vmatpush1.msra.mxu0 0.0
        %854 = vmatprep.subr.mxu0 0.0
        %855 = vmatpush1.msra.mxu0 0.0
        %856 = vmatprep.mubr.f32.mxu0 0.0
        %857 = vmatmul.mubr.f32.gmra.mrb[0].mxu0 %v790
        %v858 = vpop.f32.mrb[0].mxu0
        %v859 = vadd.f32 0.0, %v858
        %v860 = vpop.f32.mrb[0].mxu0
        %861 = vdwg.mxu0
        %862 = vrot.lane.b32.xlu0 %v282, 64
        %v863 = vpop.permute.xlu0 %862
        %v866 = vsel %vm288, %v617, 0
        %868 = vmatprep.subr.mxu0 0.0
        %869 = vmatpush1.msra.mxu0 %v863
        %870 = vmatprep.subr.mxu0 0.0
        %871 = vmatpush1.msra.mxu0 0.0
        %872 = vmatprep.subr.mxu0 0.0
        %873 = vmatpush1.msra.mxu0 0.0
        %874 = vmatprep.subr.mxu0 0.0
        %875 = vmatpush1.msra.mxu0 0.0
        %876 = vmatprep.subr.mxu0 0.0
        %877 = vmatpush1.msra.mxu0 0.0
        %878 = vmatprep.subr.mxu0 0.0
        %879 = vmatpush1.msra.mxu0 0.0
        %880 = vmatprep.subr.mxu0 0.0
        %881 = vmatpush1.msra.mxu0 0.0
        %882 = vmatprep.subr.mxu0 0.0
        %883 = vmatpush1.msra.mxu0 0.0
        %884 = vmatprep.subr.mxu0 0.0
        %885 = vmatpush1.msra.mxu0 0.0
        %886 = vmatprep.subr.mxu0 0.0
        %887 = vmatpush1.msra.mxu0 0.0
        %888 = vmatprep.subr.mxu0 0.0
        %889 = vmatpush1.msra.mxu0 0.0
        %890 = vmatprep.subr.mxu0 0.0
        %891 = vmatpush1.msra.mxu0 0.0
        %892 = vmatprep.subr.mxu0 0.0
        %893 = vmatpush1.msra.mxu0 0.0
        %894 = vmatprep.subr.mxu0 0.0
        %895 = vmatpush1.msra.mxu0 0.0
        %896 = vmatprep.subr.mxu0 0.0
        %897 = vmatpush1.msra.mxu0 0.0
        %898 = vmatprep.subr.mxu0 0.0
        %899 = vmatpush1.msra.mxu0 0.0
        %900 = vmatprep.subr.mxu0 0.0
        %901 = vmatpush1.msra.mxu0 0.0
        %902 = vmatprep.subr.mxu0 0.0
        %903 = vmatpush1.msra.mxu0 0.0
        %904 = vmatprep.subr.mxu0 0.0
        %905 = vmatpush1.msra.mxu0 0.0
        %906 = vmatprep.subr.mxu0 0.0
        %907 = vmatpush1.msra.mxu0 0.0
        %908 = vmatprep.subr.mxu0 0.0
        %909 = vmatpush1.msra.mxu0 0.0
        %910 = vmatprep.subr.mxu0 0.0
        %911 = vmatpush1.msra.mxu0 0.0
        %912 = vmatprep.subr.mxu0 0.0
        %913 = vmatpush1.msra.mxu0 0.0
        %914 = vmatprep.subr.mxu0 0.0
        %915 = vmatpush1.msra.mxu0 0.0
        %916 = vmatprep.subr.mxu0 0.0
        %917 = vmatpush1.msra.mxu0 0.0
        %918 = vmatprep.subr.mxu0 0.0
        %919 = vmatpush1.msra.mxu0 0.0
        %920 = vmatprep.subr.mxu0 0.0
        %921 = vmatpush1.msra.mxu0 0.0
        %922 = vmatprep.subr.mxu0 0.0
        %923 = vmatpush1.msra.mxu0 0.0
        %924 = vmatprep.subr.mxu0 0.0
        %925 = vmatpush1.msra.mxu0 0.0
        %926 = vmatprep.subr.mxu0 0.0
        %927 = vmatpush1.msra.mxu0 0.0
        %928 = vmatprep.subr.mxu0 0.0
        %929 = vmatpush1.msra.mxu0 0.0
        %930 = vmatprep.subr.mxu0 0.0
        %931 = vmatpush1.msra.mxu0 0.0
        %932 = vmatprep.mubr.f32.mxu0 0.0
        %933 = vmatmul.mubr.f32.gmra.mrb[0].mxu0 %v866
        %v934 = vpop.f32.mrb[0].mxu0
        %v935 = vadd.f32 0.0, %v934
        %v936 = vpop.f32.mrb[0].mxu0
        %937 = vdwg.mxu0
        %v938 = vmul.f32 %v707, %v630
        %v939 = vmul.f32 %v783, %v631
        %v940 = vmul.f32 %v859, %v632
        %v941 = vmul.f32 %v935, %v633
        %942 = vrot.lane.b32.xlu0 %v267, 120
        %v943 = vpop.permute.xlu0 %942
        %944 = vrot.lane.b32.xlu0 %v267, 88
        %v945 = vpop.permute.xlu0 %944
        %v946 = vsel %vm288, %v943, 0
        %v948 = vsel %vm288, %v945, 0
        %950 = vmatprep.subr.mxu0 0.0
        %951 = vmatpush1.xpose.msra.mxu0 %v948
        %952 = vmatprep.subr.mxu0 0.0
        %953 = vmatpush1.xpose.msra.mxu0 0.0
        %954 = vmatprep.subr.mxu0 0.0
        %955 = vmatpush1.xpose.msra.mxu0 0.0
        %956 = vmatprep.subr.mxu0 0.0
        %957 = vmatpush1.xpose.msra.mxu0 0.0
        %958 = vmatprep.subr.mxu0 0.0
        %959 = vmatpush1.xpose.msra.mxu0 0.0
        %960 = vmatprep.subr.mxu0 0.0
        %961 = vmatpush1.xpose.msra.mxu0 0.0
        %962 = vmatprep.subr.mxu0 0.0
        %963 = vmatpush1.xpose.msra.mxu0 0.0
        %964 = vmatprep.subr.mxu0 0.0
        %965 = vmatpush1.xpose.msra.mxu0 0.0
        %966 = vmatprep.subr.mxu0 0.0
        %967 = vmatpush1.xpose.msra.mxu0 0.0
        %968 = vmatprep.subr.mxu0 0.0
        %969 = vmatpush1.xpose.msra.mxu0 0.0
        %970 = vmatprep.subr.mxu0 0.0
        %971 = vmatpush1.xpose.msra.mxu0 0.0
        %972 = vmatprep.subr.mxu0 0.0
        %973 = vmatpush1.xpose.msra.mxu0 0.0
        %974 = vmatprep.subr.mxu0 0.0
        %975 = vmatpush1.xpose.msra.mxu0 0.0
        %976 = vmatprep.subr.mxu0 0.0
        %977 = vmatpush1.xpose.msra.mxu0 0.0
        %978 = vmatprep.subr.mxu0 0.0
        %979 = vmatpush1.xpose.msra.mxu0 0.0
        %980 = vmatprep.subr.mxu0 0.0
        %981 = vmatpush1.xpose.msra.mxu0 0.0
        %982 = vmatprep.subr.mxu0 0.0
        %983 = vmatpush1.xpose.msra.mxu0 0.0
        %984 = vmatprep.subr.mxu0 0.0
        %985 = vmatpush1.xpose.msra.mxu0 0.0
        %986 = vmatprep.subr.mxu0 0.0
        %987 = vmatpush1.xpose.msra.mxu0 0.0
        %988 = vmatprep.subr.mxu0 0.0
        %989 = vmatpush1.xpose.msra.mxu0 0.0
        %990 = vmatprep.subr.mxu0 0.0
        %991 = vmatpush1.xpose.msra.mxu0 0.0
        %992 = vmatprep.subr.mxu0 0.0
        %993 = vmatpush1.xpose.msra.mxu0 0.0
        %994 = vmatprep.subr.mxu0 0.0
        %995 = vmatpush1.xpose.msra.mxu0 0.0
        %996 = vmatprep.subr.mxu0 0.0
        %997 = vmatpush1.xpose.msra.mxu0 0.0
        %998 = vmatprep.subr.mxu0 0.0
        %999 = vmatpush1.xpose.msra.mxu0 0.0
        %1000 = vmatprep.subr.mxu0 0.0
        %1001 = vmatpush1.xpose.msra.mxu0 0.0
        %1002 = vmatprep.subr.mxu0 0.0
        %1003 = vmatpush1.xpose.msra.mxu0 0.0
        %1004 = vmatprep.subr.mxu0 0.0
        %1005 = vmatpush1.xpose.msra.mxu0 0.0
        %1006 = vmatprep.subr.mxu0 0.0
        %1007 = vmatpush1.xpose.msra.mxu0 0.0
        %1008 = vmatprep.subr.mxu0 0.0
        %1009 = vmatpush1.xpose.msra.mxu0 0.0
        %1010 = vmatprep.subr.mxu0 0.0
        %1011 = vmatpush1.xpose.msra.mxu0 0.0
        %1012 = vmatprep.subr.mxu0 0.0
        %1013 = vmatpush1.xpose.msra.mxu0 0.0
        %1014 = vmatprep.mubr.f32.mxu0 0.0
        %1015 = vmatmul.mubr.f32.gmra.mrb[0].mxu0 %v946
        %v1016 = vpop.f32.mrb[0].mxu0
        %v1017 = vadd.f32 0.0, %v1016
        %v1018 = vpop.f32.mrb[0].mxu0
        %1019 = vdwg.mxu0
        %1020 = vrot.lane.b32.xlu0 %v272, 120
        %v1021 = vpop.permute.xlu0 %1020
        %1022 = vrot.lane.b32.xlu0 %v272, 88
        %v1023 = vpop.permute.xlu0 %1022
        %v1024 = vsel %vm288, %v1021, 0
        %v1026 = vsel %vm288, %v1023, 0
        %1028 = vmatprep.subr.mxu0 0.0
        %1029 = vmatpush1.xpose.msra.mxu0 %v1026
        %1030 = vmatprep.subr.mxu0 0.0
        %1031 = vmatpush1.xpose.msra.mxu0 0.0
        %1032 = vmatprep.subr.mxu0 0.0
        %1033 = vmatpush1.xpose.msra.mxu0 0.0
        %1034 = vmatprep.subr.mxu0 0.0
        %1035 = vmatpush1.xpose.msra.mxu0 0.0
        %1036 = vmatprep.subr.mxu0 0.0
        %1037 = vmatpush1.xpose.msra.mxu0 0.0
        %1038 = vmatprep.subr.mxu0 0.0
        %1039 = vmatpush1.xpose.msra.mxu0 0.0
        %1040 = vmatprep.subr.mxu0 0.0
        %1041 = vmatpush1.xpose.msra.mxu0 0.0
        %1042 = vmatprep.subr.mxu0 0.0
        %1043 = vmatpush1.xpose.msra.mxu0 0.0
        %1044 = vmatprep.subr.mxu0 0.0
        %1045 = vmatpush1.xpose.msra.mxu0 0.0
        %1046 = vmatprep.subr.mxu0 0.0
        %1047 = vmatpush1.xpose.msra.mxu0 0.0
        %1048 = vmatprep.subr.mxu0 0.0
        %1049 = vmatpush1.xpose.msra.mxu0 0.0
        %1050 = vmatprep.subr.mxu0 0.0
        %1051 = vmatpush1.xpose.msra.mxu0 0.0
        %1052 = vmatprep.subr.mxu0 0.0
        %1053 = vmatpush1.xpose.msra.mxu0 0.0
        %1054 = vmatprep.subr.mxu0 0.0
        %1055 = vmatpush1.xpose.msra.mxu0 0.0
        %1056 = vmatprep.subr.mxu0 0.0
        %1057 = vmatpush1.xpose.msra.mxu0 0.0
        %1058 = vmatprep.subr.mxu0 0.0
        %1059 = vmatpush1.xpose.msra.mxu0 0.0
        %1060 = vmatprep.subr.mxu0 0.0
        %1061 = vmatpush1.xpose.msra.mxu0 0.0
        %1062 = vmatprep.subr.mxu0 0.0
        %1063 = vmatpush1.xpose.msra.mxu0 0.0
        %1064 = vmatprep.subr.mxu0 0.0
        %1065 = vmatpush1.xpose.msra.mxu0 0.0
        %1066 = vmatprep.subr.mxu0 0.0
        %1067 = vmatpush1.xpose.msra.mxu0 0.0
        %1068 = vmatprep.subr.mxu0 0.0
        %1069 = vmatpush1.xpose.msra.mxu0 0.0
        %1070 = vmatprep.subr.mxu0 0.0
        %1071 = vmatpush1.xpose.msra.mxu0 0.0
        %1072 = vmatprep.subr.mxu0 0.0
        %1073 = vmatpush1.xpose.msra.mxu0 0.0
        %1074 = vmatprep.subr.mxu0 0.0
        %1075 = vmatpush1.xpose.msra.mxu0 0.0
        %1076 = vmatprep.subr.mxu0 0.0
        %1077 = vmatpush1.xpose.msra.mxu0 0.0
        %1078 = vmatprep.subr.mxu0 0.0
        %1079 = vmatpush1.xpose.msra.mxu0 0.0
        %1080 = vmatprep.subr.mxu0 0.0
        %1081 = vmatpush1.xpose.msra.mxu0 0.0
        %1082 = vmatprep.subr.mxu0 0.0
        %1083 = vmatpush1.xpose.msra.mxu0 0.0
        %1084 = vmatprep.subr.mxu0 0.0
        %1085 = vmatpush1.xpose.msra.mxu0 0.0
        %1086 = vmatprep.subr.mxu0 0.0
        %1087 = vmatpush1.xpose.msra.mxu0 0.0
        %1088 = vmatprep.subr.mxu0 0.0
        %1089 = vmatpush1.xpose.msra.mxu0 0.0
        %1090 = vmatprep.subr.mxu0 0.0
        %1091 = vmatpush1.xpose.msra.mxu0 0.0
        %1092 = vmatprep.mubr.f32.mxu0 0.0
        %1093 = vmatmul.mubr.f32.gmra.mrb[0].mxu0 %v1024
        %v1094 = vpop.f32.mrb[0].mxu0
        %v1095 = vadd.f32 0.0, %v1094
        %v1096 = vpop.f32.mrb[0].mxu0
        %1097 = vdwg.mxu0
        %1098 = vrot.lane.b32.xlu0 %v277, 120
        %v1099 = vpop.permute.xlu0 %1098
        %1100 = vrot.lane.b32.xlu0 %v277, 88
        %v1101 = vpop.permute.xlu0 %1100
        %v1102 = vsel %vm288, %v1099, 0
        %v1104 = vsel %vm288, %v1101, 0
        %1106 = vmatprep.subr.mxu0 0.0
        %1107 = vmatpush1.xpose.msra.mxu0 %v1104
        %1108 = vmatprep.subr.mxu0 0.0
        %1109 = vmatpush1.xpose.msra.mxu0 0.0
        %1110 = vmatprep.subr.mxu0 0.0
        %1111 = vmatpush1.xpose.msra.mxu0 0.0
        %1112 = vmatprep.subr.mxu0 0.0
        %1113 = vmatpush1.xpose.msra.mxu0 0.0
        %1114 = vmatprep.subr.mxu0 0.0
        %1115 = vmatpush1.xpose.msra.mxu0 0.0
        %1116 = vmatprep.subr.mxu0 0.0
        %1117 = vmatpush1.xpose.msra.mxu0 0.0
        %1118 = vmatprep.subr.mxu0 0.0
        %1119 = vmatpush1.xpose.msra.mxu0 0.0
        %1120 = vmatprep.subr.mxu0 0.0
        %1121 = vmatpush1.xpose.msra.mxu0 0.0
        %1122 = vmatprep.subr.mxu0 0.0
        %1123 = vmatpush1.xpose.msra.mxu0 0.0
        %1124 = vmatprep.subr.mxu0 0.0
        %1125 = vmatpush1.xpose.msra.mxu0 0.0
        %1126 = vmatprep.subr.mxu0 0.0
        %1127 = vmatpush1.xpose.msra.mxu0 0.0
        %1128 = vmatprep.subr.mxu0 0.0
        %1129 = vmatpush1.xpose.msra.mxu0 0.0
        %1130 = vmatprep.subr.mxu0 0.0
        %1131 = vmatpush1.xpose.msra.mxu0 0.0
        %1132 = vmatprep.subr.mxu0 0.0
        %1133 = vmatpush1.xpose.msra.mxu0 0.0
        %1134 = vmatprep.subr.mxu0 0.0
        %1135 = vmatpush1.xpose.msra.mxu0 0.0
        %1136 = vmatprep.subr.mxu0 0.0
        %1137 = vmatpush1.xpose.msra.mxu0 0.0
        %1138 = vmatprep.subr.mxu0 0.0
        %1139 = vmatpush1.xpose.msra.mxu0 0.0
        %1140 = vmatprep.subr.mxu0 0.0
        %1141 = vmatpush1.xpose.msra.mxu0 0.0
        %1142 = vmatprep.subr.mxu0 0.0
        %1143 = vmatpush1.xpose.msra.mxu0 0.0
        %1144 = vmatprep.subr.mxu0 0.0
        %1145 = vmatpush1.xpose.msra.mxu0 0.0
        %1146 = vmatprep.subr.mxu0 0.0
        %1147 = vmatpush1.xpose.msra.mxu0 0.0
        %1148 = vmatprep.subr.mxu0 0.0
        %1149 = vmatpush1.xpose.msra.mxu0 0.0
        %1150 = vmatprep.subr.mxu0 0.0
        %1151 = vmatpush1.xpose.msra.mxu0 0.0
        %1152 = vmatprep.subr.mxu0 0.0
        %1153 = vmatpush1.xpose.msra.mxu0 0.0
        %1154 = vmatprep.subr.mxu0 0.0
        %1155 = vmatpush1.xpose.msra.mxu0 0.0
        %1156 = vmatprep.subr.mxu0 0.0
        %1157 = vmatpush1.xpose.msra.mxu0 0.0
        %1158 = vmatprep.subr.mxu0 0.0
        %1159 = vmatpush1.xpose.msra.mxu0 0.0
        %1160 = vmatprep.subr.mxu0 0.0
        %1161 = vmatpush1.xpose.msra.mxu0 0.0
        %1162 = vmatprep.subr.mxu0 0.0
        %1163 = vmatpush1.xpose.msra.mxu0 0.0
        %1164 = vmatprep.subr.mxu0 0.0
        %1165 = vmatpush1.xpose.msra.mxu0 0.0
        %1166 = vmatprep.subr.mxu0 0.0
        %1167 = vmatpush1.xpose.msra.mxu0 0.0
        %1168 = vmatprep.subr.mxu0 0.0
        %1169 = vmatpush1.xpose.msra.mxu0 0.0
        %1170 = vmatprep.mubr.f32.mxu0 0.0
        %1171 = vmatmul.mubr.f32.gmra.mrb[0].mxu0 %v1102
        %v1172 = vpop.f32.mrb[0].mxu0
        %v1173 = vadd.f32 0.0, %v1172
        %v1174 = vpop.f32.mrb[0].mxu0
        %1175 = vdwg.mxu0
        %1176 = vrot.lane.b32.xlu0 %v282, 120
        %v1177 = vpop.permute.xlu0 %1176
        %1178 = vrot.lane.b32.xlu0 %v282, 88
        %v1179 = vpop.permute.xlu0 %1178
        %v1180 = vsel %vm288, %v1177, 0
        %v1182 = vsel %vm288, %v1179, 0
        %1184 = vmatprep.subr.mxu0 0.0
        %1185 = vmatpush1.xpose.msra.mxu0 %v1182
        %1186 = vmatprep.subr.mxu0 0.0
        %1187 = vmatpush1.xpose.msra.mxu0 0.0
        %1188 = vmatprep.subr.mxu0 0.0
        %1189 = vmatpush1.xpose.msra.mxu0 0.0
        %1190 = vmatprep.subr.mxu0 0.0
        %1191 = vmatpush1.xpose.msra.mxu0 0.0
        %1192 = vmatprep.subr.mxu0 0.0
        %1193 = vmatpush1.xpose.msra.mxu0 0.0
        %1194 = vmatprep.subr.mxu0 0.0
        %1195 = vmatpush1.xpose.msra.mxu0 0.0
        %1196 = vmatprep.subr.mxu0 0.0
        %1197 = vmatpush1.xpose.msra.mxu0 0.0
        %1198 = vmatprep.subr.mxu0 0.0
        %1199 = vmatpush1.xpose.msra.mxu0 0.0
        %1200 = vmatprep.subr.mxu0 0.0
        %1201 = vmatpush1.xpose.msra.mxu0 0.0
        %1202 = vmatprep.subr.mxu0 0.0
        %1203 = vmatpush1.xpose.msra.mxu0 0.0
        %1204 = vmatprep.subr.mxu0 0.0
        %1205 = vmatpush1.xpose.msra.mxu0 0.0
        %1206 = vmatprep.subr.mxu0 0.0
        %1207 = vmatpush1.xpose.msra.mxu0 0.0
        %1208 = vmatprep.subr.mxu0 0.0
        %1209 = vmatpush1.xpose.msra.mxu0 0.0
        %1210 = vmatprep.subr.mxu0 0.0
        %1211 = vmatpush1.xpose.msra.mxu0 0.0
        %1212 = vmatprep.subr.mxu0 0.0
        %1213 = vmatpush1.xpose.msra.mxu0 0.0
        %1214 = vmatprep.subr.mxu0 0.0
        %1215 = vmatpush1.xpose.msra.mxu0 0.0
        %1216 = vmatprep.subr.mxu0 0.0
        %1217 = vmatpush1.xpose.msra.mxu0 0.0
        %1218 = vmatprep.subr.mxu0 0.0
        %1219 = vmatpush1.xpose.msra.mxu0 0.0
        %1220 = vmatprep.subr.mxu0 0.0
        %1221 = vmatpush1.xpose.msra.mxu0 0.0
        %1222 = vmatprep.subr.mxu0 0.0
        %1223 = vmatpush1.xpose.msra.mxu0 0.0
        %1224 = vmatprep.subr.mxu0 0.0
        %1225 = vmatpush1.xpose.msra.mxu0 0.0
        %1226 = vmatprep.subr.mxu0 0.0
        %1227 = vmatpush1.xpose.msra.mxu0 0.0
        %1228 = vmatprep.subr.mxu0 0.0
        %1229 = vmatpush1.xpose.msra.mxu0 0.0
        %1230 = vmatprep.subr.mxu0 0.0
        %1231 = vmatpush1.xpose.msra.mxu0 0.0
        %1232 = vmatprep.subr.mxu0 0.0
        %1233 = vmatpush1.xpose.msra.mxu0 0.0
        %1234 = vmatprep.subr.mxu0 0.0
        %1235 = vmatpush1.xpose.msra.mxu0 0.0
        %1236 = vmatprep.subr.mxu0 0.0
        %1237 = vmatpush1.xpose.msra.mxu0 0.0
        %1238 = vmatprep.subr.mxu0 0.0
        %1239 = vmatpush1.xpose.msra.mxu0 0.0
        %1240 = vmatprep.subr.mxu0 0.0
        %1241 = vmatpush1.xpose.msra.mxu0 0.0
        %1242 = vmatprep.subr.mxu0 0.0
        %1243 = vmatpush1.xpose.msra.mxu0 0.0
        %1244 = vmatprep.subr.mxu0 0.0
        %1245 = vmatpush1.xpose.msra.mxu0 0.0
        %1246 = vmatprep.subr.mxu0 0.0
        %1247 = vmatpush1.xpose.msra.mxu0 0.0
        %1248 = vmatprep.mubr.f32.mxu0 0.0
        %1249 = vmatmul.mubr.f32.gmra.mrb[0].mxu0 %v1180
        %v1250 = vpop.f32.mrb[0].mxu0
        %v1251 = vadd.f32 0.0, %v1250
        %v1252 = vpop.f32.mrb[0].mxu0
        %1253 = vdwg.mxu0
        %v1254 = vsel %vm288, %v1017, -inf
        %1255 = vmax.xlane.f32.xlu0 %v1254
        %v1256 = vpop.xlane.xlu0 %1255
        %v1257 = vsel %vm288, %v1095, -inf
        %1258 = vmax.xlane.f32.xlu0 %v1257
        %v1259 = vpop.xlane.xlu0 %1258
        %v1260 = vsel %vm288, %v1173, -inf
        %1261 = vmax.xlane.f32.xlu0 %v1260
        %v1262 = vpop.xlane.xlu0 %1261
        %v1263 = vsel %vm288, %v1251, -inf
        %1264 = vmax.xlane.f32.xlu0 %v1263
        %v1265 = vpop.xlane.xlu0 %1264
        %v1266 = vsub.f32 %v1017, %v1256
        %v1267 = vsub.f32 %v1095, %v1259
        %v1268 = vsub.f32 %v1173, %v1262
        %v1269 = vsub.f32 %v1251, %v1265
        %v1270 = vmul.f32 %v1266, 1.442695
        %v1271 = vpow.pop %v1270
        %v1272 = vmul.f32 %v1267, 1.442695
        %v1273 = vpow.pop %v1272
        %v1274 = vmul.f32 %v1268, 1.442695
        %v1275 = vpow.pop %v1274
        %v1276 = vmul.f32 %v1269, 1.442695
        %v1277 = vpow.pop %v1276
        %v1278 = vsel %vm288, %v1271, 0.0
        %1279 = vadd.xlane.f32.xlu0 %v1278
        %v1280 = vpop.xlane.xlu0 %1279
        %v1281 = vsel %vm288, %v1273, 0.0
        %1282 = vadd.xlane.f32.xlu0 %v1281
        %v1283 = vpop.xlane.xlu0 %1282
        %v1284 = vsel %vm288, %v1275, 0.0
        %1285 = vadd.xlane.f32.xlu0 %v1284
        %v1286 = vpop.xlane.xlu0 %1285
        %v1287 = vsel %vm288, %v1277, 0.0
        %1288 = vadd.xlane.f32.xlu0 %v1287
        %v1289 = vpop.xlane.xlu0 %1288
        %v1290 = vrcp.pop %v1280
        %v1291 = vrcp.pop %v1283
        %v1292 = vrcp.pop %v1286
        %v1293 = vrcp.pop %v1289
        %1294 = vrot.lane.b32.xlu0 %v267, 56
        %v1295 = vpop.permute.xlu0 %1294
        %v1298 = vsel %vm288, %v1271, 0
        %1300 = vmatprep.subr.mxu0 0.0
        %1301 = vmatpush1.msra.mxu0 %v1295
        %1302 = vmatprep.subr.mxu0 0.0
        %1303 = vmatpush1.msra.mxu0 0.0
        %1304 = vmatprep.subr.mxu0 0.0
        %1305 = vmatpush1.msra.mxu0 0.0
        %1306 = vmatprep.subr.mxu0 0.0
        %1307 = vmatpush1.msra.mxu0 0.0
        %1308 = vmatprep.subr.mxu0 0.0
        %1309 = vmatpush1.msra.mxu0 0.0
        %1310 = vmatprep.subr.mxu0 0.0
        %1311 = vmatpush1.msra.mxu0 0.0
        %1312 = vmatprep.subr.mxu0 0.0
        %1313 = vmatpush1.msra.mxu0 0.0
        %1314 = vmatprep.subr.mxu0 0.0
        %1315 = vmatpush1.msra.mxu0 0.0
        %1316 = vmatprep.subr.mxu0 0.0
        %1317 = vmatpush1.msra.mxu0 0.0
        %1318 = vmatprep.subr.mxu0 0.0
        %1319 = vmatpush1.msra.mxu0 0.0
        %1320 = vmatprep.subr.mxu0 0.0
        %1321 = vmatpush1.msra.mxu0 0.0
        %1322 = vmatprep.subr.mxu0 0.0
        %1323 = vmatpush1.msra.mxu0 0.0
        %1324 = vmatprep.subr.mxu0 0.0
        %1325 = vmatpush1.msra.mxu0 0.0
        %1326 = vmatprep.subr.mxu0 0.0
        %1327 = vmatpush1.msra.mxu0 0.0
        %1328 = vmatprep.subr.mxu0 0.0
        %1329 = vmatpush1.msra.mxu0 0.0
        %1330 = vmatprep.subr.mxu0 0.0
        %1331 = vmatpush1.msra.mxu0 0.0
        %1332 = vmatprep.subr.mxu0 0.0
        %1333 = vmatpush1.msra.mxu0 0.0
        %1334 = vmatprep.subr.mxu0 0.0
        %1335 = vmatpush1.msra.mxu0 0.0
        %1336 = vmatprep.subr.mxu0 0.0
        %1337 = vmatpush1.msra.mxu0 0.0
        %1338 = vmatprep.subr.mxu0 0.0
        %1339 = vmatpush1.msra.mxu0 0.0
        %1340 = vmatprep.subr.mxu0 0.0
        %1341 = vmatpush1.msra.mxu0 0.0
        %1342 = vmatprep.subr.mxu0 0.0
        %1343 = vmatpush1.msra.mxu0 0.0
        %1344 = vmatprep.subr.mxu0 0.0
        %1345 = vmatpush1.msra.mxu0 0.0
        %1346 = vmatprep.subr.mxu0 0.0
        %1347 = vmatpush1.msra.mxu0 0.0
        %1348 = vmatprep.subr.mxu0 0.0
        %1349 = vmatpush1.msra.mxu0 0.0
        %1350 = vmatprep.subr.mxu0 0.0
        %1351 = vmatpush1.msra.mxu0 0.0
        %1352 = vmatprep.subr.mxu0 0.0
        %1353 = vmatpush1.msra.mxu0 0.0
        %1354 = vmatprep.subr.mxu0 0.0
        %1355 = vmatpush1.msra.mxu0 0.0
        %1356 = vmatprep.subr.mxu0 0.0
        %1357 = vmatpush1.msra.mxu0 0.0
        %1358 = vmatprep.subr.mxu0 0.0
        %1359 = vmatpush1.msra.mxu0 0.0
        %1360 = vmatprep.subr.mxu0 0.0
        %1361 = vmatpush1.msra.mxu0 0.0
        %1362 = vmatprep.subr.mxu0 0.0
        %1363 = vmatpush1.msra.mxu0 0.0
        %1364 = vmatprep.mubr.f32.mxu0 0.0
        %1365 = vmatmul.mubr.f32.gmra.mrb[0].mxu0 %v1298
        %v1366 = vpop.f32.mrb[0].mxu0
        %v1367 = vadd.f32 0.0, %v1366
        %v1368 = vpop.f32.mrb[0].mxu0
        %1369 = vdwg.mxu0
        %1370 = vrot.lane.b32.xlu0 %v272, 56
        %v1371 = vpop.permute.xlu0 %1370
        %v1374 = vsel %vm288, %v1273, 0
        %1376 = vmatprep.subr.mxu0 0.0
        %1377 = vmatpush1.msra.mxu0 %v1371
        %1378 = vmatprep.subr.mxu0 0.0
        %1379 = vmatpush1.msra.mxu0 0.0
        %1380 = vmatprep.subr.mxu0 0.0
        %1381 = vmatpush1.msra.mxu0 0.0
        %1382 = vmatprep.subr.mxu0 0.0
        %1383 = vmatpush1.msra.mxu0 0.0
        %1384 = vmatprep.subr.mxu0 0.0
        %1385 = vmatpush1.msra.mxu0 0.0
        %1386 = vmatprep.subr.mxu0 0.0
        %1387 = vmatpush1.msra.mxu0 0.0
        %1388 = vmatprep.subr.mxu0 0.0
        %1389 = vmatpush1.msra.mxu0 0.0
        %1390 = vmatprep.subr.mxu0 0.0
        %1391 = vmatpush1.msra.mxu0 0.0
        %1392 = vmatprep.subr.mxu0 0.0
        %1393 = vmatpush1.msra.mxu0 0.0
        %1394 = vmatprep.subr.mxu0 0.0
        %1395 = vmatpush1.msra.mxu0 0.0
        %1396 = vmatprep.subr.mxu0 0.0
        %1397 = vmatpush1.msra.mxu0 0.0
        %1398 = vmatprep.subr.mxu0 0.0
        %1399 = vmatpush1.msra.mxu0 0.0
        %1400 = vmatprep.subr.mxu0 0.0
        %1401 = vmatpush1.msra.mxu0 0.0
        %1402 = vmatprep.subr.mxu0 0.0
        %1403 = vmatpush1.msra.mxu0 0.0
        %1404 = vmatprep.subr.mxu0 0.0
        %1405 = vmatpush1.msra.mxu0 0.0
        %1406 = vmatprep.subr.mxu0 0.0
        %1407 = vmatpush1.msra.mxu0 0.0
        %1408 = vmatprep.subr.mxu0 0.0
        %1409 = vmatpush1.msra.mxu0 0.0
        %1410 = vmatprep.subr.mxu0 0.0
        %1411 = vmatpush1.msra.mxu0 0.0
        %1412 = vmatprep.subr.mxu0 0.0
        %1413 = vmatpush1.msra.mxu0 0.0
        %1414 = vmatprep.subr.mxu0 0.0
        %1415 = vmatpush1.msra.mxu0 0.0
        %1416 = vmatprep.subr.mxu0 0.0
        %1417 = vmatpush1.msra.mxu0 0.0
        %1418 = vmatprep.subr.mxu0 0.0
        %1419 = vmatpush1.msra.mxu0 0.0
        %1420 = vmatprep.subr.mxu0 0.0
        %1421 = vmatpush1.msra.mxu0 0.0
        %1422 = vmatprep.subr.mxu0 0.0
        %1423 = vmatpush1.msra.mxu0 0.0
        %1424 = vmatprep.subr.mxu0 0.0
        %1425 = vmatpush1.msra.mxu0 0.0
        %1426 = vmatprep.subr.mxu0 0.0
        %1427 = vmatpush1.msra.mxu0 0.0
        %1428 = vmatprep.subr.mxu0 0.0
        %1429 = vmatpush1.msra.mxu0 0.0
        %1430 = vmatprep.subr.mxu0 0.0
        %1431 = vmatpush1.msra.mxu0 0.0
        %1432 = vmatprep.subr.mxu0 0.0
        %1433 = vmatpush1.msra.mxu0 0.0
        %1434 = vmatprep.subr.mxu0 0.0
        %1435 = vmatpush1.msra.mxu0 0.0
        %1436 = vmatprep.subr.mxu0 0.0
        %1437 = vmatpush1.msra.mxu0 0.0
        %1438 = vmatprep.subr.mxu0 0.0
        %1439 = vmatpush1.msra.mxu0 0.0
        %1440 = vmatprep.mubr.f32.mxu0 0.0
        %1441 = vmatmul.mubr.f32.gmra.mrb[0].mxu0 %v1374
        %v1442 = vpop.f32.mrb[0].mxu0
        %v1443 = vadd.f32 0.0, %v1442
        %v1444 = vpop.f32.mrb[0].mxu0
        %1445 = vdwg.mxu0
        %1446 = vrot.lane.b32.xlu0 %v277, 56
        %v1447 = vpop.permute.xlu0 %1446
        %v1450 = vsel %vm288, %v1275, 0
        %1452 = vmatprep.subr.mxu0 0.0
        %1453 = vmatpush1.msra.mxu0 %v1447
        %1454 = vmatprep.subr.mxu0 0.0
        %1455 = vmatpush1.msra.mxu0 0.0
        %1456 = vmatprep.subr.mxu0 0.0
        %1457 = vmatpush1.msra.mxu0 0.0
        %1458 = vmatprep.subr.mxu0 0.0
        %1459 = vmatpush1.msra.mxu0 0.0
        %1460 = vmatprep.subr.mxu0 0.0
        %1461 = vmatpush1.msra.mxu0 0.0
        %1462 = vmatprep.subr.mxu0 0.0
        %1463 = vmatpush1.msra.mxu0 0.0
        %1464 = vmatprep.subr.mxu0 0.0
        %1465 = vmatpush1.msra.mxu0 0.0
        %1466 = vmatprep.subr.mxu0 0.0
        %1467 = vmatpush1.msra.mxu0 0.0
        %1468 = vmatprep.subr.mxu0 0.0
        %1469 = vmatpush1.msra.mxu0 0.0
        %1470 = vmatprep.subr.mxu0 0.0
        %1471 = vmatpush1.msra.mxu0 0.0
        %1472 = vmatprep.subr.mxu0 0.0
        %1473 = vmatpush1.msra.mxu0 0.0
        %1474 = vmatprep.subr.mxu0 0.0
        %1475 = vmatpush1.msra.mxu0 0.0
        %1476 = vmatprep.subr.mxu0 0.0
        %1477 = vmatpush1.msra.mxu0 0.0
        %1478 = vmatprep.subr.mxu0 0.0
        %1479 = vmatpush1.msra.mxu0 0.0
        %1480 = vmatprep.subr.mxu0 0.0
        %1481 = vmatpush1.msra.mxu0 0.0
        %1482 = vmatprep.subr.mxu0 0.0
        %1483 = vmatpush1.msra.mxu0 0.0
        %1484 = vmatprep.subr.mxu0 0.0
        %1485 = vmatpush1.msra.mxu0 0.0
        %1486 = vmatprep.subr.mxu0 0.0
        %1487 = vmatpush1.msra.mxu0 0.0
        %1488 = vmatprep.subr.mxu0 0.0
        %1489 = vmatpush1.msra.mxu0 0.0
        %1490 = vmatprep.subr.mxu0 0.0
        %1491 = vmatpush1.msra.mxu0 0.0
        %1492 = vmatprep.subr.mxu0 0.0
        %1493 = vmatpush1.msra.mxu0 0.0
        %1494 = vmatprep.subr.mxu0 0.0
        %1495 = vmatpush1.msra.mxu0 0.0
        %1496 = vmatprep.subr.mxu0 0.0
        %1497 = vmatpush1.msra.mxu0 0.0
        %1498 = vmatprep.subr.mxu0 0.0
        %1499 = vmatpush1.msra.mxu0 0.0
        %1500 = vmatprep.subr.mxu0 0.0
        %1501 = vmatpush1.msra.mxu0 0.0
        %1502 = vmatprep.subr.mxu0 0.0
        %1503 = vmatpush1.msra.mxu0 0.0
        %1504 = vmatprep.subr.mxu0 0.0
        %1505 = vmatpush1.msra.mxu0 0.0
        %1506 = vmatprep.subr.mxu0 0.0
        %1507 = vmatpush1.msra.mxu0 0.0
        %1508 = vmatprep.subr.mxu0 0.0
        %1509 = vmatpush1.msra.mxu0 0.0
        %1510 = vmatprep.subr.mxu0 0.0
        %1511 = vmatpush1.msra.mxu0 0.0
        %1512 = vmatprep.subr.mxu0 0.0
        %1513 = vmatpush1.msra.mxu0 0.0
        %1514 = vmatprep.subr.mxu0 0.0
        %1515 = vmatpush1.msra.mxu0 0.0
        %1516 = vmatprep.mubr.f32.mxu0 0.0
        %1517 = vmatmul.mubr.f32.gmra.mrb[0].mxu0 %v1450
        %v1518 = vpop.f32.mrb[0].mxu0
        %v1519 = vadd.f32 0.0, %v1518
        %v1520 = vpop.f32.mrb[0].mxu0
        %1521 = vdwg.mxu0
        %1522 = vrot.lane.b32.xlu0 %v282, 56
        %v1523 = vpop.permute.xlu0 %1522
        %v1526 = vsel %vm288, %v1277, 0
        %1528 = vmatprep.subr.mxu0 0.0
        %1529 = vmatpush1.msra.mxu0 %v1523
        %1530 = vmatprep.subr.mxu0 0.0
        %1531 = vmatpush1.msra.mxu0 0.0
        %1532 = vmatprep.subr.mxu0 0.0
        %1533 = vmatpush1.msra.mxu0 0.0
        %1534 = vmatprep.subr.mxu0 0.0
        %1535 = vmatpush1.msra.mxu0 0.0
        %1536 = vmatprep.subr.mxu0 0.0
        %1537 = vmatpush1.msra.mxu0 0.0
        %1538 = vmatprep.subr.mxu0 0.0
        %1539 = vmatpush1.msra.mxu0 0.0
        %1540 = vmatprep.subr.mxu0 0.0
        %1541 = vmatpush1.msra.mxu0 0.0
        %1542 = vmatprep.subr.mxu0 0.0
        %1543 = vmatpush1.msra.mxu0 0.0
        %1544 = vmatprep.subr.mxu0 0.0
        %1545 = vmatpush1.msra.mxu0 0.0
        %1546 = vmatprep.subr.mxu0 0.0
        %1547 = vmatpush1.msra.mxu0 0.0
        %1548 = vmatprep.subr.mxu0 0.0
        %1549 = vmatpush1.msra.mxu0 0.0
        %1550 = vmatprep.subr.mxu0 0.0
        %1551 = vmatpush1.msra.mxu0 0.0
        %1552 = vmatprep.subr.mxu0 0.0
        %1553 = vmatpush1.msra.mxu0 0.0
        %1554 = vmatprep.subr.mxu0 0.0
        %1555 = vmatpush1.msra.mxu0 0.0
        %1556 = vmatprep.subr.mxu0 0.0
        %1557 = vmatpush1.msra.mxu0 0.0
        %1558 = vmatprep.subr.mxu0 0.0
        %1559 = vmatpush1.msra.mxu0 0.0
        %1560 = vmatprep.subr.mxu0 0.0
        %1561 = vmatpush1.msra.mxu0 0.0
        %1562 = vmatprep.subr.mxu0 0.0
        %1563 = vmatpush1.msra.mxu0 0.0
        %1564 = vmatprep.subr.mxu0 0.0
        %1565 = vmatpush1.msra.mxu0 0.0
        %1566 = vmatprep.subr.mxu0 0.0
        %1567 = vmatpush1.msra.mxu0 0.0
        %1568 = vmatprep.subr.mxu0 0.0
        %1569 = vmatpush1.msra.mxu0 0.0
        %1570 = vmatprep.subr.mxu0 0.0
        %1571 = vmatpush1.msra.mxu0 0.0
        %1572 = vmatprep.subr.mxu0 0.0
        %1573 = vmatpush1.msra.mxu0 0.0
        %1574 = vmatprep.subr.mxu0 0.0
        %1575 = vmatpush1.msra.mxu0 0.0
        %1576 = vmatprep.subr.mxu0 0.0
        %1577 = vmatpush1.msra.mxu0 0.0
        %1578 = vmatprep.subr.mxu0 0.0
        %1579 = vmatpush1.msra.mxu0 0.0
        %1580 = vmatprep.subr.mxu0 0.0
        %1581 = vmatpush1.msra.mxu0 0.0
        %1582 = vmatprep.subr.mxu0 0.0
        %1583 = vmatpush1.msra.mxu0 0.0
        %1584 = vmatprep.subr.mxu0 0.0
        %1585 = vmatpush1.msra.mxu0 0.0
        %1586 = vmatprep.subr.mxu0 0.0
        %1587 = vmatpush1.msra.mxu0 0.0
        %1588 = vmatprep.subr.mxu0 0.0
        %1589 = vmatpush1.msra.mxu0 0.0
        %1590 = vmatprep.subr.mxu0 0.0
        %1591 = vmatpush1.msra.mxu0 0.0
        %1592 = vmatprep.mubr.f32.mxu0 0.0
        %1593 = vmatmul.mubr.f32.gmra.mrb[0].mxu0 %v1526
        %v1594 = vpop.f32.mrb[0].mxu0
        %v1595 = vadd.f32 0.0, %v1594
        %v1596 = vpop.f32.mrb[0].mxu0
        %1597 = vdwg.mxu0
        %v1598 = vmul.f32 %v1367, %v1290
        %v1599 = vmul.f32 %v1443, %v1291
        %v1600 = vmul.f32 %v1519, %v1292
        %v1601 = vmul.f32 %v1595, %v1293
        %1602 = vrot.lane.b32.xlu0 %v267, 112
        %v1603 = vpop.permute.xlu0 %1602
        %1604 = vrot.lane.b32.xlu0 %v267, 80
        %v1605 = vpop.permute.xlu0 %1604
        %v1606 = vsel %vm288, %v1603, 0
        %v1608 = vsel %vm288, %v1605, 0
        %1610 = vmatprep.subr.mxu0 0.0
        %1611 = vmatpush1.xpose.msra.mxu0 %v1608
        %1612 = vmatprep.subr.mxu0 0.0
        %1613 = vmatpush1.xpose.msra.mxu0 0.0
        %1614 = vmatprep.subr.mxu0 0.0
        %1615 = vmatpush1.xpose.msra.mxu0 0.0
        %1616 = vmatprep.subr.mxu0 0.0
        %1617 = vmatpush1.xpose.msra.mxu0 0.0
        %1618 = vmatprep.subr.mxu0 0.0
        %1619 = vmatpush1.xpose.msra.mxu0 0.0
        %1620 = vmatprep.subr.mxu0 0.0
        %1621 = vmatpush1.xpose.msra.mxu0 0.0
        %1622 = vmatprep.subr.mxu0 0.0
        %1623 = vmatpush1.xpose.msra.mxu0 0.0
        %1624 = vmatprep.subr.mxu0 0.0
        %1625 = vmatpush1.xpose.msra.mxu0 0.0
        %1626 = vmatprep.subr.mxu0 0.0
        %1627 = vmatpush1.xpose.msra.mxu0 0.0
        %1628 = vmatprep.subr.mxu0 0.0
        %1629 = vmatpush1.xpose.msra.mxu0 0.0
        %1630 = vmatprep.subr.mxu0 0.0
        %1631 = vmatpush1.xpose.msra.mxu0 0.0
        %1632 = vmatprep.subr.mxu0 0.0
        %1633 = vmatpush1.xpose.msra.mxu0 0.0
        %1634 = vmatprep.subr.mxu0 0.0
        %1635 = vmatpush1.xpose.msra.mxu0 0.0
        %1636 = vmatprep.subr.mxu0 0.0
        %1637 = vmatpush1.xpose.msra.mxu0 0.0
        %1638 = vmatprep.subr.mxu0 0.0
        %1639 = vmatpush1.xpose.msra.mxu0 0.0
        %1640 = vmatprep.subr.mxu0 0.0
        %1641 = vmatpush1.xpose.msra.mxu0 0.0
        %1642 = vmatprep.subr.mxu0 0.0
        %1643 = vmatpush1.xpose.msra.mxu0 0.0
        %1644 = vmatprep.subr.mxu0 0.0
        %1645 = vmatpush1.xpose.msra.mxu0 0.0
        %1646 = vmatprep.subr.mxu0 0.0
        %1647 = vmatpush1.xpose.msra.mxu0 0.0
        %1648 = vmatprep.subr.mxu0 0.0
        %1649 = vmatpush1.xpose.msra.mxu0 0.0
        %1650 = vmatprep.subr.mxu0 0.0
        %1651 = vmatpush1.xpose.msra.mxu0 0.0
        %1652 = vmatprep.subr.mxu0 0.0
        %1653 = vmatpush1.xpose.msra.mxu0 0.0
        %1654 = vmatprep.subr.mxu0 0.0
        %1655 = vmatpush1.xpose.msra.mxu0 0.0
        %1656 = vmatprep.subr.mxu0 0.0
        %1657 = vmatpush1.xpose.msra.mxu0 0.0
        %1658 = vmatprep.subr.mxu0 0.0
        %1659 = vmatpush1.xpose.msra.mxu0 0.0
        %1660 = vmatprep.subr.mxu0 0.0
        %1661 = vmatpush1.xpose.msra.mxu0 0.0
        %1662 = vmatprep.subr.mxu0 0.0
        %1663 = vmatpush1.xpose.msra.mxu0 0.0
        %1664 = vmatprep.subr.mxu0 0.0
        %1665 = vmatpush1.xpose.msra.mxu0 0.0
        %1666 = vmatprep.subr.mxu0 0.0
        %1667 = vmatpush1.xpose.msra.mxu0 0.0
        %1668 = vmatprep.subr.mxu0 0.0
        %1669 = vmatpush1.xpose.msra.mxu0 0.0
        %1670 = vmatprep.subr.mxu0 0.0
        %1671 = vmatpush1.xpose.msra.mxu0 0.0
        %1672 = vmatprep.subr.mxu0 0.0
        %1673 = vmatpush1.xpose.msra.mxu0 0.0
        %1674 = vmatprep.mubr.f32.mxu0 0.0
        %1675 = vmatmul.mubr.f32.gmra.mrb[0].mxu0 %v1606
        %v1676 = vpop.f32.mrb[0].mxu0
        %v1677 = vadd.f32 0.0, %v1676
        %v1678 = vpop.f32.mrb[0].mxu0
        %1679 = vdwg.mxu0
        %1680 = vrot.lane.b32.xlu0 %v272, 112
        %v1681 = vpop.permute.xlu0 %1680
        %1682 = vrot.lane.b32.xlu0 %v272, 80
        %v1683 = vpop.permute.xlu0 %1682
        %v1684 = vsel %vm288, %v1681, 0
        %v1686 = vsel %vm288, %v1683, 0
        %1688 = vmatprep.subr.mxu0 0.0
        %1689 = vmatpush1.xpose.msra.mxu0 %v1686
        %1690 = vmatprep.subr.mxu0 0.0
        %1691 = vmatpush1.xpose.msra.mxu0 0.0
        %1692 = vmatprep.subr.mxu0 0.0
        %1693 = vmatpush1.xpose.msra.mxu0 0.0
        %1694 = vmatprep.subr.mxu0 0.0
        %1695 = vmatpush1.xpose.msra.mxu0 0.0
        %1696 = vmatprep.subr.mxu0 0.0
        %1697 = vmatpush1.xpose.msra.mxu0 0.0
        %1698 = vmatprep.subr.mxu0 0.0
        %1699 = vmatpush1.xpose.msra.mxu0 0.0
        %1700 = vmatprep.subr.mxu0 0.0
        %1701 = vmatpush1.xpose.msra.mxu0 0.0
        %1702 = vmatprep.subr.mxu0 0.0
        %1703 = vmatpush1.xpose.msra.mxu0 0.0
        %1704 = vmatprep.subr.mxu0 0.0
        %1705 = vmatpush1.xpose.msra.mxu0 0.0
        %1706 = vmatprep.subr.mxu0 0.0
        %1707 = vmatpush1.xpose.msra.mxu0 0.0
        %1708 = vmatprep.subr.mxu0 0.0
        %1709 = vmatpush1.xpose.msra.mxu0 0.0
        %1710 = vmatprep.subr.mxu0 0.0
        %1711 = vmatpush1.xpose.msra.mxu0 0.0
        %1712 = vmatprep.subr.mxu0 0.0
        %1713 = vmatpush1.xpose.msra.mxu0 0.0
        %1714 = vmatprep.subr.mxu0 0.0
        %1715 = vmatpush1.xpose.msra.mxu0 0.0
        %1716 = vmatprep.subr.mxu0 0.0
        %1717 = vmatpush1.xpose.msra.mxu0 0.0
        %1718 = vmatprep.subr.mxu0 0.0
        %1719 = vmatpush1.xpose.msra.mxu0 0.0
        %1720 = vmatprep.subr.mxu0 0.0
        %1721 = vmatpush1.xpose.msra.mxu0 0.0
        %1722 = vmatprep.subr.mxu0 0.0
        %1723 = vmatpush1.xpose.msra.mxu0 0.0
        %1724 = vmatprep.subr.mxu0 0.0
        %1725 = vmatpush1.xpose.msra.mxu0 0.0
        %1726 = vmatprep.subr.mxu0 0.0
        %1727 = vmatpush1.xpose.msra.mxu0 0.0
        %1728 = vmatprep.subr.mxu0 0.0
        %1729 = vmatpush1.xpose.msra.mxu0 0.0
        %1730 = vmatprep.subr.mxu0 0.0
        %1731 = vmatpush1.xpose.msra.mxu0 0.0
        %1732 = vmatprep.subr.mxu0 0.0
        %1733 = vmatpush1.xpose.msra.mxu0 0.0
        %1734 = vmatprep.subr.mxu0 0.0
        %1735 = vmatpush1.xpose.msra.mxu0 0.0
        %1736 = vmatprep.subr.mxu0 0.0
        %1737 = vmatpush1.xpose.msra.mxu0 0.0
        %1738 = vmatprep.subr.mxu0 0.0
        %1739 = vmatpush1.xpose.msra.mxu0 0.0
        %1740 = vmatprep.subr.mxu0 0.0
        %1741 = vmatpush1.xpose.msra.mxu0 0.0
        %1742 = vmatprep.subr.mxu0 0.0
        %1743 = vmatpush1.xpose.msra.mxu0 0.0
        %1744 = vmatprep.subr.mxu0 0.0
        %1745 = vmatpush1.xpose.msra.mxu0 0.0
        %1746 = vmatprep.subr.mxu0 0.0
        %1747 = vmatpush1.xpose.msra.mxu0 0.0
        %1748 = vmatprep.subr.mxu0 0.0
        %1749 = vmatpush1.xpose.msra.mxu0 0.0
        %1750 = vmatprep.subr.mxu0 0.0
        %1751 = vmatpush1.xpose.msra.mxu0 0.0
        %1752 = vmatprep.mubr.f32.mxu0 0.0
        %1753 = vmatmul.mubr.f32.gmra.mrb[0].mxu0 %v1684
        %v1754 = vpop.f32.mrb[0].mxu0
        %v1755 = vadd.f32 0.0, %v1754
        %v1756 = vpop.f32.mrb[0].mxu0
        %1757 = vdwg.mxu0
        %1758 = vrot.lane.b32.xlu0 %v277, 112
        %v1759 = vpop.permute.xlu0 %1758
        %1760 = vrot.lane.b32.xlu0 %v277, 80
        %v1761 = vpop.permute.xlu0 %1760
        %v1762 = vsel %vm288, %v1759, 0
        %v1764 = vsel %vm288, %v1761, 0
        %1766 = vmatprep.subr.mxu0 0.0
        %1767 = vmatpush1.xpose.msra.mxu0 %v1764
        %1768 = vmatprep.subr.mxu0 0.0
        %1769 = vmatpush1.xpose.msra.mxu0 0.0
        %1770 = vmatprep.subr.mxu0 0.0
        %1771 = vmatpush1.xpose.msra.mxu0 0.0
        %1772 = vmatprep.subr.mxu0 0.0
        %1773 = vmatpush1.xpose.msra.mxu0 0.0
        %1774 = vmatprep.subr.mxu0 0.0
        %1775 = vmatpush1.xpose.msra.mxu0 0.0
        %1776 = vmatprep.subr.mxu0 0.0
        %1777 = vmatpush1.xpose.msra.mxu0 0.0
        %1778 = vmatprep.subr.mxu0 0.0
        %1779 = vmatpush1.xpose.msra.mxu0 0.0
        %1780 = vmatprep.subr.mxu0 0.0
        %1781 = vmatpush1.xpose.msra.mxu0 0.0
        %1782 = vmatprep.subr.mxu0 0.0
        %1783 = vmatpush1.xpose.msra.mxu0 0.0
        %1784 = vmatprep.subr.mxu0 0.0
        %1785 = vmatpush1.xpose.msra.mxu0 0.0
        %1786 = vmatprep.subr.mxu0 0.0
        %1787 = vmatpush1.xpose.msra.mxu0 0.0
        %1788 = vmatprep.subr.mxu0 0.0
        %1789 = vmatpush1.xpose.msra.mxu0 0.0
        %1790 = vmatprep.subr.mxu0 0.0
        %1791 = vmatpush1.xpose.msra.mxu0 0.0
        %1792 = vmatprep.subr.mxu0 0.0
        %1793 = vmatpush1.xpose.msra.mxu0 0.0
        %1794 = vmatprep.subr.mxu0 0.0
        %1795 = vmatpush1.xpose.msra.mxu0 0.0
        %1796 = vmatprep.subr.mxu0 0.0
        %1797 = vmatpush1.xpose.msra.mxu0 0.0
        %1798 = vmatprep.subr.mxu0 0.0
        %1799 = vmatpush1.xpose.msra.mxu0 0.0
        %1800 = vmatprep.subr.mxu0 0.0
        %1801 = vmatpush1.xpose.msra.mxu0 0.0
        %1802 = vmatprep.subr.mxu0 0.0
        %1803 = vmatpush1.xpose.msra.mxu0 0.0
        %1804 = vmatprep.subr.mxu0 0.0
        %1805 = vmatpush1.xpose.msra.mxu0 0.0
        %1806 = vmatprep.subr.mxu0 0.0
        %1807 = vmatpush1.xpose.msra.mxu0 0.0
        %1808 = vmatprep.subr.mxu0 0.0
        %1809 = vmatpush1.xpose.msra.mxu0 0.0
        %1810 = vmatprep.subr.mxu0 0.0
        %1811 = vmatpush1.xpose.msra.mxu0 0.0
        %1812 = vmatprep.subr.mxu0 0.0
        %1813 = vmatpush1.xpose.msra.mxu0 0.0
        %1814 = vmatprep.subr.mxu0 0.0
        %1815 = vmatpush1.xpose.msra.mxu0 0.0
        %1816 = vmatprep.subr.mxu0 0.0
        %1817 = vmatpush1.xpose.msra.mxu0 0.0
        %1818 = vmatprep.subr.mxu0 0.0
        %1819 = vmatpush1.xpose.msra.mxu0 0.0
        %1820 = vmatprep.subr.mxu0 0.0
        %1821 = vmatpush1.xpose.msra.mxu0 0.0
        %1822 = vmatprep.subr.mxu0 0.0
        %1823 = vmatpush1.xpose.msra.mxu0 0.0
        %1824 = vmatprep.subr.mxu0 0.0
        %1825 = vmatpush1.xpose.msra.mxu0 0.0
        %1826 = vmatprep.subr.mxu0 0.0
        %1827 = vmatpush1.xpose.msra.mxu0 0.0
        %1828 = vmatprep.subr.mxu0 0.0
        %1829 = vmatpush1.xpose.msra.mxu0 0.0
        %1830 = vmatprep.mubr.f32.mxu0 0.0
        %1831 = vmatmul.mubr.f32.gmra.mrb[0].mxu0 %v1762
        %v1832 = vpop.f32.mrb[0].mxu0
        %v1833 = vadd.f32 0.0, %v1832
        %v1834 = vpop.f32.mrb[0].mxu0
        %1835 = vdwg.mxu0
        %1836 = vrot.lane.b32.xlu0 %v282, 112
        %v1837 = vpop.permute.xlu0 %1836
        %1838 = vrot.lane.b32.xlu0 %v282, 80
        %v1839 = vpop.permute.xlu0 %1838
        %v1840 = vsel %vm288, %v1837, 0
        %v1842 = vsel %vm288, %v1839, 0
        %1844 = vmatprep.subr.mxu0 0.0
        %1845 = vmatpush1.xpose.msra.mxu0 %v1842
        %1846 = vmatprep.subr.mxu0 0.0
        %1847 = vmatpush1.xpose.msra.mxu0 0.0
        %1848 = vmatprep.subr.mxu0 0.0
        %1849 = vmatpush1.xpose.msra.mxu0 0.0
        %1850 = vmatprep.subr.mxu0 0.0
        %1851 = vmatpush1.xpose.msra.mxu0 0.0
        %1852 = vmatprep.subr.mxu0 0.0
        %1853 = vmatpush1.xpose.msra.mxu0 0.0
        %1854 = vmatprep.subr.mxu0 0.0
        %1855 = vmatpush1.xpose.msra.mxu0 0.0
        %1856 = vmatprep.subr.mxu0 0.0
        %1857 = vmatpush1.xpose.msra.mxu0 0.0
        %1858 = vmatprep.subr.mxu0 0.0
        %1859 = vmatpush1.xpose.msra.mxu0 0.0
        %1860 = vmatprep.subr.mxu0 0.0
        %1861 = vmatpush1.xpose.msra.mxu0 0.0
        %1862 = vmatprep.subr.mxu0 0.0
        %1863 = vmatpush1.xpose.msra.mxu0 0.0
        %1864 = vmatprep.subr.mxu0 0.0
        %1865 = vmatpush1.xpose.msra.mxu0 0.0
        %1866 = vmatprep.subr.mxu0 0.0
        %1867 = vmatpush1.xpose.msra.mxu0 0.0
        %1868 = vmatprep.subr.mxu0 0.0
        %1869 = vmatpush1.xpose.msra.mxu0 0.0
        %1870 = vmatprep.subr.mxu0 0.0
        %1871 = vmatpush1.xpose.msra.mxu0 0.0
        %1872 = vmatprep.subr.mxu0 0.0
        %1873 = vmatpush1.xpose.msra.mxu0 0.0
        %1874 = vmatprep.subr.mxu0 0.0
        %1875 = vmatpush1.xpose.msra.mxu0 0.0
        %1876 = vmatprep.subr.mxu0 0.0
        %1877 = vmatpush1.xpose.msra.mxu0 0.0
        %1878 = vmatprep.subr.mxu0 0.0
        %1879 = vmatpush1.xpose.msra.mxu0 0.0
        %1880 = vmatprep.subr.mxu0 0.0
        %1881 = vmatpush1.xpose.msra.mxu0 0.0
        %1882 = vmatprep.subr.mxu0 0.0
        %1883 = vmatpush1.xpose.msra.mxu0 0.0
        %1884 = vmatprep.subr.mxu0 0.0
        %1885 = vmatpush1.xpose.msra.mxu0 0.0
        %1886 = vmatprep.subr.mxu0 0.0
        %1887 = vmatpush1.xpose.msra.mxu0 0.0
        %1888 = vmatprep.subr.mxu0 0.0
        %1889 = vmatpush1.xpose.msra.mxu0 0.0
        %1890 = vmatprep.subr.mxu0 0.0
        %1891 = vmatpush1.xpose.msra.mxu0 0.0
        %1892 = vmatprep.subr.mxu0 0.0
        %1893 = vmatpush1.xpose.msra.mxu0 0.0
        %1894 = vmatprep.subr.mxu0 0.0
        %1895 = vmatpush1.xpose.msra.mxu0 0.0
        %1896 = vmatprep.subr.mxu0 0.0
        %1897 = vmatpush1.xpose.msra.mxu0 0.0
        %1898 = vmatprep.subr.mxu0 0.0
        %1899 = vmatpush1.xpose.msra.mxu0 0.0
        %1900 = vmatprep.subr.mxu0 0.0
        %1901 = vmatpush1.xpose.msra.mxu0 0.0
        %1902 = vmatprep.subr.mxu0 0.0
        %1903 = vmatpush1.xpose.msra.mxu0 0.0
        %1904 = vmatprep.subr.mxu0 0.0
        %1905 = vmatpush1.xpose.msra.mxu0 0.0
        %1906 = vmatprep.subr.mxu0 0.0
        %1907 = vmatpush1.xpose.msra.mxu0 0.0
        %1908 = vmatprep.mubr.f32.mxu0 0.0
        %1909 = vmatmul.mubr.f32.gmra.mrb[0].mxu0 %v1840
        %v1910 = vpop.f32.mrb[0].mxu0
        %v1911 = vadd.f32 0.0, %v1910
        %v1912 = vpop.f32.mrb[0].mxu0
        %1913 = vdwg.mxu0
        %v1914 = vsel %vm288, %v1677, -inf
        %1915 = vmax.xlane.f32.xlu0 %v1914
        %v1916 = vpop.xlane.xlu0 %1915
        %v1917 = vsel %vm288, %v1755, -inf
        %1918 = vmax.xlane.f32.xlu0 %v1917
        %v1919 = vpop.xlane.xlu0 %1918
        %v1920 = vsel %vm288, %v1833, -inf
        %1921 = vmax.xlane.f32.xlu0 %v1920
        %v1922 = vpop.xlane.xlu0 %1921
        %v1923 = vsel %vm288, %v1911, -inf
        %1924 = vmax.xlane.f32.xlu0 %v1923
        %v1925 = vpop.xlane.xlu0 %1924
        %v1926 = vsub.f32 %v1677, %v1916
        %v1927 = vsub.f32 %v1755, %v1919
        %v1928 = vsub.f32 %v1833, %v1922
        %v1929 = vsub.f32 %v1911, %v1925
        %v1930 = vmul.f32 %v1926, 1.442695
        %v1931 = vpow.pop %v1930
        %v1932 = vmul.f32 %v1927, 1.442695
        %v1933 = vpow.pop %v1932
        %v1934 = vmul.f32 %v1928, 1.442695
        %v1935 = vpow.pop %v1934
        %v1936 = vmul.f32 %v1929, 1.442695
        %v1937 = vpow.pop %v1936
        %v1938 = vsel %vm288, %v1931, 0.0
        %1939 = vadd.xlane.f32.xlu0 %v1938
        %v1940 = vpop.xlane.xlu0 %1939
        %v1941 = vsel %vm288, %v1933, 0.0
        %1942 = vadd.xlane.f32.xlu0 %v1941
        %v1943 = vpop.xlane.xlu0 %1942
        %v1944 = vsel %vm288, %v1935, 0.0
        %1945 = vadd.xlane.f32.xlu0 %v1944
        %v1946 = vpop.xlane.xlu0 %1945
        %v1947 = vsel %vm288, %v1937, 0.0
        %1948 = vadd.xlane.f32.xlu0 %v1947
        %v1949 = vpop.xlane.xlu0 %1948
        %v1950 = vrcp.pop %v1940
        %v1951 = vrcp.pop %v1943
        %v1952 = vrcp.pop %v1946
        %v1953 = vrcp.pop %v1949
        %1954 = vrot.lane.b32.xlu0 %v267, 48
        %v1955 = vpop.permute.xlu0 %1954
        %v1958 = vsel %vm288, %v1931, 0
        %1960 = vmatprep.subr.mxu0 0.0
        %1961 = vmatpush1.msra.mxu0 %v1955
        %1962 = vmatprep.subr.mxu0 0.0
        %1963 = vmatpush1.msra.mxu0 0.0
        %1964 = vmatprep.subr.mxu0 0.0
        %1965 = vmatpush1.msra.mxu0 0.0
        %1966 = vmatprep.subr.mxu0 0.0
        %1967 = vmatpush1.msra.mxu0 0.0
        %1968 = vmatprep.subr.mxu0 0.0
        %1969 = vmatpush1.msra.mxu0 0.0
        %1970 = vmatprep.subr.mxu0 0.0
        %1971 = vmatpush1.msra.mxu0 0.0
        %1972 = vmatprep.subr.mxu0 0.0
        %1973 = vmatpush1.msra.mxu0 0.0
        %1974 = vmatprep.subr.mxu0 0.0
        %1975 = vmatpush1.msra.mxu0 0.0
        %1976 = vmatprep.subr.mxu0 0.0
        %1977 = vmatpush1.msra.mxu0 0.0
        %1978 = vmatprep.subr.mxu0 0.0
        %1979 = vmatpush1.msra.mxu0 0.0
        %1980 = vmatprep.subr.mxu0 0.0
        %1981 = vmatpush1.msra.mxu0 0.0
        %1982 = vmatprep.subr.mxu0 0.0
        %1983 = vmatpush1.msra.mxu0 0.0
        %1984 = vmatprep.subr.mxu0 0.0
        %1985 = vmatpush1.msra.mxu0 0.0
        %1986 = vmatprep.subr.mxu0 0.0
        %1987 = vmatpush1.msra.mxu0 0.0
        %1988 = vmatprep.subr.mxu0 0.0
        %1989 = vmatpush1.msra.mxu0 0.0
        %1990 = vmatprep.subr.mxu0 0.0
        %1991 = vmatpush1.msra.mxu0 0.0
        %1992 = vmatprep.subr.mxu0 0.0
        %1993 = vmatpush1.msra.mxu0 0.0
        %1994 = vmatprep.subr.mxu0 0.0
        %1995 = vmatpush1.msra.mxu0 0.0
        %1996 = vmatprep.subr.mxu0 0.0
        %1997 = vmatpush1.msra.mxu0 0.0
        %1998 = vmatprep.subr.mxu0 0.0
        %1999 = vmatpush1.msra.mxu0 0.0
        %2000 = vmatprep.subr.mxu0 0.0
        %2001 = vmatpush1.msra.mxu0 0.0
        %2002 = vmatprep.subr.mxu0 0.0
        %2003 = vmatpush1.msra.mxu0 0.0
        %2004 = vmatprep.subr.mxu0 0.0
        %2005 = vmatpush1.msra.mxu0 0.0
        %2006 = vmatprep.subr.mxu0 0.0
        %2007 = vmatpush1.msra.mxu0 0.0
        %2008 = vmatprep.subr.mxu0 0.0
        %2009 = vmatpush1.msra.mxu0 0.0
        %2010 = vmatprep.subr.mxu0 0.0
        %2011 = vmatpush1.msra.mxu0 0.0
        %2012 = vmatprep.subr.mxu0 0.0
        %2013 = vmatpush1.msra.mxu0 0.0
        %2014 = vmatprep.subr.mxu0 0.0
        %2015 = vmatpush1.msra.mxu0 0.0
        %2016 = vmatprep.subr.mxu0 0.0
        %2017 = vmatpush1.msra.mxu0 0.0
        %2018 = vmatprep.subr.mxu0 0.0
        %2019 = vmatpush1.msra.mxu0 0.0
        %2020 = vmatprep.subr.mxu0 0.0
        %2021 = vmatpush1.msra.mxu0 0.0
        %2022 = vmatprep.subr.mxu0 0.0
        %2023 = vmatpush1.msra.mxu0 0.0
        %2024 = vmatprep.mubr.f32.mxu0 0.0
        %2025 = vmatmul.mubr.f32.gmra.mrb[0].mxu0 %v1958
        %v2026 = vpop.f32.mrb[0].mxu0
        %v2027 = vadd.f32 0.0, %v2026
        %v2028 = vpop.f32.mrb[0].mxu0
        %2029 = vdwg.mxu0
        %2030 = vrot.lane.b32.xlu0 %v272, 48
        %v2031 = vpop.permute.xlu0 %2030
        %v2034 = vsel %vm288, %v1933, 0
        %2036 = vmatprep.subr.mxu0 0.0
        %2037 = vmatpush1.msra.mxu0 %v2031
        %2038 = vmatprep.subr.mxu0 0.0
        %2039 = vmatpush1.msra.mxu0 0.0
        %2040 = vmatprep.subr.mxu0 0.0
        %2041 = vmatpush1.msra.mxu0 0.0
        %2042 = vmatprep.subr.mxu0 0.0
        %2043 = vmatpush1.msra.mxu0 0.0
        %2044 = vmatprep.subr.mxu0 0.0
        %2045 = vmatpush1.msra.mxu0 0.0
        %2046 = vmatprep.subr.mxu0 0.0
        %2047 = vmatpush1.msra.mxu0 0.0
        %2048 = vmatprep.subr.mxu0 0.0
        %2049 = vmatpush1.msra.mxu0 0.0
        %2050 = vmatprep.subr.mxu0 0.0
        %2051 = vmatpush1.msra.mxu0 0.0
        %2052 = vmatprep.subr.mxu0 0.0
        %2053 = vmatpush1.msra.mxu0 0.0
        %2054 = vmatprep.subr.mxu0 0.0
        %2055 = vmatpush1.msra.mxu0 0.0
        %2056 = vmatprep.subr.mxu0 0.0
        %2057 = vmatpush1.msra.mxu0 0.0
        %2058 = vmatprep.subr.mxu0 0.0
        %2059 = vmatpush1.msra.mxu0 0.0
        %2060 = vmatprep.subr.mxu0 0.0
        %2061 = vmatpush1.msra.mxu0 0.0
        %2062 = vmatprep.subr.mxu0 0.0
        %2063 = vmatpush1.msra.mxu0 0.0
        %2064 = vmatprep.subr.mxu0 0.0
        %2065 = vmatpush1.msra.mxu0 0.0
        %2066 = vmatprep.subr.mxu0 0.0
        %2067 = vmatpush1.msra.mxu0 0.0
        %2068 = vmatprep.subr.mxu0 0.0
        %2069 = vmatpush1.msra.mxu0 0.0
        %2070 = vmatprep.subr.mxu0 0.0
        %2071 = vmatpush1.msra.mxu0 0.0
        %2072 = vmatprep.subr.mxu0 0.0
        %2073 = vmatpush1.msra.mxu0 0.0
        %2074 = vmatprep.subr.mxu0 0.0
        %2075 = vmatpush1.msra.mxu0 0.0
        %2076 = vmatprep.subr.mxu0 0.0
        %2077 = vmatpush1.msra.mxu0 0.0
        %2078 = vmatprep.subr.mxu0 0.0
        %2079 = vmatpush1.msra.mxu0 0.0
        %2080 = vmatprep.subr.mxu0 0.0
        %2081 = vmatpush1.msra.mxu0 0.0
        %2082 = vmatprep.subr.mxu0 0.0
        %2083 = vmatpush1.msra.mxu0 0.0
        %2084 = vmatprep.subr.mxu0 0.0
        %2085 = vmatpush1.msra.mxu0 0.0
        %2086 = vmatprep.subr.mxu0 0.0
        %2087 = vmatpush1.msra.mxu0 0.0
        %2088 = vmatprep.subr.mxu0 0.0
        %2089 = vmatpush1.msra.mxu0 0.0
        %2090 = vmatprep.subr.mxu0 0.0
        %2091 = vmatpush1.msra.mxu0 0.0
        %2092 = vmatprep.subr.mxu0 0.0
        %2093 = vmatpush1.msra.mxu0 0.0
        %2094 = vmatprep.subr.mxu0 0.0
        %2095 = vmatpush1.msra.mxu0 0.0
        %2096 = vmatprep.subr.mxu0 0.0
        %2097 = vmatpush1.msra.mxu0 0.0
        %2098 = vmatprep.subr.mxu0 0.0
        %2099 = vmatpush1.msra.mxu0 0.0
        %2100 = vmatprep.mubr.f32.mxu0 0.0
        %2101 = vmatmul.mubr.f32.gmra.mrb[0].mxu0 %v2034
        %v2102 = vpop.f32.mrb[0].mxu0
        %v2103 = vadd.f32 0.0, %v2102
        %v2104 = vpop.f32.mrb[0].mxu0
        %2105 = vdwg.mxu0
        %2106 = vrot.lane.b32.xlu0 %v277, 48
        %v2107 = vpop.permute.xlu0 %2106
        %v2110 = vsel %vm288, %v1935, 0
        %2112 = vmatprep.subr.mxu0 0.0
        %2113 = vmatpush1.msra.mxu0 %v2107
        %2114 = vmatprep.subr.mxu0 0.0
        %2115 = vmatpush1.msra.mxu0 0.0
        %2116 = vmatprep.subr.mxu0 0.0
        %2117 = vmatpush1.msra.mxu0 0.0
        %2118 = vmatprep.subr.mxu0 0.0
        %2119 = vmatpush1.msra.mxu0 0.0
        %2120 = vmatprep.subr.mxu0 0.0
        %2121 = vmatpush1.msra.mxu0 0.0
        %2122 = vmatprep.subr.mxu0 0.0
        %2123 = vmatpush1.msra.mxu0 0.0
        %2124 = vmatprep.subr.mxu0 0.0
        %2125 = vmatpush1.msra.mxu0 0.0
        %2126 = vmatprep.subr.mxu0 0.0
        %2127 = vmatpush1.msra.mxu0 0.0
        %2128 = vmatprep.subr.mxu0 0.0
        %2129 = vmatpush1.msra.mxu0 0.0
        %2130 = vmatprep.subr.mxu0 0.0
        %2131 = vmatpush1.msra.mxu0 0.0
        %2132 = vmatprep.subr.mxu0 0.0
        %2133 = vmatpush1.msra.mxu0 0.0
        %2134 = vmatprep.subr.mxu0 0.0
        %2135 = vmatpush1.msra.mxu0 0.0
        %2136 = vmatprep.subr.mxu0 0.0
        %2137 = vmatpush1.msra.mxu0 0.0
        %2138 = vmatprep.subr.mxu0 0.0
        %2139 = vmatpush1.msra.mxu0 0.0
        %2140 = vmatprep.subr.mxu0 0.0
        %2141 = vmatpush1.msra.mxu0 0.0
        %2142 = vmatprep.subr.mxu0 0.0
        %2143 = vmatpush1.msra.mxu0 0.0
        %2144 = vmatprep.subr.mxu0 0.0
        %2145 = vmatpush1.msra.mxu0 0.0
        %2146 = vmatprep.subr.mxu0 0.0
        %2147 = vmatpush1.msra.mxu0 0.0
        %2148 = vmatprep.subr.mxu0 0.0
        %2149 = vmatpush1.msra.mxu0 0.0
        %2150 = vmatprep.subr.mxu0 0.0
        %2151 = vmatpush1.msra.mxu0 0.0
        %2152 = vmatprep.subr.mxu0 0.0
        %2153 = vmatpush1.msra.mxu0 0.0
        %2154 = vmatprep.subr.mxu0 0.0
        %2155 = vmatpush1.msra.mxu0 0.0
        %2156 = vmatprep.subr.mxu0 0.0
        %2157 = vmatpush1.msra.mxu0 0.0
        %2158 = vmatprep.subr.mxu0 0.0
        %2159 = vmatpush1.msra.mxu0 0.0
        %2160 = vmatprep.subr.mxu0 0.0
        %2161 = vmatpush1.msra.mxu0 0.0
        %2162 = vmatprep.subr.mxu0 0.0
        %2163 = vmatpush1.msra.mxu0 0.0
        %2164 = vmatprep.subr.mxu0 0.0
        %2165 = vmatpush1.msra.mxu0 0.0
        %2166 = vmatprep.subr.mxu0 0.0
        %2167 = vmatpush1.msra.mxu0 0.0
        %2168 = vmatprep.subr.mxu0 0.0
        %2169 = vmatpush1.msra.mxu0 0.0
        %2170 = vmatprep.subr.mxu0 0.0
        %2171 = vmatpush1.msra.mxu0 0.0
        %2172 = vmatprep.subr.mxu0 0.0
        %2173 = vmatpush1.msra.mxu0 0.0
        %2174 = vmatprep.subr.mxu0 0.0
        %2175 = vmatpush1.msra.mxu0 0.0
        %2176 = vmatprep.mubr.f32.mxu0 0.0
        %2177 = vmatmul.mubr.f32.gmra.mrb[0].mxu0 %v2110
        %v2178 = vpop.f32.mrb[0].mxu0
        %v2179 = vadd.f32 0.0, %v2178
        %v2180 = vpop.f32.mrb[0].mxu0
        %2181 = vdwg.mxu0
        %2182 = vrot.lane.b32.xlu0 %v282, 48
        %v2183 = vpop.permute.xlu0 %2182
        %v2186 = vsel %vm288, %v1937, 0
        %2188 = vmatprep.subr.mxu0 0.0
        %2189 = vmatpush1.msra.mxu0 %v2183
        %2190 = vmatprep.subr.mxu0 0.0
        %2191 = vmatpush1.msra.mxu0 0.0
        %2192 = vmatprep.subr.mxu0 0.0
        %2193 = vmatpush1.msra.mxu0 0.0
        %2194 = vmatprep.subr.mxu0 0.0
        %2195 = vmatpush1.msra.mxu0 0.0
        %2196 = vmatprep.subr.mxu0 0.0
        %2197 = vmatpush1.msra.mxu0 0.0
        %2198 = vmatprep.subr.mxu0 0.0
        %2199 = vmatpush1.msra.mxu0 0.0
        %2200 = vmatprep.subr.mxu0 0.0
        %2201 = vmatpush1.msra.mxu0 0.0
        %2202 = vmatprep.subr.mxu0 0.0
        %2203 = vmatpush1.msra.mxu0 0.0
        %2204 = vmatprep.subr.mxu0 0.0
        %2205 = vmatpush1.msra.mxu0 0.0
        %2206 = vmatprep.subr.mxu0 0.0
        %2207 = vmatpush1.msra.mxu0 0.0
        %2208 = vmatprep.subr.mxu0 0.0
        %2209 = vmatpush1.msra.mxu0 0.0
        %2210 = vmatprep.subr.mxu0 0.0
        %2211 = vmatpush1.msra.mxu0 0.0
        %2212 = vmatprep.subr.mxu0 0.0
        %2213 = vmatpush1.msra.mxu0 0.0
        %2214 = vmatprep.subr.mxu0 0.0
        %2215 = vmatpush1.msra.mxu0 0.0
        %2216 = vmatprep.subr.mxu0 0.0
        %2217 = vmatpush1.msra.mxu0 0.0
        %2218 = vmatprep.subr.mxu0 0.0
        %2219 = vmatpush1.msra.mxu0 0.0
        %2220 = vmatprep.subr.mxu0 0.0
        %2221 = vmatpush1.msra.mxu0 0.0
        %2222 = vmatprep.subr.mxu0 0.0
        %2223 = vmatpush1.msra.mxu0 0.0
        %2224 = vmatprep.subr.mxu0 0.0
        %2225 = vmatpush1.msra.mxu0 0.0
        %2226 = vmatprep.subr.mxu0 0.0
        %2227 = vmatpush1.msra.mxu0 0.0
        %2228 = vmatprep.subr.mxu0 0.0
        %2229 = vmatpush1.msra.mxu0 0.0
        %2230 = vmatprep.subr.mxu0 0.0
        %2231 = vmatpush1.msra.mxu0 0.0
        %2232 = vmatprep.subr.mxu0 0.0
        %2233 = vmatpush1.msra.mxu0 0.0
        %2234 = vmatprep.subr.mxu0 0.0
        %2235 = vmatpush1.msra.mxu0 0.0
        %2236 = vmatprep.subr.mxu0 0.0
        %2237 = vmatpush1.msra.mxu0 0.0
        %2238 = vmatprep.subr.mxu0 0.0
        %2239 = vmatpush1.msra.mxu0 0.0
        %2240 = vmatprep.subr.mxu0 0.0
        %2241 = vmatpush1.msra.mxu0 0.0
        %2242 = vmatprep.subr.mxu0 0.0
        %2243 = vmatpush1.msra.mxu0 0.0
        %2244 = vmatprep.subr.mxu0 0.0
        %2245 = vmatpush1.msra.mxu0 0.0
        %2246 = vmatprep.subr.mxu0 0.0
        %2247 = vmatpush1.msra.mxu0 0.0
        %2248 = vmatprep.subr.mxu0 0.0
        %2249 = vmatpush1.msra.mxu0 0.0
        %2250 = vmatprep.subr.mxu0 0.0
        %2251 = vmatpush1.msra.mxu0 0.0
        %2252 = vmatprep.mubr.f32.mxu0 0.0
        %2253 = vmatmul.mubr.f32.gmra.mrb[0].mxu0 %v2186
        %v2254 = vpop.f32.mrb[0].mxu0
        %v2255 = vadd.f32 0.0, %v2254
        %v2256 = vpop.f32.mrb[0].mxu0
        %2257 = vdwg.mxu0
        %v2258 = vmul.f32 %v2027, %v1950
        %v2259 = vmul.f32 %v2103, %v1951
        %v2260 = vmul.f32 %v2179, %v1952
        %v2261 = vmul.f32 %v2255, %v1953
        %2262 = vrot.lane.b32.xlu0 %v267, 104
        %v2263 = vpop.permute.xlu0 %2262
        %2264 = vrot.lane.b32.xlu0 %v267, 72
        %v2265 = vpop.permute.xlu0 %2264
        %v2266 = vsel %vm288, %v2263, 0
        %v2268 = vsel %vm288, %v2265, 0
        %2270 = vmatprep.subr.mxu0 0.0
        %2271 = vmatpush1.xpose.msra.mxu0 %v2268
        %2272 = vmatprep.subr.mxu0 0.0
        %2273 = vmatpush1.xpose.msra.mxu0 0.0
        %2274 = vmatprep.subr.mxu0 0.0
        %2275 = vmatpush1.xpose.msra.mxu0 0.0
        %2276 = vmatprep.subr.mxu0 0.0
        %2277 = vmatpush1.xpose.msra.mxu0 0.0
        %2278 = vmatprep.subr.mxu0 0.0
        %2279 = vmatpush1.xpose.msra.mxu0 0.0
        %2280 = vmatprep.subr.mxu0 0.0
        %2281 = vmatpush1.xpose.msra.mxu0 0.0
        %2282 = vmatprep.subr.mxu0 0.0
        %2283 = vmatpush1.xpose.msra.mxu0 0.0
        %2284 = vmatprep.subr.mxu0 0.0
        %2285 = vmatpush1.xpose.msra.mxu0 0.0
        %2286 = vmatprep.subr.mxu0 0.0
        %2287 = vmatpush1.xpose.msra.mxu0 0.0
        %2288 = vmatprep.subr.mxu0 0.0
        %2289 = vmatpush1.xpose.msra.mxu0 0.0
        %2290 = vmatprep.subr.mxu0 0.0
        %2291 = vmatpush1.xpose.msra.mxu0 0.0
        %2292 = vmatprep.subr.mxu0 0.0
        %2293 = vmatpush1.xpose.msra.mxu0 0.0
        %2294 = vmatprep.subr.mxu0 0.0
        %2295 = vmatpush1.xpose.msra.mxu0 0.0
        %2296 = vmatprep.subr.mxu0 0.0
        %2297 = vmatpush1.xpose.msra.mxu0 0.0
        %2298 = vmatprep.subr.mxu0 0.0
        %2299 = vmatpush1.xpose.msra.mxu0 0.0
        %2300 = vmatprep.subr.mxu0 0.0
        %2301 = vmatpush1.xpose.msra.mxu0 0.0
        %2302 = vmatprep.subr.mxu0 0.0
        %2303 = vmatpush1.xpose.msra.mxu0 0.0
        %2304 = vmatprep.subr.mxu0 0.0
        %2305 = vmatpush1.xpose.msra.mxu0 0.0
        %2306 = vmatprep.subr.mxu0 0.0
        %2307 = vmatpush1.xpose.msra.mxu0 0.0
        %2308 = vmatprep.subr.mxu0 0.0
        %2309 = vmatpush1.xpose.msra.mxu0 0.0
        %2310 = vmatprep.subr.mxu0 0.0
        %2311 = vmatpush1.xpose.msra.mxu0 0.0
        %2312 = vmatprep.subr.mxu0 0.0
        %2313 = vmatpush1.xpose.msra.mxu0 0.0
        %2314 = vmatprep.subr.mxu0 0.0
        %2315 = vmatpush1.xpose.msra.mxu0 0.0
        %2316 = vmatprep.subr.mxu0 0.0
        %2317 = vmatpush1.xpose.msra.mxu0 0.0
        %2318 = vmatprep.subr.mxu0 0.0
        %2319 = vmatpush1.xpose.msra.mxu0 0.0
        %2320 = vmatprep.subr.mxu0 0.0
        %2321 = vmatpush1.xpose.msra.mxu0 0.0
        %2322 = vmatprep.subr.mxu0 0.0
        %2323 = vmatpush1.xpose.msra.mxu0 0.0
        %2324 = vmatprep.subr.mxu0 0.0
        %2325 = vmatpush1.xpose.msra.mxu0 0.0
        %2326 = vmatprep.subr.mxu0 0.0
        %2327 = vmatpush1.xpose.msra.mxu0 0.0
        %2328 = vmatprep.subr.mxu0 0.0
        %2329 = vmatpush1.xpose.msra.mxu0 0.0
        %2330 = vmatprep.subr.mxu0 0.0
        %2331 = vmatpush1.xpose.msra.mxu0 0.0
        %2332 = vmatprep.subr.mxu0 0.0
        %2333 = vmatpush1.xpose.msra.mxu0 0.0
        %2334 = vmatprep.mubr.f32.mxu0 0.0
        %2335 = vmatmul.mubr.f32.gmra.mrb[0].mxu0 %v2266
        %v2336 = vpop.f32.mrb[0].mxu0
        %v2337 = vadd.f32 0.0, %v2336
        %v2338 = vpop.f32.mrb[0].mxu0
        %2339 = vdwg.mxu0
        %2340 = vrot.lane.b32.xlu0 %v272, 104
        %v2341 = vpop.permute.xlu0 %2340
        %2342 = vrot.lane.b32.xlu0 %v272, 72
        %v2343 = vpop.permute.xlu0 %2342
        %v2344 = vsel %vm288, %v2341, 0
        %v2346 = vsel %vm288, %v2343, 0
        %2348 = vmatprep.subr.mxu0 0.0
        %2349 = vmatpush1.xpose.msra.mxu0 %v2346
        %2350 = vmatprep.subr.mxu0 0.0
        %2351 = vmatpush1.xpose.msra.mxu0 0.0
        %2352 = vmatprep.subr.mxu0 0.0
        %2353 = vmatpush1.xpose.msra.mxu0 0.0
        %2354 = vmatprep.subr.mxu0 0.0
        %2355 = vmatpush1.xpose.msra.mxu0 0.0
        %2356 = vmatprep.subr.mxu0 0.0
        %2357 = vmatpush1.xpose.msra.mxu0 0.0
        %2358 = vmatprep.subr.mxu0 0.0
        %2359 = vmatpush1.xpose.msra.mxu0 0.0
        %2360 = vmatprep.subr.mxu0 0.0
        %2361 = vmatpush1.xpose.msra.mxu0 0.0
        %2362 = vmatprep.subr.mxu0 0.0
        %2363 = vmatpush1.xpose.msra.mxu0 0.0
        %2364 = vmatprep.subr.mxu0 0.0
        %2365 = vmatpush1.xpose.msra.mxu0 0.0
        %2366 = vmatprep.subr.mxu0 0.0
        %2367 = vmatpush1.xpose.msra.mxu0 0.0
        %2368 = vmatprep.subr.mxu0 0.0
        %2369 = vmatpush1.xpose.msra.mxu0 0.0
        %2370 = vmatprep.subr.mxu0 0.0
        %2371 = vmatpush1.xpose.msra.mxu0 0.0
        %2372 = vmatprep.subr.mxu0 0.0
        %2373 = vmatpush1.xpose.msra.mxu0 0.0
        %2374 = vmatprep.subr.mxu0 0.0
        %2375 = vmatpush1.xpose.msra.mxu0 0.0
        %2376 = vmatprep.subr.mxu0 0.0
        %2377 = vmatpush1.xpose.msra.mxu0 0.0
        %2378 = vmatprep.subr.mxu0 0.0
        %2379 = vmatpush1.xpose.msra.mxu0 0.0
        %2380 = vmatprep.subr.mxu0 0.0
        %2381 = vmatpush1.xpose.msra.mxu0 0.0
        %2382 = vmatprep.subr.mxu0 0.0
        %2383 = vmatpush1.xpose.msra.mxu0 0.0
        %2384 = vmatprep.subr.mxu0 0.0
        %2385 = vmatpush1.xpose.msra.mxu0 0.0
        %2386 = vmatprep.subr.mxu0 0.0
        %2387 = vmatpush1.xpose.msra.mxu0 0.0
        %2388 = vmatprep.subr.mxu0 0.0
        %2389 = vmatpush1.xpose.msra.mxu0 0.0
        %2390 = vmatprep.subr.mxu0 0.0
        %2391 = vmatpush1.xpose.msra.mxu0 0.0
        %2392 = vmatprep.subr.mxu0 0.0
        %2393 = vmatpush1.xpose.msra.mxu0 0.0
        %2394 = vmatprep.subr.mxu0 0.0
        %2395 = vmatpush1.xpose.msra.mxu0 0.0
        %2396 = vmatprep.subr.mxu0 0.0
        %2397 = vmatpush1.xpose.msra.mxu0 0.0
        %2398 = vmatprep.subr.mxu0 0.0
        %2399 = vmatpush1.xpose.msra.mxu0 0.0
        %2400 = vmatprep.subr.mxu0 0.0
        %2401 = vmatpush1.xpose.msra.mxu0 0.0
        %2402 = vmatprep.subr.mxu0 0.0
        %2403 = vmatpush1.xpose.msra.mxu0 0.0
        %2404 = vmatprep.subr.mxu0 0.0
        %2405 = vmatpush1.xpose.msra.mxu0 0.0
        %2406 = vmatprep.subr.mxu0 0.0
        %2407 = vmatpush1.xpose.msra.mxu0 0.0
        %2408 = vmatprep.subr.mxu0 0.0
        %2409 = vmatpush1.xpose.msra.mxu0 0.0
        %2410 = vmatprep.subr.mxu0 0.0
        %2411 = vmatpush1.xpose.msra.mxu0 0.0
        %2412 = vmatprep.mubr.f32.mxu0 0.0
        %2413 = vmatmul.mubr.f32.gmra.mrb[0].mxu0 %v2344
        %v2414 = vpop.f32.mrb[0].mxu0
        %v2415 = vadd.f32 0.0, %v2414
        %v2416 = vpop.f32.mrb[0].mxu0
        %2417 = vdwg.mxu0
        %2418 = vrot.lane.b32.xlu0 %v277, 104
        %v2419 = vpop.permute.xlu0 %2418
        %2420 = vrot.lane.b32.xlu0 %v277, 72
        %v2421 = vpop.permute.xlu0 %2420
        %v2422 = vsel %vm288, %v2419, 0
        %v2424 = vsel %vm288, %v2421, 0
        %2426 = vmatprep.subr.mxu0 0.0
        %2427 = vmatpush1.xpose.msra.mxu0 %v2424
        %2428 = vmatprep.subr.mxu0 0.0
        %2429 = vmatpush1.xpose.msra.mxu0 0.0
        %2430 = vmatprep.subr.mxu0 0.0
        %2431 = vmatpush1.xpose.msra.mxu0 0.0
        %2432 = vmatprep.subr.mxu0 0.0
        %2433 = vmatpush1.xpose.msra.mxu0 0.0
        %2434 = vmatprep.subr.mxu0 0.0
        %2435 = vmatpush1.xpose.msra.mxu0 0.0
        %2436 = vmatprep.subr.mxu0 0.0
        %2437 = vmatpush1.xpose.msra.mxu0 0.0
        %2438 = vmatprep.subr.mxu0 0.0
        %2439 = vmatpush1.xpose.msra.mxu0 0.0
        %2440 = vmatprep.subr.mxu0 0.0
        %2441 = vmatpush1.xpose.msra.mxu0 0.0
        %2442 = vmatprep.subr.mxu0 0.0
        %2443 = vmatpush1.xpose.msra.mxu0 0.0
        %2444 = vmatprep.subr.mxu0 0.0
        %2445 = vmatpush1.xpose.msra.mxu0 0.0
        %2446 = vmatprep.subr.mxu0 0.0
        %2447 = vmatpush1.xpose.msra.mxu0 0.0
        %2448 = vmatprep.subr.mxu0 0.0
        %2449 = vmatpush1.xpose.msra.mxu0 0.0
        %2450 = vmatprep.subr.mxu0 0.0
        %2451 = vmatpush1.xpose.msra.mxu0 0.0
        %2452 = vmatprep.subr.mxu0 0.0
        %2453 = vmatpush1.xpose.msra.mxu0 0.0
        %2454 = vmatprep.subr.mxu0 0.0
        %2455 = vmatpush1.xpose.msra.mxu0 0.0
        %2456 = vmatprep.subr.mxu0 0.0
        %2457 = vmatpush1.xpose.msra.mxu0 0.0
        %2458 = vmatprep.subr.mxu0 0.0
        %2459 = vmatpush1.xpose.msra.mxu0 0.0
        %2460 = vmatprep.subr.mxu0 0.0
        %2461 = vmatpush1.xpose.msra.mxu0 0.0
        %2462 = vmatprep.subr.mxu0 0.0
        %2463 = vmatpush1.xpose.msra.mxu0 0.0
        %2464 = vmatprep.subr.mxu0 0.0
        %2465 = vmatpush1.xpose.msra.mxu0 0.0
        %2466 = vmatprep.subr.mxu0 0.0
        %2467 = vmatpush1.xpose.msra.mxu0 0.0
        %2468 = vmatprep.subr.mxu0 0.0
        %2469 = vmatpush1.xpose.msra.mxu0 0.0
        %2470 = vmatprep.subr.mxu0 0.0
        %2471 = vmatpush1.xpose.msra.mxu0 0.0
        %2472 = vmatprep.subr.mxu0 0.0
        %2473 = vmatpush1.xpose.msra.mxu0 0.0
        %2474 = vmatprep.subr.mxu0 0.0
        %2475 = vmatpush1.xpose.msra.mxu0 0.0
        %2476 = vmatprep.subr.mxu0 0.0
        %2477 = vmatpush1.xpose.msra.mxu0 0.0
        %2478 = vmatprep.subr.mxu0 0.0
        %2479 = vmatpush1.xpose.msra.mxu0 0.0
        %2480 = vmatprep.subr.mxu0 0.0
        %2481 = vmatpush1.xpose.msra.mxu0 0.0
        %2482 = vmatprep.subr.mxu0 0.0
        %2483 = vmatpush1.xpose.msra.mxu0 0.0
        %2484 = vmatprep.subr.mxu0 0.0
        %2485 = vmatpush1.xpose.msra.mxu0 0.0
        %2486 = vmatprep.subr.mxu0 0.0
        %2487 = vmatpush1.xpose.msra.mxu0 0.0
        %2488 = vmatprep.subr.mxu0 0.0
        %2489 = vmatpush1.xpose.msra.mxu0 0.0
        %2490 = vmatprep.mubr.f32.mxu0 0.0
        %2491 = vmatmul.mubr.f32.gmra.mrb[0].mxu0 %v2422
        %v2492 = vpop.f32.mrb[0].mxu0
        %v2493 = vadd.f32 0.0, %v2492
        %v2494 = vpop.f32.mrb[0].mxu0
        %2495 = vdwg.mxu0
        %2496 = vrot.lane.b32.xlu0 %v282, 104
        %v2497 = vpop.permute.xlu0 %2496
        %2498 = vrot.lane.b32.xlu0 %v282, 72
        %v2499 = vpop.permute.xlu0 %2498
        %v2500 = vsel %vm288, %v2497, 0
        %v2502 = vsel %vm288, %v2499, 0
        %2504 = vmatprep.subr.mxu0 0.0
        %2505 = vmatpush1.xpose.msra.mxu0 %v2502
        %2506 = vmatprep.subr.mxu0 0.0
        %2507 = vmatpush1.xpose.msra.mxu0 0.0
        %2508 = vmatprep.subr.mxu0 0.0
        %2509 = vmatpush1.xpose.msra.mxu0 0.0
        %2510 = vmatprep.subr.mxu0 0.0
        %2511 = vmatpush1.xpose.msra.mxu0 0.0
        %2512 = vmatprep.subr.mxu0 0.0
        %2513 = vmatpush1.xpose.msra.mxu0 0.0
        %2514 = vmatprep.subr.mxu0 0.0
        %2515 = vmatpush1.xpose.msra.mxu0 0.0
        %2516 = vmatprep.subr.mxu0 0.0
        %2517 = vmatpush1.xpose.msra.mxu0 0.0
        %2518 = vmatprep.subr.mxu0 0.0
        %2519 = vmatpush1.xpose.msra.mxu0 0.0
        %2520 = vmatprep.subr.mxu0 0.0
        %2521 = vmatpush1.xpose.msra.mxu0 0.0
        %2522 = vmatprep.subr.mxu0 0.0
        %2523 = vmatpush1.xpose.msra.mxu0 0.0
        %2524 = vmatprep.subr.mxu0 0.0
        %2525 = vmatpush1.xpose.msra.mxu0 0.0
        %2526 = vmatprep.subr.mxu0 0.0
        %2527 = vmatpush1.xpose.msra.mxu0 0.0
        %2528 = vmatprep.subr.mxu0 0.0
        %2529 = vmatpush1.xpose.msra.mxu0 0.0
        %2530 = vmatprep.subr.mxu0 0.0
        %2531 = vmatpush1.xpose.msra.mxu0 0.0
        %2532 = vmatprep.subr.mxu0 0.0
        %2533 = vmatpush1.xpose.msra.mxu0 0.0
        %2534 = vmatprep.subr.mxu0 0.0
        %2535 = vmatpush1.xpose.msra.mxu0 0.0
        %2536 = vmatprep.subr.mxu0 0.0
        %2537 = vmatpush1.xpose.msra.mxu0 0.0
        %2538 = vmatprep.subr.mxu0 0.0
        %2539 = vmatpush1.xpose.msra.mxu0 0.0
        %2540 = vmatprep.subr.mxu0 0.0
        %2541 = vmatpush1.xpose.msra.mxu0 0.0
        %2542 = vmatprep.subr.mxu0 0.0
        %2543 = vmatpush1.xpose.msra.mxu0 0.0
        %2544 = vmatprep.subr.mxu0 0.0
        %2545 = vmatpush1.xpose.msra.mxu0 0.0
        %2546 = vmatprep.subr.mxu0 0.0
        %2547 = vmatpush1.xpose.msra.mxu0 0.0
        %2548 = vmatprep.subr.mxu0 0.0
        %2549 = vmatpush1.xpose.msra.mxu0 0.0
        %2550 = vmatprep.subr.mxu0 0.0
        %2551 = vmatpush1.xpose.msra.mxu0 0.0
        %2552 = vmatprep.subr.mxu0 0.0
        %2553 = vmatpush1.xpose.msra.mxu0 0.0
        %2554 = vmatprep.subr.mxu0 0.0
        %2555 = vmatpush1.xpose.msra.mxu0 0.0
        %2556 = vmatprep.subr.mxu0 0.0
        %2557 = vmatpush1.xpose.msra.mxu0 0.0
        %2558 = vmatprep.subr.mxu0 0.0
        %2559 = vmatpush1.xpose.msra.mxu0 0.0
        %2560 = vmatprep.subr.mxu0 0.0
        %2561 = vmatpush1.xpose.msra.mxu0 0.0
        %2562 = vmatprep.subr.mxu0 0.0
        %2563 = vmatpush1.xpose.msra.mxu0 0.0
        %2564 = vmatprep.subr.mxu0 0.0
        %2565 = vmatpush1.xpose.msra.mxu0 0.0
        %2566 = vmatprep.subr.mxu0 0.0
        %2567 = vmatpush1.xpose.msra.mxu0 0.0
        %2568 = vmatprep.mubr.f32.mxu0 0.0
        %2569 = vmatmul.mubr.f32.gmra.mrb[0].mxu0 %v2500
        %v2570 = vpop.f32.mrb[0].mxu0
        %v2571 = vadd.f32 0.0, %v2570
        %v2572 = vpop.f32.mrb[0].mxu0
        %2573 = vdwg.mxu0
        %v2574 = vsel %vm288, %v2337, -inf
        %2575 = vmax.xlane.f32.xlu0 %v2574
        %v2576 = vpop.xlane.xlu0 %2575
        %v2577 = vsel %vm288, %v2415, -inf
        %2578 = vmax.xlane.f32.xlu0 %v2577
        %v2579 = vpop.xlane.xlu0 %2578
        %v2580 = vsel %vm288, %v2493, -inf
        %2581 = vmax.xlane.f32.xlu0 %v2580
        %v2582 = vpop.xlane.xlu0 %2581
        %v2583 = vsel %vm288, %v2571, -inf
        %2584 = vmax.xlane.f32.xlu0 %v2583
        %v2585 = vpop.xlane.xlu0 %2584
        %v2586 = vsub.f32 %v2337, %v2576
        %v2587 = vsub.f32 %v2415, %v2579
        %v2588 = vsub.f32 %v2493, %v2582
        %v2589 = vsub.f32 %v2571, %v2585
        %v2590 = vmul.f32 %v2586, 1.442695
        %v2591 = vpow.pop %v2590
        %v2592 = vmul.f32 %v2587, 1.442695
        %v2593 = vpow.pop %v2592
        %v2594 = vmul.f32 %v2588, 1.442695
        %v2595 = vpow.pop %v2594
        %v2596 = vmul.f32 %v2589, 1.442695
        %v2597 = vpow.pop %v2596
        %v2598 = vsel %vm288, %v2591, 0.0
        %2599 = vadd.xlane.f32.xlu0 %v2598
        %v2600 = vpop.xlane.xlu0 %2599
        %v2601 = vsel %vm288, %v2593, 0.0
        %2602 = vadd.xlane.f32.xlu0 %v2601
        %v2603 = vpop.xlane.xlu0 %2602
        %v2604 = vsel %vm288, %v2595, 0.0
        %2605 = vadd.xlane.f32.xlu0 %v2604
        %v2606 = vpop.xlane.xlu0 %2605
        %v2607 = vsel %vm288, %v2597, 0.0
        %2608 = vadd.xlane.f32.xlu0 %v2607
        %v2609 = vpop.xlane.xlu0 %2608
        %v2610 = vrcp.pop %v2600
        %v2611 = vrcp.pop %v2603
        %v2612 = vrcp.pop %v2606
        %v2613 = vrcp.pop %v2609
        %2614 = vrot.lane.b32.xlu0 %v267, 40
        %v2615 = vpop.permute.xlu0 %2614
        %v2618 = vsel %vm288, %v2591, 0
        %2620 = vmatprep.subr.mxu0 0.0
        %2621 = vmatpush1.msra.mxu0 %v2615
        %2622 = vmatprep.subr.mxu0 0.0
        %2623 = vmatpush1.msra.mxu0 0.0
        %2624 = vmatprep.subr.mxu0 0.0
        %2625 = vmatpush1.msra.mxu0 0.0
        %2626 = vmatprep.subr.mxu0 0.0
        %2627 = vmatpush1.msra.mxu0 0.0
        %2628 = vmatprep.subr.mxu0 0.0
        %2629 = vmatpush1.msra.mxu0 0.0
        %2630 = vmatprep.subr.mxu0 0.0
        %2631 = vmatpush1.msra.mxu0 0.0
        %2632 = vmatprep.subr.mxu0 0.0
        %2633 = vmatpush1.msra.mxu0 0.0
        %2634 = vmatprep.subr.mxu0 0.0
        %2635 = vmatpush1.msra.mxu0 0.0
        %2636 = vmatprep.subr.mxu0 0.0
        %2637 = vmatpush1.msra.mxu0 0.0
        %2638 = vmatprep.subr.mxu0 0.0
        %2639 = vmatpush1.msra.mxu0 0.0
        %2640 = vmatprep.subr.mxu0 0.0
        %2641 = vmatpush1.msra.mxu0 0.0
        %2642 = vmatprep.subr.mxu0 0.0
        %2643 = vmatpush1.msra.mxu0 0.0
        %2644 = vmatprep.subr.mxu0 0.0
        %2645 = vmatpush1.msra.mxu0 0.0
        %2646 = vmatprep.subr.mxu0 0.0
        %2647 = vmatpush1.msra.mxu0 0.0
        %2648 = vmatprep.subr.mxu0 0.0
        %2649 = vmatpush1.msra.mxu0 0.0
        %2650 = vmatprep.subr.mxu0 0.0
        %2651 = vmatpush1.msra.mxu0 0.0
        %2652 = vmatprep.subr.mxu0 0.0
        %2653 = vmatpush1.msra.mxu0 0.0
        %2654 = vmatprep.subr.mxu0 0.0
        %2655 = vmatpush1.msra.mxu0 0.0
        %2656 = vmatprep.subr.mxu0 0.0
        %2657 = vmatpush1.msra.mxu0 0.0
        %2658 = vmatprep.subr.mxu0 0.0
        %2659 = vmatpush1.msra.mxu0 0.0
        %2660 = vmatprep.subr.mxu0 0.0
        %2661 = vmatpush1.msra.mxu0 0.0
        %2662 = vmatprep.subr.mxu0 0.0
        %2663 = vmatpush1.msra.mxu0 0.0
        %2664 = vmatprep.subr.mxu0 0.0
        %2665 = vmatpush1.msra.mxu0 0.0
        %2666 = vmatprep.subr.mxu0 0.0
        %2667 = vmatpush1.msra.mxu0 0.0
        %2668 = vmatprep.subr.mxu0 0.0
        %2669 = vmatpush1.msra.mxu0 0.0
        %2670 = vmatprep.subr.mxu0 0.0
        %2671 = vmatpush1.msra.mxu0 0.0
        %2672 = vmatprep.subr.mxu0 0.0
        %2673 = vmatpush1.msra.mxu0 0.0
        %2674 = vmatprep.subr.mxu0 0.0
        %2675 = vmatpush1.msra.mxu0 0.0
        %2676 = vmatprep.subr.mxu0 0.0
        %2677 = vmatpush1.msra.mxu0 0.0
        %2678 = vmatprep.subr.mxu0 0.0
        %2679 = vmatpush1.msra.mxu0 0.0
        %2680 = vmatprep.subr.mxu0 0.0
        %2681 = vmatpush1.msra.mxu0 0.0
        %2682 = vmatprep.subr.mxu0 0.0
        %2683 = vmatpush1.msra.mxu0 0.0
        %2684 = vmatprep.mubr.f32.mxu0 0.0
        %2685 = vmatmul.mubr.f32.gmra.mrb[0].mxu0 %v2618
        %v2686 = vpop.f32.mrb[0].mxu0
        %v2687 = vadd.f32 0.0, %v2686
        %v2688 = vpop.f32.mrb[0].mxu0
        %2689 = vdwg.mxu0
        %2690 = vrot.lane.b32.xlu0 %v272, 40
        %v2691 = vpop.permute.xlu0 %2690
        %v2694 = vsel %vm288, %v2593, 0
        %2696 = vmatprep.subr.mxu0 0.0
        %2697 = vmatpush1.msra.mxu0 %v2691
        %2698 = vmatprep.subr.mxu0 0.0
        %2699 = vmatpush1.msra.mxu0 0.0
        %2700 = vmatprep.subr.mxu0 0.0
        %2701 = vmatpush1.msra.mxu0 0.0
        %2702 = vmatprep.subr.mxu0 0.0
        %2703 = vmatpush1.msra.mxu0 0.0
        %2704 = vmatprep.subr.mxu0 0.0
        %2705 = vmatpush1.msra.mxu0 0.0
        %2706 = vmatprep.subr.mxu0 0.0
        %2707 = vmatpush1.msra.mxu0 0.0
        %2708 = vmatprep.subr.mxu0 0.0
        %2709 = vmatpush1.msra.mxu0 0.0
        %2710 = vmatprep.subr.mxu0 0.0
        %2711 = vmatpush1.msra.mxu0 0.0
        %2712 = vmatprep.subr.mxu0 0.0
        %2713 = vmatpush1.msra.mxu0 0.0
        %2714 = vmatprep.subr.mxu0 0.0
        %2715 = vmatpush1.msra.mxu0 0.0
        %2716 = vmatprep.subr.mxu0 0.0
        %2717 = vmatpush1.msra.mxu0 0.0
        %2718 = vmatprep.subr.mxu0 0.0
        %2719 = vmatpush1.msra.mxu0 0.0
        %2720 = vmatprep.subr.mxu0 0.0
        %2721 = vmatpush1.msra.mxu0 0.0
        %2722 = vmatprep.subr.mxu0 0.0
        %2723 = vmatpush1.msra.mxu0 0.0
        %2724 = vmatprep.subr.mxu0 0.0
        %2725 = vmatpush1.msra.mxu0 0.0
        %2726 = vmatprep.subr.mxu0 0.0
        %2727 = vmatpush1.msra.mxu0 0.0
        %2728 = vmatprep.subr.mxu0 0.0
        %2729 = vmatpush1.msra.mxu0 0.0
        %2730 = vmatprep.subr.mxu0 0.0
        %2731 = vmatpush1.msra.mxu0 0.0
        %2732 = vmatprep.subr.mxu0 0.0
        %2733 = vmatpush1.msra.mxu0 0.0
        %2734 = vmatprep.subr.mxu0 0.0
        %2735 = vmatpush1.msra.mxu0 0.0
        %2736 = vmatprep.subr.mxu0 0.0
        %2737 = vmatpush1.msra.mxu0 0.0
        %2738 = vmatprep.subr.mxu0 0.0
        %2739 = vmatpush1.msra.mxu0 0.0
        %2740 = vmatprep.subr.mxu0 0.0
        %2741 = vmatpush1.msra.mxu0 0.0
        %2742 = vmatprep.subr.mxu0 0.0
        %2743 = vmatpush1.msra.mxu0 0.0
        %2744 = vmatprep.subr.mxu0 0.0
        %2745 = vmatpush1.msra.mxu0 0.0
        %2746 = vmatprep.subr.mxu0 0.0
        %2747 = vmatpush1.msra.mxu0 0.0
        %2748 = vmatprep.subr.mxu0 0.0
        %2749 = vmatpush1.msra.mxu0 0.0
        %2750 = vmatprep.subr.mxu0 0.0
        %2751 = vmatpush1.msra.mxu0 0.0
        %2752 = vmatprep.subr.mxu0 0.0
        %2753 = vmatpush1.msra.mxu0 0.0
        %2754 = vmatprep.subr.mxu0 0.0
        %2755 = vmatpush1.msra.mxu0 0.0
        %2756 = vmatprep.subr.mxu0 0.0
        %2757 = vmatpush1.msra.mxu0 0.0
        %2758 = vmatprep.subr.mxu0 0.0
        %2759 = vmatpush1.msra.mxu0 0.0
        %2760 = vmatprep.mubr.f32.mxu0 0.0
        %2761 = vmatmul.mubr.f32.gmra.mrb[0].mxu0 %v2694
        %v2762 = vpop.f32.mrb[0].mxu0
        %v2763 = vadd.f32 0.0, %v2762
        %v2764 = vpop.f32.mrb[0].mxu0
        %2765 = vdwg.mxu0
        %2766 = vrot.lane.b32.xlu0 %v277, 40
        %v2767 = vpop.permute.xlu0 %2766
        %v2770 = vsel %vm288, %v2595, 0
        %2772 = vmatprep.subr.mxu0 0.0
        %2773 = vmatpush1.msra.mxu0 %v2767
        %2774 = vmatprep.subr.mxu0 0.0
        %2775 = vmatpush1.msra.mxu0 0.0
        %2776 = vmatprep.subr.mxu0 0.0
        %2777 = vmatpush1.msra.mxu0 0.0
        %2778 = vmatprep.subr.mxu0 0.0
        %2779 = vmatpush1.msra.mxu0 0.0
        %2780 = vmatprep.subr.mxu0 0.0
        %2781 = vmatpush1.msra.mxu0 0.0
        %2782 = vmatprep.subr.mxu0 0.0
        %2783 = vmatpush1.msra.mxu0 0.0
        %2784 = vmatprep.subr.mxu0 0.0
        %2785 = vmatpush1.msra.mxu0 0.0
        %2786 = vmatprep.subr.mxu0 0.0
        %2787 = vmatpush1.msra.mxu0 0.0
        %2788 = vmatprep.subr.mxu0 0.0
        %2789 = vmatpush1.msra.mxu0 0.0
        %2790 = vmatprep.subr.mxu0 0.0
        %2791 = vmatpush1.msra.mxu0 0.0
        %2792 = vmatprep.subr.mxu0 0.0
        %2793 = vmatpush1.msra.mxu0 0.0
        %2794 = vmatprep.subr.mxu0 0.0
        %2795 = vmatpush1.msra.mxu0 0.0
        %2796 = vmatprep.subr.mxu0 0.0
        %2797 = vmatpush1.msra.mxu0 0.0
        %2798 = vmatprep.subr.mxu0 0.0
        %2799 = vmatpush1.msra.mxu0 0.0
        %2800 = vmatprep.subr.mxu0 0.0
        %2801 = vmatpush1.msra.mxu0 0.0
        %2802 = vmatprep.subr.mxu0 0.0
        %2803 = vmatpush1.msra.mxu0 0.0
        %2804 = vmatprep.subr.mxu0 0.0
        %2805 = vmatpush1.msra.mxu0 0.0
        %2806 = vmatprep.subr.mxu0 0.0
        %2807 = vmatpush1.msra.mxu0 0.0
        %2808 = vmatprep.subr.mxu0 0.0
        %2809 = vmatpush1.msra.mxu0 0.0
        %2810 = vmatprep.subr.mxu0 0.0
        %2811 = vmatpush1.msra.mxu0 0.0
        %2812 = vmatprep.subr.mxu0 0.0
        %2813 = vmatpush1.msra.mxu0 0.0
        %2814 = vmatprep.subr.mxu0 0.0
        %2815 = vmatpush1.msra.mxu0 0.0
        %2816 = vmatprep.subr.mxu0 0.0
        %2817 = vmatpush1.msra.mxu0 0.0
        %2818 = vmatprep.subr.mxu0 0.0
        %2819 = vmatpush1.msra.mxu0 0.0
        %2820 = vmatprep.subr.mxu0 0.0
        %2821 = vmatpush1.msra.mxu0 0.0
        %2822 = vmatprep.subr.mxu0 0.0
        %2823 = vmatpush1.msra.mxu0 0.0
        %2824 = vmatprep.subr.mxu0 0.0
        %2825 = vmatpush1.msra.mxu0 0.0
        %2826 = vmatprep.subr.mxu0 0.0
        %2827 = vmatpush1.msra.mxu0 0.0
        %2828 = vmatprep.subr.mxu0 0.0
        %2829 = vmatpush1.msra.mxu0 0.0
        %2830 = vmatprep.subr.mxu0 0.0
        %2831 = vmatpush1.msra.mxu0 0.0
        %2832 = vmatprep.subr.mxu0 0.0
        %2833 = vmatpush1.msra.mxu0 0.0
        %2834 = vmatprep.subr.mxu0 0.0
        %2835 = vmatpush1.msra.mxu0 0.0
        %2836 = vmatprep.mubr.f32.mxu0 0.0
        %2837 = vmatmul.mubr.f32.gmra.mrb[0].mxu0 %v2770
        %v2838 = vpop.f32.mrb[0].mxu0
        %v2839 = vadd.f32 0.0, %v2838
        %v2840 = vpop.f32.mrb[0].mxu0
        %2841 = vdwg.mxu0
        %2842 = vrot.lane.b32.xlu0 %v282, 40
        %v2843 = vpop.permute.xlu0 %2842
        %v2846 = vsel %vm288, %v2597, 0
        %2848 = vmatprep.subr.mxu0 0.0
        %2849 = vmatpush1.msra.mxu0 %v2843
        %2850 = vmatprep.subr.mxu0 0.0
        %2851 = vmatpush1.msra.mxu0 0.0
        %2852 = vmatprep.subr.mxu0 0.0
        %2853 = vmatpush1.msra.mxu0 0.0
        %2854 = vmatprep.subr.mxu0 0.0
        %2855 = vmatpush1.msra.mxu0 0.0
        %2856 = vmatprep.subr.mxu0 0.0
        %2857 = vmatpush1.msra.mxu0 0.0
        %2858 = vmatprep.subr.mxu0 0.0
        %2859 = vmatpush1.msra.mxu0 0.0
        %2860 = vmatprep.subr.mxu0 0.0
        %2861 = vmatpush1.msra.mxu0 0.0
        %2862 = vmatprep.subr.mxu0 0.0
        %2863 = vmatpush1.msra.mxu0 0.0
        %2864 = vmatprep.subr.mxu0 0.0
        %2865 = vmatpush1.msra.mxu0 0.0
        %2866 = vmatprep.subr.mxu0 0.0
        %2867 = vmatpush1.msra.mxu0 0.0
        %2868 = vmatprep.subr.mxu0 0.0
        %2869 = vmatpush1.msra.mxu0 0.0
        %2870 = vmatprep.subr.mxu0 0.0
        %2871 = vmatpush1.msra.mxu0 0.0
        %2872 = vmatprep.subr.mxu0 0.0
        %2873 = vmatpush1.msra.mxu0 0.0
        %2874 = vmatprep.subr.mxu0 0.0
        %2875 = vmatpush1.msra.mxu0 0.0
        %2876 = vmatprep.subr.mxu0 0.0
        %2877 = vmatpush1.msra.mxu0 0.0
        %2878 = vmatprep.subr.mxu0 0.0
        %2879 = vmatpush1.msra.mxu0 0.0
        %2880 = vmatprep.subr.mxu0 0.0
        %2881 = vmatpush1.msra.mxu0 0.0
        %2882 = vmatprep.subr.mxu0 0.0
        %2883 = vmatpush1.msra.mxu0 0.0
        %2884 = vmatprep.subr.mxu0 0.0
        %2885 = vmatpush1.msra.mxu0 0.0
        %2886 = vmatprep.subr.mxu0 0.0
        %2887 = vmatpush1.msra.mxu0 0.0
        %2888 = vmatprep.subr.mxu0 0.0
        %2889 = vmatpush1.msra.mxu0 0.0
        %2890 = vmatprep.subr.mxu0 0.0
        %2891 = vmatpush1.msra.mxu0 0.0
        %2892 = vmatprep.subr.mxu0 0.0
        %2893 = vmatpush1.msra.mxu0 0.0
        %2894 = vmatprep.subr.mxu0 0.0
        %2895 = vmatpush1.msra.mxu0 0.0
        %2896 = vmatprep.subr.mxu0 0.0
        %2897 = vmatpush1.msra.mxu0 0.0
        %2898 = vmatprep.subr.mxu0 0.0
        %2899 = vmatpush1.msra.mxu0 0.0
        %2900 = vmatprep.subr.mxu0 0.0
        %2901 = vmatpush1.msra.mxu0 0.0
        %2902 = vmatprep.subr.mxu0 0.0
        %2903 = vmatpush1.msra.mxu0 0.0
        %2904 = vmatprep.subr.mxu0 0.0
        %2905 = vmatpush1.msra.mxu0 0.0
        %2906 = vmatprep.subr.mxu0 0.0
        %2907 = vmatpush1.msra.mxu0 0.0
        %2908 = vmatprep.subr.mxu0 0.0
        %2909 = vmatpush1.msra.mxu0 0.0
        %2910 = vmatprep.subr.mxu0 0.0
        %2911 = vmatpush1.msra.mxu0 0.0
        %2912 = vmatprep.mubr.f32.mxu0 0.0
        %2913 = vmatmul.mubr.f32.gmra.mrb[0].mxu0 %v2846
        %v2914 = vpop.f32.mrb[0].mxu0
        %v2915 = vadd.f32 0.0, %v2914
        %v2916 = vpop.f32.mrb[0].mxu0
        %2917 = vdwg.mxu0
        %v2918 = vmul.f32 %v2687, %v2610
        %v2919 = vmul.f32 %v2763, %v2611
        %v2920 = vmul.f32 %v2839, %v2612
        %v2921 = vmul.f32 %v2915, %v2613
        %2926 = vrot.lane.b32.xlu0 %v1598, 8
        %v2927 = vpop.permute.xlu0 %2926
        %2928 = vrot.lane.b32.xlu0 %v1599, 8
        %v2929 = vpop.permute.xlu0 %2928
        %2930 = vrot.lane.b32.xlu0 %v1600, 8
        %v2931 = vpop.permute.xlu0 %2930
        %2932 = vrot.lane.b32.xlu0 %v1601, 8
        %v2933 = vpop.permute.xlu0 %2932
        %2942 = vrot.lane.b32.xlu0 %v2258, 16
        %v2943 = vpop.permute.xlu0 %2942
        %2944 = vrot.lane.b32.xlu0 %v2259, 16
        %v2945 = vpop.permute.xlu0 %2944
        %2946 = vrot.lane.b32.xlu0 %v2260, 16
        %v2947 = vpop.permute.xlu0 %2946
        %2948 = vrot.lane.b32.xlu0 %v2261, 16
        %v2949 = vpop.permute.xlu0 %2948
        %2958 = vrot.lane.b32.xlu0 %v2918, 24
        %v2959 = vpop.permute.xlu0 %2958
        %2960 = vrot.lane.b32.xlu0 %v2919, 24
        %v2961 = vpop.permute.xlu0 %2960
        %2962 = vrot.lane.b32.xlu0 %v2920, 24
        %v2963 = vpop.permute.xlu0 %2962
        %2964 = vrot.lane.b32.xlu0 %v2921, 24
        %v2965 = vpop.permute.xlu0 %2964
        %v2970 = vsel %vm288, %v938, %v2927
        %v2971 = vsel %vm288, %v939, %v2929
        %v2972 = vsel %vm288, %v940, %v2931
        %v2973 = vsel %vm288, %v941, %v2933
        %vm2974 = vcmask 130048
        %v2975 = vsel %vm2974, %v2970, %v2943
        %v2976 = vsel %vm2974, %v2971, %v2945
        %v2977 = vsel %vm2974, %v2972, %v2947
        %v2978 = vsel %vm2974, %v2973, %v2949
        %vm2979 = vcmask 195584
        %v2980 = vsel %vm2979, %v2975, %v2959
        %v2981 = vsel %vm2979, %v2976, %v2961
        %v2982 = vsel %vm2979, %v2977, %v2963
        %v2983 = vsel %vm2979, %v2978, %v2965
        %2984 = vrot.lane.b32.xlu0 %v267, 32
        %v2985 = vpop.permute.xlu0 %2984
        %2986 = vrot.lane.b32.xlu0 %v272, 32
        %v2987 = vpop.permute.xlu0 %2986
        %2988 = vrot.lane.b32.xlu0 %v277, 32
        %v2989 = vpop.permute.xlu0 %2988
        %2990 = vrot.lane.b32.xlu0 %v282, 32
        %v2991 = vpop.permute.xlu0 %2990
        %v2996 = vadd.f32 %v2980, %v2985
        %v2997 = vadd.f32 %v2981, %v2987
        %v2998 = vadd.f32 %v2982, %v2989
        %v2999 = vadd.f32 %v2983, %v2991
        %v3000 = vtanh.pop %v2996
        %v3001 = vtanh.pop %v2997
        %v3002 = vtanh.pop %v2998
        %v3003 = vtanh.pop %v2999
        %3004 = vst.msk [vmem:[%s176] sm:$0xff] %vm187, %v3000
        %3005 = vst.msk [vmem:[%s176 + $0x8] sm:$0xff] %vm187, %v3001
        %3006 = vst.msk [vmem:[%s176 + $0x10] sm:$0xff] %vm187, %v3002
        %3007 = vst.msk [vmem:[%s176 + $0x18] sm:$0xff] %vm187, %v3003
        %s3008 = sand.u32 %s75, 1
        %s3009 = scalar_lea.sflag [#allocation4], %s3008
        %s3010 = sand.u32 %s75, 1
        %s3011 = smul.addr %s3010, 32
        %s3012 = scalar_lea.vmem [#allocation7], %s3011
        // Predicated region
        $region37: #{tpu_custom_call.1} parent=27 // pred_check
          %p3013 = pneg %p85
        $region38: #{tpu_custom_call.1} parent=27 // pred_check_branch
          %3015 = sbr.rel (%p3013) target = $region40
        $region39: #{tpu_custom_call.1} parent=27 // pred_region
          %s3016 = smul.u32 4, %s20
          %s3018 = ssub.s32 512, 512
          %3019 = vsyncadd %s3009, %s3018
          %s3020 = smul.addr %s3016, 128
          %s3021 = scalar_lea.hbm %s2, %s3020
          %s3022 = sshll.u32 %s3012, 4
          %s3023 = int_to_ptr.vmem [resolvable:$true] %s3022
          %3028 = dma.vmem_to_hbm [thread:$0]  %s3023, 512, %s3021, %s3009, 128, 128, 8
        $region40: #{tpu_custom_call.1} parent=27 // pred_fallthru
          _
      $region28: #{tpu_custom_call.1} parent=5 // pred_fallthru
        _
      %p3029 = scmp.le.s32.totalorder 2, %s15
      // Predicated region
      $region41: #{tpu_custom_call.1} parent=5 // pred_check
        %p3030 = pneg %p3029
      $region42: #{tpu_custom_call.1} parent=5 // pred_check_branch
        %3032 = sbr.rel (%p3030) target = $region44
      $region43: #{tpu_custom_call.1} parent=5 // pred_region
        %s3033 = ssub.s32 %s15, 2
        // Predicated region
        $region45: #{tpu_custom_call.1} parent=43 // pred_check
          %p3034 = pneg %p91
        $region46: #{tpu_custom_call.1} parent=43 // pred_check_branch
          %3036 = sbr.rel (%p3034) target = $region48
        $region47: #{tpu_custom_call.1} parent=43 // pred_region
          %s3037 = sand.u32 %s76, 1
          %s3038 = scalar_lea.sflag [#allocation4], %s3037
          %s3039 = sand.u32 %s76, 1
          %s3040 = smul.addr %s3039, 32
          %s3041 = scalar_lea.vmem [#allocation7], %s3040
          %3042 = dma.done %s3038, 512
        $region48: #{tpu_custom_call.1} parent=43 // pred_fallthru
          _
      $region44: #{tpu_custom_call.1} parent=5 // pred_fallthru
        _
    $region6: #{tpu_custom_call.1} parent=1 // loop_footer
      %s19 = sadd.s32 1, %s15
    $region7: #{tpu_custom_call.1} parent=1 // loop_footer_branch
      %14 = sbr.rel target = $region3
    $region8: #{tpu_custom_call.1} parent=1 // loop_exit
      _
    %3043 = vsyncpa [#allocation3], 1
    %s3044 = scalar_lea.sflag [#allocation3], 1
    %3045 = vsyncpa %s3044, 1
    %3046 = vsyncpa [#allocation6], 1
    %3047 = vsyncpa [#allocation4], 1
    %s3048 = scalar_lea.sflag [#allocation4], 1
    %3049 = vsyncpa %s3048, 1

</llo_original>
